<compile_context>
chip_gen: v6e
topology: v6e:2x2x1
jax: 0.10.0
libtpu: 0.0.40
codegen_flags: <defaults>
</compile_context>

<pallas_src>
import functools
import math

import jax
import jax.numpy as jnp
from jax.experimental import pallas as pl
from jax.experimental.pallas import tpu as pltpu


# ----------------------------- Pallas kernel --------------------------------
def _encoder_layer_kernel(*refs, nhead: int, has_pos: bool, ffn_chunk, compute_dtype):
    if has_pos:
        x_ref, pos_ref = refs[0], refs[1]
        w_refs = refs[2:18]
        o_ref = refs[18]
    else:
        x_ref, pos_ref = refs[0], None
        w_refs = refs[1:17]
        o_ref = refs[17]

    (wq_ref, wk_ref, wv_ref, bq_ref, bk_ref, bv_ref,
     wo_ref, bo_ref, g1_ref, be1_ref,
     w1_ref, b1_ref, w2_ref, b2_ref, g2_ref, be2_ref) = w_refs

    BB, S, D = x_ref.shape
    R = BB * S
    hd = D // nhead
    scale = 1.0 / math.sqrt(hd)
    cd = compute_dtype
    f32 = jnp.float32

    def mm(a, b):
        # MXU matmul with f32 accumulation; operands optionally cast (e.g. bf16 on v6e/v7x).
        return jnp.dot(a.astype(cd), b.astype(cd), preferred_element_type=f32)

    # Flatten (BB, S, D) -> (BB*S, D): row-wise ops (projections, LN, MLP) are lane-dense.
    x = x_ref[...].reshape(R, D).astype(f32)
    qk_in = x + pos_ref[...].reshape(R, D).astype(f32) if has_pos else x

    # ---- in-projections (weights pre-transposed: y = x @ W^T + b); lane-dense N=D outputs
    q = mm(qk_in, wq_ref[...]) + bq_ref[...]
    k = mm(qk_in, wk_ref[...]) + bk_ref[...]
    v = mm(x,     wv_ref[...]) + bv_ref[...]
    q = q * scale                                   # scale once, not per head

    # ---- attention: per batch element / per head static unroll, Wo folded per head ----
    attn_rows = []
    for b in range(BB):
        rows = slice(b * S, (b + 1) * S)            # sublane-dim slice (cheap)
        q_b, k_b, v_b = q[rows], k[rows], v[rows]
        acc = None                                  # (S, D) f32 accumulator (lane-dense)
        for h in range(nhead):
            cols = slice(h * hd, (h + 1) * hd)
            qh = q_b[:, cols]                       # (S, hd)
            kh = k_b[:, cols]                       # (S, hd)
            vh = v_b[:, cols]                       # (S, hd)
            # Q @ K^T without materializing a transpose: contract last dims of both.
            logits = jax.lax.dot_general(
                qh.astype(cd), kh.astype(cd),
                dimension_numbers=(((1,), (1,)), ((), ())),
                preferred_element_type=f32)         # (S, S)
            m = jnp.max(logits, axis=-1, keepdims=True)
            p = jnp.exp(logits - m)
            denom = jnp.sum(p, axis=-1, keepdims=True)
            p = p * pl.reciprocal(denom, approx=True)
            # Fold the output projection: (S,hd)@(hd,D) and (S,S)@(S,D) are lane-dense.
            vo = mm(vh, wo_ref[cols, :])            # (S, D)
            contrib = mm(p, vo)                     # (S, D)
            acc = contrib if acc is None else acc + contrib
        attn_rows.append(acc)
    attn = (jnp.concatenate(attn_rows, axis=0) if BB > 1 else attn_rows[0]) + bo_ref[...]

    # ---- single-pass LayerNorm (E[x], E[x^2]) ----
    def layernorm(val, gamma, beta):
        mu = jnp.mean(val, axis=-1, keepdims=True)
        m2 = jnp.mean(val * val, axis=-1, keepdims=True)
        var = m2 - mu * mu
        return (val - mu) * jax.lax.rsqrt(var + 1e-5) * gamma + beta

    src1 = layernorm(x + attn, g1_ref[...], be1_ref[...])

    # ---- MLP: linear1 -> ReLU -> linear2, optionally chunked over the hidden dim ----
    Dh = w1_ref.shape[1]
    chunk = Dh if ffn_chunk is None else max(1, min(int(ffn_chunk), Dh))
    mlp = None
    for c0 in range(0, Dh, chunk):
        c1 = min(c0 + chunk, Dh)
        h1 = mm(src1, w1_ref[:, c0:c1]) + b1_ref[:, c0:c1]
        h1 = jnp.maximum(h1, 0.0)
        part = mm(h1, w2_ref[c0:c1, :])             # (R, D) lane-dense
        mlp = part if mlp is None else mlp + part
    mlp = mlp + b2_ref[...]

    # ---- residual + norm2 ----
    out = layernorm(src1 + mlp, g2_ref[...], be2_ref[...])
    o_ref[...] = out.reshape(BB, S, D).astype(o_ref.dtype)


# ------------------------------ wrapper --------------------------------------
def transformer_encoder_layer(src, params, pos=None, *, nhead,
                              block_b=None, ffn_chunk=None,
                              compute_dtype=jnp.float32):
    """src: (S, B, D) float32 (PyTorch seq-first layout).  Returns (S, B, D)."""
    S, B, D = src.shape
    x = jnp.transpose(src, (1, 0, 2))                         # (B, S, D)
    has_pos = pos is not None

    (wq_t, wk_t, wv_t, bq, bk, bv, wo_t, bo,
     g1, be1, w1_t, b1, w2_t, b2, g2, be2) = params
    Dh = w1_t.shape[1]

    # Fuse the whole batch into one grid step when the activation working set is small;
    # otherwise one batch element per step.
    if block_b is None:
        act_bytes = B * S * D * 4 * 8 + S * S * 4 + 2 * B * S * Dh * 4
        block_b = B if act_bytes <= 8 * (1 << 20) else 1
    if B % block_b:
        block_b = 1
    grid = (B // block_b,)

    kernel = functools.partial(_encoder_layer_kernel, nhead=nhead, has_pos=has_pos,
                               ffn_chunk=ffn_chunk, compute_dtype=compute_dtype)

    def full_spec(arr):
        nd = arr.ndim
        return pl.BlockSpec(arr.shape, lambda b, _nd=nd: (0,) * _nd)

    x_spec = pl.BlockSpec((block_b, S, D), lambda b: (b, 0, 0))

    inputs = [x]
    in_specs = [x_spec]
    if has_pos:
        inputs.append(jnp.transpose(pos, (1, 0, 2)))
        in_specs.append(x_spec)
    inputs.extend(params)
    in_specs.extend(full_spec(p) for p in params)

    # Explicit scoped-VMEM budget: weights (double-buffered by the pipeline) + activations.
    weight_bytes = sum(int(p.size) * p.dtype.itemsize for p in params)
    act_block_bytes = block_b * S * D * 4
    est = (2 * weight_bytes + 10 * act_block_bytes + S * S * 4
           + 2 * block_b * S * (ffn_chunk or Dh) * 4 + (4 << 20))
    vmem_limit = int(min(max(est, 32 * (1 << 20)), 64 * (1 << 20)))

    out = pl.pallas_call(
        kernel,
        out_shape=jax.ShapeDtypeStruct((B, S, D), jnp.float32),
        grid=grid,
        in_specs=in_specs,
        out_specs=pl.BlockSpec((block_b, S, D), lambda b: (b, 0, 0)),
        compiler_params=pltpu.CompilerParams(
            dimension_semantics=("parallel",),
            vmem_limit_bytes=vmem_limit),
    )(*inputs)

    return jnp.transpose(out, (1, 0, 2))                      # (S, B, D)


# ------------------------- pure-JAX reference ---------------------------------
def reference_layer(src, params, pos=None, *, nhead):
    (wq_t, wk_t, wv_t, bq, bk, bv, wo_t, bo,
     g1, be1, w1_t, b1, w2_t, b2, g2, be2) = params
    S, B, D = src.shape
    hd = D // nhead
    x = jnp.transpose(src, (1, 0, 2))                         # (B, S, D)
    qk_in = x if pos is None else x + jnp.transpose(pos, (1, 0, 2))

    q = qk_in @ wq_t + bq
    k = qk_in @ wk_t + bk
    v = x @ wv_t + bv
    qh = q.reshape(B, S, nhead, hd).transpose(0, 2, 1, 3) / math.sqrt(hd)
    kh = k.reshape(B, S, nhead, hd).transpose(0, 2, 1, 3)
    vh = v.reshape(B, S, nhead, hd).transpose(0, 2, 1, 3)
    logits = jnp.einsum("bhqd,bhkd->bhqk", qh, kh)
    p = jax.nn.softmax(logits, axis=-1)
    attn = jnp.einsum("bhqk,bhkd->bhqd", p, vh).transpose(0, 2, 1, 3).reshape(B, S, D)
    attn = attn @ wo_t + bo

    def ln(val, g, b):
        mu = jnp.mean(val, axis=-1, keepdims=True)
        var = jnp.mean((val - mu) ** 2, axis=-1, keepdims=True)
        return (val - mu) / jnp.sqrt(var + 1e-5) * g + b

    s = ln(x + attn, g1, be1)
    h = jnp.maximum(s @ w1_t + b1, 0.0)
    s = ln(s + (h @ w2_t + b2), g2, be2)
    return jnp.transpose(s, (1, 0, 2))


# --------------------------------- main ---------------------------------------
if __name__ == "__main__":
    S, B, D, H, EXP = 8, 2, 32, 4, 4   # seq, batch, d_model, nhead, expansion
    Dh = D * EXP

    key = jax.random.PRNGKey(0)
    ks = jax.random.split(key, 12)

    # nn.MultiheadAttention params
    in_proj_w = jax.random.normal(ks[0], (3 * D, D), jnp.float32) * 0.05
    in_proj_b = jax.random.normal(ks[1], (3 * D,), jnp.float32) * 0.05
    out_proj_w = jax.random.normal(ks[2], (D, D), jnp.float32) * 0.05
    out_proj_b = jax.random.normal(ks[3], (D,), jnp.float32) * 0.05
    # Mlp params
    lin1_w = jax.random.normal(ks[4], (Dh, D), jnp.float32) * 0.05
    lin1_b = jax.random.normal(ks[5], (Dh,), jnp.float32) * 0.05
    lin2_w = jax.random.normal(ks[6], (D, Dh), jnp.float32) * 0.05
    lin2_b = jax.random.normal(ks[7], (D,), jnp.float32) * 0.05
    # LayerNorm params
    g1 = jnp.ones((D,), jnp.float32); be1 = jnp.zeros((D,), jnp.float32)
    g2 = jnp.ones((D,), jnp.float32); be2 = jnp.zeros((D,), jnp.float32)

    # pre-transpose weights (y = x @ W^T + b) and reshape biases to (1, N)
    params = (
        in_proj_w[:D].T, in_proj_w[D:2 * D].T, in_proj_w[2 * D:].T,
        in_proj_b[:D].reshape(1, D), in_proj_b[D:2 * D].reshape(1, D),
        in_proj_b[2 * D:].reshape(1, D),
        out_proj_w.T, out_proj_b.reshape(1, D),
        g1.reshape(1, D), be1.reshape(1, D),
        lin1_w.T, lin1_b.reshape(1, Dh),
        lin2_w.T, lin2_b.reshape(1, D),
        g2.reshape(1, D), be2.reshape(1, D),
    )

    src = jax.random.normal(ks[8], (S, B, D), jnp.float32)
    pos = jax.random.normal(ks[9], (S, B, D), jnp.float32) * 0.1

    # with positional embedding
    out = transformer_encoder_layer(src, params, pos=pos, nhead=H)
    jax.block_until_ready(out)
    ref = reference_layer(src, params, pos=pos, nhead=H)
    assert out.shape == (S, B, D)
    assert jnp.allclose(out, ref, atol=1e-3, rtol=1e-3), float(jnp.max(jnp.abs(out - ref)))

    # without positional embedding (no dummy zero buffer is DMA'd)
    out2 = transformer_encoder_layer(src, params, pos=None, nhead=H)
    jax.block_until_ready(out2)
    ref2 = reference_layer(src, params, pos=None, nhead=H)
    assert jnp.allclose(out2, ref2, atol=1e-3, rtol=1e-3), float(jnp.max(jnp.abs(out2 - ref2)))

    print("KERNEL_OK")
</pallas_src>

<mosaic_0001>
module attributes {stable_mosaic.version = 11 : i64} {
  func.func @_encoder_layer_kernel(%arg0: i32, %arg1: memref<2x8x32xf32, #tpu.memory_space<vmem>>, %arg2: memref<2x8x32xf32, #tpu.memory_space<vmem>>, %arg3: memref<32x32xf32, #tpu.memory_space<vmem>>, %arg4: memref<32x32xf32, #tpu.memory_space<vmem>>, %arg5: memref<32x32xf32, #tpu.memory_space<vmem>>, %arg6: memref<1x32xf32, #tpu.memory_space<vmem>>, %arg7: memref<1x32xf32, #tpu.memory_space<vmem>>, %arg8: memref<1x32xf32, #tpu.memory_space<vmem>>, %arg9: memref<32x32xf32, #tpu.memory_space<vmem>>, %arg10: memref<1x32xf32, #tpu.memory_space<vmem>>, %arg11: memref<1x32xf32, #tpu.memory_space<vmem>>, %arg12: memref<1x32xf32, #tpu.memory_space<vmem>>, %arg13: memref<32x128xf32, #tpu.memory_space<vmem>>, %arg14: memref<1x128xf32, #tpu.memory_space<vmem>>, %arg15: memref<128x32xf32, #tpu.memory_space<vmem>>, %arg16: memref<1x32xf32, #tpu.memory_space<vmem>>, %arg17: memref<1x32xf32, #tpu.memory_space<vmem>>, %arg18: memref<1x32xf32, #tpu.memory_space<vmem>>, %arg19: memref<2x8x32xf32, #tpu.memory_space<vmem>>) attributes {dimension_semantics = [#tpu.dimension_semantics<parallel>], iteration_bounds = array<i64: 1>, scalar_prefetch = 0 : i64, scratch_operands = 0 : i64, tpu.core_type = #tpu.core_type<tc>, window_params = [{transform_indices = @transform_0, window_bounds = array<i64: 2, 8, 32>}, {transform_indices = @transform_1, window_bounds = array<i64: 2, 8, 32>}, {pipeline_mode = #tpu.pipeline_mode<synchronous>, transform_indices = @transform_2, window_bounds = array<i64: 32, 32>}, {pipeline_mode = #tpu.pipeline_mode<synchronous>, transform_indices = @transform_3, window_bounds = array<i64: 32, 32>}, {pipeline_mode = #tpu.pipeline_mode<synchronous>, transform_indices = @transform_4, window_bounds = array<i64: 32, 32>}, {pipeline_mode = #tpu.pipeline_mode<synchronous>, transform_indices = @transform_5, window_bounds = array<i64: 1, 32>}, {pipeline_mode = #tpu.pipeline_mode<synchronous>, transform_indices = @transform_6, window_bounds = array<i64: 1, 32>}, {pipeline_mode = #tpu.pipeline_mode<synchronous>, transform_indices = @transform_7, window_bounds = array<i64: 1, 32>}, {pipeline_mode = #tpu.pipeline_mode<synchronous>, transform_indices = @transform_8, window_bounds = array<i64: 32, 32>}, {pipeline_mode = #tpu.pipeline_mode<synchronous>, transform_indices = @transform_9, window_bounds = array<i64: 1, 32>}, {pipeline_mode = #tpu.pipeline_mode<synchronous>, transform_indices = @transform_10, window_bounds = array<i64: 1, 32>}, {pipeline_mode = #tpu.pipeline_mode<synchronous>, transform_indices = @transform_11, window_bounds = array<i64: 1, 32>}, {pipeline_mode = #tpu.pipeline_mode<synchronous>, transform_indices = @transform_12, window_bounds = array<i64: 32, 128>}, {pipeline_mode = #tpu.pipeline_mode<synchronous>, transform_indices = @transform_13, window_bounds = array<i64: 1, 128>}, {pipeline_mode = #tpu.pipeline_mode<synchronous>, transform_indices = @transform_14, window_bounds = array<i64: 128, 32>}, {pipeline_mode = #tpu.pipeline_mode<synchronous>, transform_indices = @transform_15, window_bounds = array<i64: 1, 32>}, {pipeline_mode = #tpu.pipeline_mode<synchronous>, transform_indices = @transform_16, window_bounds = array<i64: 1, 32>}, {pipeline_mode = #tpu.pipeline_mode<synchronous>, transform_indices = @transform_17, window_bounds = array<i64: 1, 32>}, {transform_indices = @transform_18, window_bounds = array<i64: 2, 8, 32>}]} {
    %c0 = arith.constant 0 : index
    %c0_0 = arith.constant 0 : index
    %c0_1 = arith.constant 0 : index
    %0 = vector.load %arg1[%c0, %c0_0, %c0_1] : memref<2x8x32xf32, #tpu.memory_space<vmem>>, vector<2x8x32xf32>
    %1 = vector.shape_cast %0 : vector<2x8x32xf32> to vector<16x32xf32>
    %c0_2 = arith.constant 0 : index
    %c0_3 = arith.constant 0 : index
    %c0_4 = arith.constant 0 : index
    %2 = vector.load %arg2[%c0_2, %c0_3, %c0_4] : memref<2x8x32xf32, #tpu.memory_space<vmem>>, vector<2x8x32xf32>
    %3 = vector.shape_cast %2 : vector<2x8x32xf32> to vector<16x32xf32>
    %4 = arith.addf %1, %3 : vector<16x32xf32>
    %c0_5 = arith.constant 0 : index
    %c0_6 = arith.constant 0 : index
    %5 = vector.load %arg3[%c0_5, %c0_6] : memref<32x32xf32, #tpu.memory_space<vmem>>, vector<32x32xf32>
    %cst = arith.constant dense<0.000000e+00> : vector<16x32xf32>
    %6 = tpu.matmul %4, %5, %cst {dimension_numbers = #tpu.dot_dimension_numbers<[1], [0], [0], [1], [0, 0, 1, 1], [], []>} : vector<16x32xf32>, vector<32x32xf32>, vector<16x32xf32> -> vector<16x32xf32>
    %c0_7 = arith.constant 0 : index
    %c0_8 = arith.constant 0 : index
    %7 = vector.load %arg6[%c0_7, %c0_8] : memref<1x32xf32, #tpu.memory_space<vmem>>, vector<1x32xf32>
    %8 = vector.broadcast %7 : vector<1x32xf32> to vector<16x32xf32>
    %9 = arith.addf %6, %8 : vector<16x32xf32>
    %c0_9 = arith.constant 0 : index
    %c0_10 = arith.constant 0 : index
    %10 = vector.load %arg4[%c0_9, %c0_10] : memref<32x32xf32, #tpu.memory_space<vmem>>, vector<32x32xf32>
    %cst_11 = arith.constant dense<0.000000e+00> : vector<16x32xf32>
    %11 = tpu.matmul %4, %10, %cst_11 {dimension_numbers = #tpu.dot_dimension_numbers<[1], [0], [0], [1], [0, 0, 1, 1], [], []>} : vector<16x32xf32>, vector<32x32xf32>, vector<16x32xf32> -> vector<16x32xf32>
    %c0_12 = arith.constant 0 : index
    %c0_13 = arith.constant 0 : index
    %12 = vector.load %arg7[%c0_12, %c0_13] : memref<1x32xf32, #tpu.memory_space<vmem>>, vector<1x32xf32>
    %13 = vector.broadcast %12 : vector<1x32xf32> to vector<16x32xf32>
    %14 = arith.addf %11, %13 : vector<16x32xf32>
    %c0_14 = arith.constant 0 : index
    %c0_15 = arith.constant 0 : index
    %15 = vector.load %arg5[%c0_14, %c0_15] : memref<32x32xf32, #tpu.memory_space<vmem>>, vector<32x32xf32>
    %cst_16 = arith.constant dense<0.000000e+00> : vector<16x32xf32>
    %16 = tpu.matmul %1, %15, %cst_16 {dimension_numbers = #tpu.dot_dimension_numbers<[1], [0], [0], [1], [0, 0, 1, 1], [], []>} : vector<16x32xf32>, vector<32x32xf32>, vector<16x32xf32> -> vector<16x32xf32>
    %c0_17 = arith.constant 0 : index
    %c0_18 = arith.constant 0 : index
    %17 = vector.load %arg8[%c0_17, %c0_18] : memref<1x32xf32, #tpu.memory_space<vmem>>, vector<1x32xf32>
    %18 = vector.broadcast %17 : vector<1x32xf32> to vector<16x32xf32>
    %19 = arith.addf %16, %18 : vector<16x32xf32>
    %cst_19 = arith.constant 0.353553385 : f32
    %20 = vector.broadcast %cst_19 : f32 to vector<16x32xf32>
    %21 = arith.mulf %9, %20 : vector<16x32xf32>
    %22 = vector.extract_strided_slice %21 {offsets = [0, 0], sizes = [8, 32], strides = [1, 1]} : vector<16x32xf32> to vector<8x32xf32>
    %23 = vector.extract_strided_slice %14 {offsets = [0, 0], sizes = [8, 32], strides = [1, 1]} : vector<16x32xf32> to vector<8x32xf32>
    %24 = vector.extract_strided_slice %19 {offsets = [0, 0], sizes = [8, 32], strides = [1, 1]} : vector<16x32xf32> to vector<8x32xf32>
    %25 = vector.extract_strided_slice %22 {offsets = [0, 0], sizes = [8, 8], strides = [1, 1]} : vector<8x32xf32> to vector<8x8xf32>
    %26 = vector.extract_strided_slice %23 {offsets = [0, 0], sizes = [8, 8], strides = [1, 1]} : vector<8x32xf32> to vector<8x8xf32>
    %27 = vector.extract_strided_slice %24 {offsets = [0, 0], sizes = [8, 8], strides = [1, 1]} : vector<8x32xf32> to vector<8x8xf32>
    %cst_20 = arith.constant dense<0.000000e+00> : vector<8x8xf32>
    %28 = tpu.matmul %25, %26, %cst_20 {dimension_numbers = #tpu.dot_dimension_numbers<[1], [1], [0], [0], [0, 0, 1, 0], [], []>} : vector<8x8xf32>, vector<8x8xf32>, vector<8x8xf32> -> vector<8x8xf32>
    %cst_21 = arith.constant dense<0xFF800000> : vector<8xf32>
    %29 = vector.multi_reduction <maximumf>, %28, %cst_21 [1] : vector<8x8xf32> to vector<8xf32>
    %30 = vector.shape_cast %29 : vector<8xf32> to vector<8x1xf32>
    %31 = vector.broadcast %30 : vector<8x1xf32> to vector<8x8xf32>
    %32 = arith.subf %28, %31 : vector<8x8xf32>
    %33 = math.exp %32 : vector<8x8xf32>
    %cst_22 = arith.constant dense<0.000000e+00> : vector<8xf32>
    %34 = vector.multi_reduction <add>, %33, %cst_22 [1] : vector<8x8xf32> to vector<8xf32>
    %35 = vector.shape_cast %34 : vector<8xf32> to vector<8x1xf32>
    %36 = tpu.reciprocal %35 {approx = true} : vector<8x1xf32> -> vector<8x1xf32>
    %37 = vector.broadcast %36 : vector<8x1xf32> to vector<8x8xf32>
    %38 = arith.mulf %33, %37 : vector<8x8xf32>
    %c0_23 = arith.constant 0 : index
    %c0_24 = arith.constant 0 : index
    %39 = vector.load %arg9[%c0_23, %c0_24] : memref<32x32xf32, #tpu.memory_space<vmem>>, vector<8x32xf32>
    %cst_25 = arith.constant dense<0.000000e+00> : vector<8x32xf32>
    %40 = tpu.matmul %27, %39, %cst_25 {dimension_numbers = #tpu.dot_dimension_numbers<[1], [0], [0], [1], [0, 0, 1, 1], [], []>} : vector<8x8xf32>, vector<8x32xf32>, vector<8x32xf32> -> vector<8x32xf32>
    %cst_26 = arith.constant dense<0.000000e+00> : vector<8x32xf32>
    %41 = tpu.matmul %38, %40, %cst_26 {dimension_numbers = #tpu.dot_dimension_numbers<[1], [0], [0], [1], [0, 0, 1, 1], [], []>} : vector<8x8xf32>, vector<8x32xf32>, vector<8x32xf32> -> vector<8x32xf32>
    %42 = vector.extract_strided_slice %22 {offsets = [0, 8], sizes = [8, 8], strides = [1, 1]} : vector<8x32xf32> to vector<8x8xf32>
    %43 = vector.extract_strided_slice %23 {offsets = [0, 8], sizes = [8, 8], strides = [1, 1]} : vector<8x32xf32> to vector<8x8xf32>
    %44 = vector.extract_strided_slice %24 {offsets = [0, 8], sizes = [8, 8], strides = [1, 1]} : vector<8x32xf32> to vector<8x8xf32>
    %cst_27 = arith.constant dense<0.000000e+00> : vector<8x8xf32>
    %45 = tpu.matmul %42, %43, %cst_27 {dimension_numbers = #tpu.dot_dimension_numbers<[1], [1], [0], [0], [0, 0, 1, 0], [], []>} : vector<8x8xf32>, vector<8x8xf32>, vector<8x8xf32> -> vector<8x8xf32>
    %cst_28 = arith.constant dense<0xFF800000> : vector<8xf32>
    %46 = vector.multi_reduction <maximumf>, %45, %cst_28 [1] : vector<8x8xf32> to vector<8xf32>
    %47 = vector.shape_cast %46 : vector<8xf32> to vector<8x1xf32>
    %48 = vector.broadcast %47 : vector<8x1xf32> to vector<8x8xf32>
    %49 = arith.subf %45, %48 : vector<8x8xf32>
    %50 = math.exp %49 : vector<8x8xf32>
    %cst_29 = arith.constant dense<0.000000e+00> : vector<8xf32>
    %51 = vector.multi_reduction <add>, %50, %cst_29 [1] : vector<8x8xf32> to vector<8xf32>
    %52 = vector.shape_cast %51 : vector<8xf32> to vector<8x1xf32>
    %53 = tpu.reciprocal %52 {approx = true} : vector<8x1xf32> -> vector<8x1xf32>
    %54 = vector.broadcast %53 : vector<8x1xf32> to vector<8x8xf32>
    %55 = arith.mulf %50, %54 : vector<8x8xf32>
    %c8 = arith.constant 8 : index
    %c0_30 = arith.constant 0 : index
    %56 = vector.load %arg9[%c8, %c0_30] : memref<32x32xf32, #tpu.memory_space<vmem>>, vector<8x32xf32>
    %cst_31 = arith.constant dense<0.000000e+00> : vector<8x32xf32>
    %57 = tpu.matmul %44, %56, %cst_31 {dimension_numbers = #tpu.dot_dimension_numbers<[1], [0], [0], [1], [0, 0, 1, 1], [], []>} : vector<8x8xf32>, vector<8x32xf32>, vector<8x32xf32> -> vector<8x32xf32>
    %cst_32 = arith.constant dense<0.000000e+00> : vector<8x32xf32>
    %58 = tpu.matmul %55, %57, %cst_32 {dimension_numbers = #tpu.dot_dimension_numbers<[1], [0], [0], [1], [0, 0, 1, 1], [], []>} : vector<8x8xf32>, vector<8x32xf32>, vector<8x32xf32> -> vector<8x32xf32>
    %59 = arith.addf %41, %58 : vector<8x32xf32>
    %60 = vector.extract_strided_slice %22 {offsets = [0, 16], sizes = [8, 8], strides = [1, 1]} : vector<8x32xf32> to vector<8x8xf32>
    %61 = vector.extract_strided_slice %23 {offsets = [0, 16], sizes = [8, 8], strides = [1, 1]} : vector<8x32xf32> to vector<8x8xf32>
    %62 = vector.extract_strided_slice %24 {offsets = [0, 16], sizes = [8, 8], strides = [1, 1]} : vector<8x32xf32> to vector<8x8xf32>
    %cst_33 = arith.constant dense<0.000000e+00> : vector<8x8xf32>
    %63 = tpu.matmul %60, %61, %cst_33 {dimension_numbers = #tpu.dot_dimension_numbers<[1], [1], [0], [0], [0, 0, 1, 0], [], []>} : vector<8x8xf32>, vector<8x8xf32>, vector<8x8xf32> -> vector<8x8xf32>
    %cst_34 = arith.constant dense<0xFF800000> : vector<8xf32>
    %64 = vector.multi_reduction <maximumf>, %63, %cst_34 [1] : vector<8x8xf32> to vector<8xf32>
    %65 = vector.shape_cast %64 : vector<8xf32> to vector<8x1xf32>
    %66 = vector.broadcast %65 : vector<8x1xf32> to vector<8x8xf32>
    %67 = arith.subf %63, %66 : vector<8x8xf32>
    %68 = math.exp %67 : vector<8x8xf32>
    %cst_35 = arith.constant dense<0.000000e+00> : vector<8xf32>
    %69 = vector.multi_reduction <add>, %68, %cst_35 [1] : vector<8x8xf32> to vector<8xf32>
    %70 = vector.shape_cast %69 : vector<8xf32> to vector<8x1xf32>
    %71 = tpu.reciprocal %70 {approx = true} : vector<8x1xf32> -> vector<8x1xf32>
    %72 = vector.broadcast %71 : vector<8x1xf32> to vector<8x8xf32>
    %73 = arith.mulf %68, %72 : vector<8x8xf32>
    %c16 = arith.constant 16 : index
    %c0_36 = arith.constant 0 : index
    %74 = vector.load %arg9[%c16, %c0_36] : memref<32x32xf32, #tpu.memory_space<vmem>>, vector<8x32xf32>
    %cst_37 = arith.constant dense<0.000000e+00> : vector<8x32xf32>
    %75 = tpu.matmul %62, %74, %cst_37 {dimension_numbers = #tpu.dot_dimension_numbers<[1], [0], [0], [1], [0, 0, 1, 1], [], []>} : vector<8x8xf32>, vector<8x32xf32>, vector<8x32xf32> -> vector<8x32xf32>
    %cst_38 = arith.constant dense<0.000000e+00> : vector<8x32xf32>
    %76 = tpu.matmul %73, %75, %cst_38 {dimension_numbers = #tpu.dot_dimension_numbers<[1], [0], [0], [1], [0, 0, 1, 1], [], []>} : vector<8x8xf32>, vector<8x32xf32>, vector<8x32xf32> -> vector<8x32xf32>
    %77 = arith.addf %59, %76 : vector<8x32xf32>
    %78 = vector.extract_strided_slice %22 {offsets = [0, 24], sizes = [8, 8], strides = [1, 1]} : vector<8x32xf32> to vector<8x8xf32>
    %79 = vector.extract_strided_slice %23 {offsets = [0, 24], sizes = [8, 8], strides = [1, 1]} : vector<8x32xf32> to vector<8x8xf32>
    %80 = vector.extract_strided_slice %24 {offsets = [0, 24], sizes = [8, 8], strides = [1, 1]} : vector<8x32xf32> to vector<8x8xf32>
    %cst_39 = arith.constant dense<0.000000e+00> : vector<8x8xf32>
    %81 = tpu.matmul %78, %79, %cst_39 {dimension_numbers = #tpu.dot_dimension_numbers<[1], [1], [0], [0], [0, 0, 1, 0], [], []>} : vector<8x8xf32>, vector<8x8xf32>, vector<8x8xf32> -> vector<8x8xf32>
    %cst_40 = arith.constant dense<0xFF800000> : vector<8xf32>
    %82 = vector.multi_reduction <maximumf>, %81, %cst_40 [1] : vector<8x8xf32> to vector<8xf32>
    %83 = vector.shape_cast %82 : vector<8xf32> to vector<8x1xf32>
    %84 = vector.broadcast %83 : vector<8x1xf32> to vector<8x8xf32>
    %85 = arith.subf %81, %84 : vector<8x8xf32>
    %86 = math.exp %85 : vector<8x8xf32>
    %cst_41 = arith.constant dense<0.000000e+00> : vector<8xf32>
    %87 = vector.multi_reduction <add>, %86, %cst_41 [1] : vector<8x8xf32> to vector<8xf32>
    %88 = vector.shape_cast %87 : vector<8xf32> to vector<8x1xf32>
    %89 = tpu.reciprocal %88 {approx = true} : vector<8x1xf32> -> vector<8x1xf32>
    %90 = vector.broadcast %89 : vector<8x1xf32> to vector<8x8xf32>
    %91 = arith.mulf %86, %90 : vector<8x8xf32>
    %c24 = arith.constant 24 : index
    %c0_42 = arith.constant 0 : index
    %92 = vector.load %arg9[%c24, %c0_42] : memref<32x32xf32, #tpu.memory_space<vmem>>, vector<8x32xf32>
    %cst_43 = arith.constant dense<0.000000e+00> : vector<8x32xf32>
    %93 = tpu.matmul %80, %92, %cst_43 {dimension_numbers = #tpu.dot_dimension_numbers<[1], [0], [0], [1], [0, 0, 1, 1], [], []>} : vector<8x8xf32>, vector<8x32xf32>, vector<8x32xf32> -> vector<8x32xf32>
    %cst_44 = arith.constant dense<0.000000e+00> : vector<8x32xf32>
    %94 = tpu.matmul %91, %93, %cst_44 {dimension_numbers = #tpu.dot_dimension_numbers<[1], [0], [0], [1], [0, 0, 1, 1], [], []>} : vector<8x8xf32>, vector<8x32xf32>, vector<8x32xf32> -> vector<8x32xf32>
    %95 = arith.addf %77, %94 : vector<8x32xf32>
    %96 = vector.extract_strided_slice %21 {offsets = [8, 0], sizes = [8, 32], strides = [1, 1]} : vector<16x32xf32> to vector<8x32xf32>
    %97 = vector.extract_strided_slice %14 {offsets = [8, 0], sizes = [8, 32], strides = [1, 1]} : vector<16x32xf32> to vector<8x32xf32>
    %98 = vector.extract_strided_slice %19 {offsets = [8, 0], sizes = [8, 32], strides = [1, 1]} : vector<16x32xf32> to vector<8x32xf32>
    %99 = vector.extract_strided_slice %96 {offsets = [0, 0], sizes = [8, 8], strides = [1, 1]} : vector<8x32xf32> to vector<8x8xf32>
    %100 = vector.extract_strided_slice %97 {offsets = [0, 0], sizes = [8, 8], strides = [1, 1]} : vector<8x32xf32> to vector<8x8xf32>
    %101 = vector.extract_strided_slice %98 {offsets = [0, 0], sizes = [8, 8], strides = [1, 1]} : vector<8x32xf32> to vector<8x8xf32>
    %cst_45 = arith.constant dense<0.000000e+00> : vector<8x8xf32>
    %102 = tpu.matmul %99, %100, %cst_45 {dimension_numbers = #tpu.dot_dimension_numbers<[1], [1], [0], [0], [0, 0, 1, 0], [], []>} : vector<8x8xf32>, vector<8x8xf32>, vector<8x8xf32> -> vector<8x8xf32>
    %cst_46 = arith.constant dense<0xFF800000> : vector<8xf32>
    %103 = vector.multi_reduction <maximumf>, %102, %cst_46 [1] : vector<8x8xf32> to vector<8xf32>
    %104 = vector.shape_cast %103 : vector<8xf32> to vector<8x1xf32>
    %105 = vector.broadcast %104 : vector<8x1xf32> to vector<8x8xf32>
    %106 = arith.subf %102, %105 : vector<8x8xf32>
    %107 = math.exp %106 : vector<8x8xf32>
    %cst_47 = arith.constant dense<0.000000e+00> : vector<8xf32>
    %108 = vector.multi_reduction <add>, %107, %cst_47 [1] : vector<8x8xf32> to vector<8xf32>
    %109 = vector.shape_cast %108 : vector<8xf32> to vector<8x1xf32>
    %110 = tpu.reciprocal %109 {approx = true} : vector<8x1xf32> -> vector<8x1xf32>
    %111 = vector.broadcast %110 : vector<8x1xf32> to vector<8x8xf32>
    %112 = arith.mulf %107, %111 : vector<8x8xf32>
    %c0_48 = arith.constant 0 : index
    %c0_49 = arith.constant 0 : index
    %113 = vector.load %arg9[%c0_48, %c0_49] : memref<32x32xf32, #tpu.memory_space<vmem>>, vector<8x32xf32>
    %cst_50 = arith.constant dense<0.000000e+00> : vector<8x32xf32>
    %114 = tpu.matmul %101, %113, %cst_50 {dimension_numbers = #tpu.dot_dimension_numbers<[1], [0], [0], [1], [0, 0, 1, 1], [], []>} : vector<8x8xf32>, vector<8x32xf32>, vector<8x32xf32> -> vector<8x32xf32>
    %cst_51 = arith.constant dense<0.000000e+00> : vector<8x32xf32>
    %115 = tpu.matmul %112, %114, %cst_51 {dimension_numbers = #tpu.dot_dimension_numbers<[1], [0], [0], [1], [0, 0, 1, 1], [], []>} : vector<8x8xf32>, vector<8x32xf32>, vector<8x32xf32> -> vector<8x32xf32>
    %116 = vector.extract_strided_slice %96 {offsets = [0, 8], sizes = [8, 8], strides = [1, 1]} : vector<8x32xf32> to vector<8x8xf32>
    %117 = vector.extract_strided_slice %97 {offsets = [0, 8], sizes = [8, 8], strides = [1, 1]} : vector<8x32xf32> to vector<8x8xf32>
    %118 = vector.extract_strided_slice %98 {offsets = [0, 8], sizes = [8, 8], strides = [1, 1]} : vector<8x32xf32> to vector<8x8xf32>
    %cst_52 = arith.constant dense<0.000000e+00> : vector<8x8xf32>
    %119 = tpu.matmul %116, %117, %cst_52 {dimension_numbers = #tpu.dot_dimension_numbers<[1], [1], [0], [0], [0, 0, 1, 0], [], []>} : vector<8x8xf32>, vector<8x8xf32>, vector<8x8xf32> -> vector<8x8xf32>
    %cst_53 = arith.constant dense<0xFF800000> : vector<8xf32>
    %120 = vector.multi_reduction <maximumf>, %119, %cst_53 [1] : vector<8x8xf32> to vector<8xf32>
    %121 = vector.shape_cast %120 : vector<8xf32> to vector<8x1xf32>
    %122 = vector.broadcast %121 : vector<8x1xf32> to vector<8x8xf32>
    %123 = arith.subf %119, %122 : vector<8x8xf32>
    %124 = math.exp %123 : vector<8x8xf32>
    %cst_54 = arith.constant dense<0.000000e+00> : vector<8xf32>
    %125 = vector.multi_reduction <add>, %124, %cst_54 [1] : vector<8x8xf32> to vector<8xf32>
    %126 = vector.shape_cast %125 : vector<8xf32> to vector<8x1xf32>
    %127 = tpu.reciprocal %126 {approx = true} : vector<8x1xf32> -> vector<8x1xf32>
    %128 = vector.broadcast %127 : vector<8x1xf32> to vector<8x8xf32>
    %129 = arith.mulf %124, %128 : vector<8x8xf32>
    %c8_55 = arith.constant 8 : index
    %c0_56 = arith.constant 0 : index
    %130 = vector.load %arg9[%c8_55, %c0_56] : memref<32x32xf32, #tpu.memory_space<vmem>>, vector<8x32xf32>
    %cst_57 = arith.constant dense<0.000000e+00> : vector<8x32xf32>
    %131 = tpu.matmul %118, %130, %cst_57 {dimension_numbers = #tpu.dot_dimension_numbers<[1], [0], [0], [1], [0, 0, 1, 1], [], []>} : vector<8x8xf32>, vector<8x32xf32>, vector<8x32xf32> -> vector<8x32xf32>
    %cst_58 = arith.constant dense<0.000000e+00> : vector<8x32xf32>
    %132 = tpu.matmul %129, %131, %cst_58 {dimension_numbers = #tpu.dot_dimension_numbers<[1], [0], [0], [1], [0, 0, 1, 1], [], []>} : vector<8x8xf32>, vector<8x32xf32>, vector<8x32xf32> -> vector<8x32xf32>
    %133 = arith.addf %115, %132 : vector<8x32xf32>
    %134 = vector.extract_strided_slice %96 {offsets = [0, 16], sizes = [8, 8], strides = [1, 1]} : vector<8x32xf32> to vector<8x8xf32>
    %135 = vector.extract_strided_slice %97 {offsets = [0, 16], sizes = [8, 8], strides = [1, 1]} : vector<8x32xf32> to vector<8x8xf32>
    %136 = vector.extract_strided_slice %98 {offsets = [0, 16], sizes = [8, 8], strides = [1, 1]} : vector<8x32xf32> to vector<8x8xf32>
    %cst_59 = arith.constant dense<0.000000e+00> : vector<8x8xf32>
    %137 = tpu.matmul %134, %135, %cst_59 {dimension_numbers = #tpu.dot_dimension_numbers<[1], [1], [0], [0], [0, 0, 1, 0], [], []>} : vector<8x8xf32>, vector<8x8xf32>, vector<8x8xf32> -> vector<8x8xf32>
    %cst_60 = arith.constant dense<0xFF800000> : vector<8xf32>
    %138 = vector.multi_reduction <maximumf>, %137, %cst_60 [1] : vector<8x8xf32> to vector<8xf32>
    %139 = vector.shape_cast %138 : vector<8xf32> to vector<8x1xf32>
    %140 = vector.broadcast %139 : vector<8x1xf32> to vector<8x8xf32>
    %141 = arith.subf %137, %140 : vector<8x8xf32>
    %142 = math.exp %141 : vector<8x8xf32>
    %cst_61 = arith.constant dense<0.000000e+00> : vector<8xf32>
    %143 = vector.multi_reduction <add>, %142, %cst_61 [1] : vector<8x8xf32> to vector<8xf32>
    %144 = vector.shape_cast %143 : vector<8xf32> to vector<8x1xf32>
    %145 = tpu.reciprocal %144 {approx = true} : vector<8x1xf32> -> vector<8x1xf32>
    %146 = vector.broadcast %145 : vector<8x1xf32> to vector<8x8xf32>
    %147 = arith.mulf %142, %146 : vector<8x8xf32>
    %c16_62 = arith.constant 16 : index
    %c0_63 = arith.constant 0 : index
    %148 = vector.load %arg9[%c16_62, %c0_63] : memref<32x32xf32, #tpu.memory_space<vmem>>, vector<8x32xf32>
    %cst_64 = arith.constant dense<0.000000e+00> : vector<8x32xf32>
    %149 = tpu.matmul %136, %148, %cst_64 {dimension_numbers = #tpu.dot_dimension_numbers<[1], [0], [0], [1], [0, 0, 1, 1], [], []>} : vector<8x8xf32>, vector<8x32xf32>, vector<8x32xf32> -> vector<8x32xf32>
    %cst_65 = arith.constant dense<0.000000e+00> : vector<8x32xf32>
    %150 = tpu.matmul %147, %149, %cst_65 {dimension_numbers = #tpu.dot_dimension_numbers<[1], [0], [0], [1], [0, 0, 1, 1], [], []>} : vector<8x8xf32>, vector<8x32xf32>, vector<8x32xf32> -> vector<8x32xf32>
    %151 = arith.addf %133, %150 : vector<8x32xf32>
    %152 = vector.extract_strided_slice %96 {offsets = [0, 24], sizes = [8, 8], strides = [1, 1]} : vector<8x32xf32> to vector<8x8xf32>
    %153 = vector.extract_strided_slice %97 {offsets = [0, 24], sizes = [8, 8], strides = [1, 1]} : vector<8x32xf32> to vector<8x8xf32>
    %154 = vector.extract_strided_slice %98 {offsets = [0, 24], sizes = [8, 8], strides = [1, 1]} : vector<8x32xf32> to vector<8x8xf32>
    %cst_66 = arith.constant dense<0.000000e+00> : vector<8x8xf32>
    %155 = tpu.matmul %152, %153, %cst_66 {dimension_numbers = #tpu.dot_dimension_numbers<[1], [1], [0], [0], [0, 0, 1, 0], [], []>} : vector<8x8xf32>, vector<8x8xf32>, vector<8x8xf32> -> vector<8x8xf32>
    %cst_67 = arith.constant dense<0xFF800000> : vector<8xf32>
    %156 = vector.multi_reduction <maximumf>, %155, %cst_67 [1] : vector<8x8xf32> to vector<8xf32>
    %157 = vector.shape_cast %156 : vector<8xf32> to vector<8x1xf32>
    %158 = vector.broadcast %157 : vector<8x1xf32> to vector<8x8xf32>
    %159 = arith.subf %155, %158 : vector<8x8xf32>
    %160 = math.exp %159 : vector<8x8xf32>
    %cst_68 = arith.constant dense<0.000000e+00> : vector<8xf32>
    %161 = vector.multi_reduction <add>, %160, %cst_68 [1] : vector<8x8xf32> to vector<8xf32>
    %162 = vector.shape_cast %161 : vector<8xf32> to vector<8x1xf32>
    %163 = tpu.reciprocal %162 {approx = true} : vector<8x1xf32> -> vector<8x1xf32>
    %164 = vector.broadcast %163 : vector<8x1xf32> to vector<8x8xf32>
    %165 = arith.mulf %160, %164 : vector<8x8xf32>
    %c24_69 = arith.constant 24 : index
    %c0_70 = arith.constant 0 : index
    %166 = vector.load %arg9[%c24_69, %c0_70] : memref<32x32xf32, #tpu.memory_space<vmem>>, vector<8x32xf32>
    %cst_71 = arith.constant dense<0.000000e+00> : vector<8x32xf32>
    %167 = tpu.matmul %154, %166, %cst_71 {dimension_numbers = #tpu.dot_dimension_numbers<[1], [0], [0], [1], [0, 0, 1, 1], [], []>} : vector<8x8xf32>, vector<8x32xf32>, vector<8x32xf32> -> vector<8x32xf32>
    %cst_72 = arith.constant dense<0.000000e+00> : vector<8x32xf32>
    %168 = tpu.matmul %165, %167, %cst_72 {dimension_numbers = #tpu.dot_dimension_numbers<[1], [0], [0], [1], [0, 0, 1, 1], [], []>} : vector<8x8xf32>, vector<8x32xf32>, vector<8x32xf32> -> vector<8x32xf32>
    %169 = arith.addf %151, %168 : vector<8x32xf32>
    %170 = tpu.concatenate %95, %169 in 0 : vector<8x32xf32>, vector<8x32xf32> -> vector<16x32xf32>
    %c0_73 = arith.constant 0 : index
    %c0_74 = arith.constant 0 : index
    %171 = vector.load %arg10[%c0_73, %c0_74] : memref<1x32xf32, #tpu.memory_space<vmem>>, vector<1x32xf32>
    %172 = vector.broadcast %171 : vector<1x32xf32> to vector<16x32xf32>
    %173 = arith.addf %170, %172 : vector<16x32xf32>
    %174 = arith.addf %1, %173 : vector<16x32xf32>
    %c0_75 = arith.constant 0 : index
    %c0_76 = arith.constant 0 : index
    %175 = vector.load %arg11[%c0_75, %c0_76] : memref<1x32xf32, #tpu.memory_space<vmem>>, vector<1x32xf32>
    %c0_77 = arith.constant 0 : index
    %c0_78 = arith.constant 0 : index
    %176 = vector.load %arg12[%c0_77, %c0_78] : memref<1x32xf32, #tpu.memory_space<vmem>>, vector<1x32xf32>
    %cst_79 = arith.constant dense<0.000000e+00> : vector<16xf32>
    %177 = vector.multi_reduction <add>, %174, %cst_79 [1] : vector<16x32xf32> to vector<16xf32>
    %178 = vector.shape_cast %177 : vector<16xf32> to vector<16x1xf32>
    %cst_80 = arith.constant 3.200000e+01 : f32
    %179 = vector.broadcast %cst_80 : f32 to vector<16x1xf32>
    %180 = arith.divf %178, %179 : vector<16x1xf32>
    %181 = arith.mulf %174, %174 : vector<16x32xf32>
    %cst_81 = arith.constant dense<0.000000e+00> : vector<16xf32>
    %182 = vector.multi_reduction <add>, %181, %cst_81 [1] : vector<16x32xf32> to vector<16xf32>
    %183 = vector.shape_cast %182 : vector<16xf32> to vector<16x1xf32>
    %cst_82 = arith.constant 3.200000e+01 : f32
    %184 = vector.broadcast %cst_82 : f32 to vector<16x1xf32>
    %185 = arith.divf %183, %184 : vector<16x1xf32>
    %186 = arith.mulf %180, %180 : vector<16x1xf32>
    %187 = arith.subf %185, %186 : vector<16x1xf32>
    %188 = vector.broadcast %180 : vector<16x1xf32> to vector<16x32xf32>
    %189 = arith.subf %174, %188 : vector<16x32xf32>
    %cst_83 = arith.constant 9.99999974E-6 : f32
    %190 = vector.broadcast %cst_83 : f32 to vector<16x1xf32>
    %191 = arith.addf %187, %190 : vector<16x1xf32>
    %192 = math.rsqrt %191 : vector<16x1xf32>
    %193 = vector.broadcast %192 : vector<16x1xf32> to vector<16x32xf32>
    %194 = arith.mulf %189, %193 : vector<16x32xf32>
    %195 = vector.broadcast %175 : vector<1x32xf32> to vector<16x32xf32>
    %196 = arith.mulf %194, %195 : vector<16x32xf32>
    %197 = vector.broadcast %176 : vector<1x32xf32> to vector<16x32xf32>
    %198 = arith.addf %196, %197 : vector<16x32xf32>
    %c0_84 = arith.constant 0 : index
    %c0_85 = arith.constant 0 : index
    %199 = vector.load %arg13[%c0_84, %c0_85] : memref<32x128xf32, #tpu.memory_space<vmem>>, vector<32x128xf32>
    %cst_86 = arith.constant dense<0.000000e+00> : vector<16x128xf32>
    %200 = tpu.matmul %198, %199, %cst_86 {dimension_numbers = #tpu.dot_dimension_numbers<[1], [0], [0], [1], [0, 0, 1, 1], [], []>} : vector<16x32xf32>, vector<32x128xf32>, vector<16x128xf32> -> vector<16x128xf32>
    %c0_87 = arith.constant 0 : index
    %c0_88 = arith.constant 0 : index
    %201 = vector.load %arg14[%c0_87, %c0_88] : memref<1x128xf32, #tpu.memory_space<vmem>>, vector<1x128xf32>
    %202 = vector.broadcast %201 : vector<1x128xf32> to vector<16x128xf32>
    %203 = arith.addf %200, %202 : vector<16x128xf32>
    %cst_89 = arith.constant 0.000000e+00 : f32
    %204 = vector.broadcast %cst_89 : f32 to vector<16x128xf32>
    %205 = arith.maximumf %203, %204 : vector<16x128xf32>
    %c0_90 = arith.constant 0 : index
    %c0_91 = arith.constant 0 : index
    %206 = vector.load %arg15[%c0_90, %c0_91] : memref<128x32xf32, #tpu.memory_space<vmem>>, vector<128x32xf32>
    %cst_92 = arith.constant dense<0.000000e+00> : vector<16x32xf32>
    %207 = tpu.matmul %205, %206, %cst_92 {dimension_numbers = #tpu.dot_dimension_numbers<[1], [0], [0], [1], [0, 0, 1, 1], [], []>} : vector<16x128xf32>, vector<128x32xf32>, vector<16x32xf32> -> vector<16x32xf32>
    %c0_93 = arith.constant 0 : index
    %c0_94 = arith.constant 0 : index
    %208 = vector.load %arg16[%c0_93, %c0_94] : memref<1x32xf32, #tpu.memory_space<vmem>>, vector<1x32xf32>
    %209 = vector.broadcast %208 : vector<1x32xf32> to vector<16x32xf32>
    %210 = arith.addf %207, %209 : vector<16x32xf32>
    %211 = arith.addf %198, %210 : vector<16x32xf32>
    %c0_95 = arith.constant 0 : index
    %c0_96 = arith.constant 0 : index
    %212 = vector.load %arg17[%c0_95, %c0_96] : memref<1x32xf32, #tpu.memory_space<vmem>>, vector<1x32xf32>
    %c0_97 = arith.constant 0 : index
    %c0_98 = arith.constant 0 : index
    %213 = vector.load %arg18[%c0_97, %c0_98] : memref<1x32xf32, #tpu.memory_space<vmem>>, vector<1x32xf32>
    %cst_99 = arith.constant dense<0.000000e+00> : vector<16xf32>
    %214 = vector.multi_reduction <add>, %211, %cst_99 [1] : vector<16x32xf32> to vector<16xf32>
    %215 = vector.shape_cast %214 : vector<16xf32> to vector<16x1xf32>
    %cst_100 = arith.constant 3.200000e+01 : f32
    %216 = vector.broadcast %cst_100 : f32 to vector<16x1xf32>
    %217 = arith.divf %215, %216 : vector<16x1xf32>
    %218 = arith.mulf %211, %211 : vector<16x32xf32>
    %cst_101 = arith.constant dense<0.000000e+00> : vector<16xf32>
    %219 = vector.multi_reduction <add>, %218, %cst_101 [1] : vector<16x32xf32> to vector<16xf32>
    %220 = vector.shape_cast %219 : vector<16xf32> to vector<16x1xf32>
    %cst_102 = arith.constant 3.200000e+01 : f32
    %221 = vector.broadcast %cst_102 : f32 to vector<16x1xf32>
    %222 = arith.divf %220, %221 : vector<16x1xf32>
    %223 = arith.mulf %217, %217 : vector<16x1xf32>
    %224 = arith.subf %222, %223 : vector<16x1xf32>
    %225 = vector.broadcast %217 : vector<16x1xf32> to vector<16x32xf32>
    %226 = arith.subf %211, %225 : vector<16x32xf32>
    %cst_103 = arith.constant 9.99999974E-6 : f32
    %227 = vector.broadcast %cst_103 : f32 to vector<16x1xf32>
    %228 = arith.addf %224, %227 : vector<16x1xf32>
    %229 = math.rsqrt %228 : vector<16x1xf32>
    %230 = vector.broadcast %229 : vector<16x1xf32> to vector<16x32xf32>
    %231 = arith.mulf %226, %230 : vector<16x32xf32>
    %232 = vector.broadcast %212 : vector<1x32xf32> to vector<16x32xf32>
    %233 = arith.mulf %231, %232 : vector<16x32xf32>
    %234 = vector.broadcast %213 : vector<1x32xf32> to vector<16x32xf32>
    %235 = arith.addf %233, %234 : vector<16x32xf32>
    %236 = vector.shape_cast %235 : vector<16x32xf32> to vector<2x8x32xf32>
    %c0_104 = arith.constant 0 : index
    %c0_105 = arith.constant 0 : index
    %c0_106 = arith.constant 0 : index
    %237 = vector.load %arg19[%c0_104, %c0_105, %c0_106] : memref<2x8x32xf32, #tpu.memory_space<vmem>>, vector<2x8x32xf32>
    tpu.vector_store %arg19[%c0_104, %c0_105, %c0_106], %236 {strides = array<i32>} : memref<2x8x32xf32, #tpu.memory_space<vmem>>, vector<2x8x32xf32>,
    return
  }
  func.func @transform_0(%arg0: i32) -> (i32, i32, i32) {
    %c0_i32 = arith.constant 0 : i32
    %c0_i32_0 = arith.constant 0 : i32
    %c0_i32_1 = arith.constant 0 : i32
    return %arg0, %c0_i32, %c0_i32_0 : i32, i32, i32
  }
  func.func @transform_1(%arg0: i32) -> (i32, i32, i32) {
    %c0_i32 = arith.constant 0 : i32
    %c0_i32_0 = arith.constant 0 : i32
    %c0_i32_1 = arith.constant 0 : i32
    return %arg0, %c0_i32, %c0_i32_0 : i32, i32, i32
  }
  func.func @transform_2(%arg0: i32) -> (i32, i32) {
    %c0_i32 = arith.constant 0 : i32
    %c0_i32_0 = arith.constant 0 : i32
    %c0_i32_1 = arith.constant 0 : i32
    return %c0_i32, %c0_i32_0 : i32, i32
  }
  func.func @transform_3(%arg0: i32) -> (i32, i32) {
    %c0_i32 = arith.constant 0 : i32
    %c0_i32_0 = arith.constant 0 : i32
    %c0_i32_1 = arith.constant 0 : i32
    return %c0_i32, %c0_i32_0 : i32, i32
  }
  func.func @transform_4(%arg0: i32) -> (i32, i32) {
    %c0_i32 = arith.constant 0 : i32
    %c0_i32_0 = arith.constant 0 : i32
    %c0_i32_1 = arith.constant 0 : i32
    return %c0_i32, %c0_i32_0 : i32, i32
  }
  func.func @transform_5(%arg0: i32) -> (i32, i32) {
    %c0_i32 = arith.constant 0 : i32
    %c0_i32_0 = arith.constant 0 : i32
    %c0_i32_1 = arith.constant 0 : i32
    return %c0_i32, %c0_i32_0 : i32, i32
  }
  func.func @transform_6(%arg0: i32) -> (i32, i32) {
    %c0_i32 = arith.constant 0 : i32
    %c0_i32_0 = arith.constant 0 : i32
    %c0_i32_1 = arith.constant 0 : i32
    return %c0_i32, %c0_i32_0 : i32, i32
  }
  func.func @transform_7(%arg0: i32) -> (i32, i32) {
    %c0_i32 = arith.constant 0 : i32
    %c0_i32_0 = arith.constant 0 : i32
    %c0_i32_1 = arith.constant 0 : i32
    return %c0_i32, %c0_i32_0 : i32, i32
  }
  func.func @transform_8(%arg0: i32) -> (i32, i32) {
    %c0_i32 = arith.constant 0 : i32
    %c0_i32_0 = arith.constant 0 : i32
    %c0_i32_1 = arith.constant 0 : i32
    return %c0_i32, %c0_i32_0 : i32, i32
  }
  func.func @transform_9(%arg0: i32) -> (i32, i32) {
    %c0_i32 = arith.constant 0 : i32
    %c0_i32_0 = arith.constant 0 : i32
    %c0_i32_1 = arith.constant 0 : i32
    return %c0_i32, %c0_i32_0 : i32, i32
  }
  func.func @transform_10(%arg0: i32) -> (i32, i32) {
    %c0_i32 = arith.constant 0 : i32
    %c0_i32_0 = arith.constant 0 : i32
    %c0_i32_1 = arith.constant 0 : i32
    return %c0_i32, %c0_i32_0 : i32, i32
  }
  func.func @transform_11(%arg0: i32) -> (i32, i32) {
    %c0_i32 = arith.constant 0 : i32
    %c0_i32_0 = arith.constant 0 : i32
    %c0_i32_1 = arith.constant 0 : i32
    return %c0_i32, %c0_i32_0 : i32, i32
  }
  func.func @transform_12(%arg0: i32) -> (i32, i32) {
    %c0_i32 = arith.constant 0 : i32
    %c0_i32_0 = arith.constant 0 : i32
    %c0_i32_1 = arith.constant 0 : i32
    return %c0_i32, %c0_i32_0 : i32, i32
  }
  func.func @transform_13(%arg0: i32) -> (i32, i32) {
    %c0_i32 = arith.constant 0 : i32
    %c0_i32_0 = arith.constant 0 : i32
    %c0_i32_1 = arith.constant 0 : i32
    return %c0_i32, %c0_i32_0 : i32, i32
  }
  func.func @transform_14(%arg0: i32) -> (i32, i32) {
    %c0_i32 = arith.constant 0 : i32
    %c0_i32_0 = arith.constant 0 : i32
    %c0_i32_1 = arith.constant 0 : i32
    return %c0_i32, %c0_i32_0 : i32, i32
  }
  func.func @transform_15(%arg0: i32) -> (i32, i32) {
    %c0_i32 = arith.constant 0 : i32
    %c0_i32_0 = arith.constant 0 : i32
    %c0_i32_1 = arith.constant 0 : i32
    return %c0_i32, %c0_i32_0 : i32, i32
  }
  func.func @transform_16(%arg0: i32) -> (i32, i32) {
    %c0_i32 = arith.constant 0 : i32
    %c0_i32_0 = arith.constant 0 : i32
    %c0_i32_1 = arith.constant 0 : i32
    return %c0_i32, %c0_i32_0 : i32, i32
  }
  func.func @transform_17(%arg0: i32) -> (i32, i32) {
    %c0_i32 = arith.constant 0 : i32
    %c0_i32_0 = arith.constant 0 : i32
    %c0_i32_1 = arith.constant 0 : i32
    return %c0_i32, %c0_i32_0 : i32, i32
  }
  func.func @transform_18(%arg0: i32) -> (i32, i32, i32) {
    %c0_i32 = arith.constant 0 : i32
    %c0_i32_0 = arith.constant 0 : i32
    %c0_i32_1 = arith.constant 0 : i32
    return %arg0, %c0_i32, %c0_i32_0 : i32, i32, i32
  }
}

</mosaic_0001>

<llo_original>
// kernel: tpu_custom_call.1
$region0: #{tpu_custom_call.1}
  #allocation0 [shape = 'u32[]', space=smem, size = 0x4, offset = 0x4, fixed_abs, tag = 'smem constant byte address 0x4 - core index']
  #allocation1 [shape = 'u32[144,128]{1,0:T(1,128)}', space=vmem, size = 0x12000, scoped, tag = 'internal scratch']
  %s0 = inlined_call_operand.hbm [shape: f32[2,8,32], index: 0, kind: input, shape index: {}]
  %s1 = inlined_call_operand.hbm [shape: f32[2,8,32], index: 1, kind: input, shape index: {}]
  %s2 = inlined_call_operand.vmem [shape: f32[32,32], index: 2, kind: input, shape index: {}]
  %s3 = inlined_call_operand.vmem [shape: f32[32,32], index: 3, kind: input, shape index: {}]
  %s4 = inlined_call_operand.vmem [shape: f32[32,32], index: 4, kind: input, shape index: {}]
  %s5 = inlined_call_operand.vmem [shape: f32[1,32], index: 5, kind: input, shape index: {}]
  %s6 = inlined_call_operand.vmem [shape: f32[1,32], index: 6, kind: input, shape index: {}]
  %s7 = inlined_call_operand.vmem [shape: f32[1,32], index: 7, kind: input, shape index: {}]
  %s8 = inlined_call_operand.vmem [shape: f32[32,32], index: 8, kind: input, shape index: {}]
  %s9 = inlined_call_operand.vmem [shape: f32[1,32], index: 9, kind: input, shape index: {}]
  %s10 = inlined_call_operand.vmem [shape: f32[1,32], index: 10, kind: input, shape index: {}]
  %s11 = inlined_call_operand.vmem [shape: f32[1,32], index: 11, kind: input, shape index: {}]
  %s12 = inlined_call_operand.vmem [shape: f32[32,128], index: 12, kind: input, shape index: {}]
  %s13 = inlined_call_operand.vmem [shape: f32[1,128], index: 13, kind: input, shape index: {}]
  %s14 = inlined_call_operand.vmem [shape: f32[128,32], index: 14, kind: input, shape index: {}]
  %s15 = inlined_call_operand.vmem [shape: f32[1,32], index: 15, kind: input, shape index: {}]
  %s16 = inlined_call_operand.vmem [shape: f32[1,32], index: 16, kind: input, shape index: {}]
  %s17 = inlined_call_operand.vmem [shape: f32[1,32], index: 17, kind: input, shape index: {}]
  %s18 = inlined_call_operand.hbm [shape: f32[2,8,32], index: 18, kind: output, shape index: {}]
  %s19 = sld [smem:[#allocation0]]
  $region90: #{tpu_custom_call.1} parent=0
    _
  %s21 = ssub.s32 1, %s19
  %s22 = scalar_select 0, %s21, %s19
  $region1: #{tpu_custom_call.1} parent=0
    #allocation2 [shape = 'u8[8192]{0}', space=vmem, size = 0x2000, scoped, tag = 'input window, operand 0, single buffered']
    #allocation3 [shape = 's32[1]{0}', space=sflag, size = 0x4, scoped, tag = 'scoped memory for tpu_custom_call.1']
    #allocation4 [shape = 's32[1]{0}', space=sflag, size = 0x4, scoped, tag = 'scoped memory for tpu_custom_call.1']
    #allocation5 [shape = 'u8[8192]{0}', space=vmem, size = 0x2000, scoped, tag = 'input window, operand 1, single buffered']
    #allocation6 [shape = 's32[1]{0}', space=sflag, size = 0x4, scoped, tag = 'scoped memory for tpu_custom_call.1']
    #allocation7 [shape = 'u8[8192]{0}', space=vmem, size = 0x2000, scoped, tag = 'output window, operand 0, single buffered']
    %23 = vsyncpa [#allocation3], 0
    %24 = vsyncpa [#allocation6], 0
    %25 = vsyncpa [#allocation4], 0
    // Predicated region
    $region2: #{tpu_custom_call.1} parent=1 // pred_check
      _
    $region3: #{tpu_custom_call.1} parent=1 // pred_check_branch
      %27 = sbr.rel (0) target = $region5
    $region4: #{tpu_custom_call.1} parent=1 // pred_region
      %s29 = ssub.s32 256, 256
      %30 = vsyncadd [#allocation3], %s29
      %s31 = sshll.u32 [#allocation2], 4
      %s32 = int_to_ptr.vmem [resolvable:$true] %s31
      %37 = dma.hbm_to_vmem [thread:$0]  %s0, 256, %s32, [#allocation3], 128, 128, 8
    $region5: #{tpu_custom_call.1} parent=1 // pred_fallthru
      _
    // Predicated region
    $region6: #{tpu_custom_call.1} parent=1 // pred_check
      _
    $region7: #{tpu_custom_call.1} parent=1 // pred_check_branch
      %39 = sbr.rel (0) target = $region9
    $region8: #{tpu_custom_call.1} parent=1 // pred_region
      %s41 = ssub.s32 256, 256
      %42 = vsyncadd [#allocation6], %s41
      %s43 = sshll.u32 [#allocation5], 4
      %s44 = int_to_ptr.vmem [resolvable:$true] %s43
      %49 = dma.hbm_to_vmem [thread:$0]  %s1, 256, %s44, [#allocation6], 128, 128, 8
    $region9: #{tpu_custom_call.1} parent=1 // pred_fallthru
      _
    // Predicated region
    $region10: #{tpu_custom_call.1} parent=1 // pred_check
      _
    $region11: #{tpu_custom_call.1} parent=1 // pred_check_branch
      %51 = sbr.rel (0) target = $region13
    $region12: #{tpu_custom_call.1} parent=1 // pred_region
      _
    $region13: #{tpu_custom_call.1} parent=1 // pred_fallthru
      _
    // Predicated region
    $region14: #{tpu_custom_call.1} parent=1 // pred_check
      _
    $region15: #{tpu_custom_call.1} parent=1 // pred_check_branch
      %53 = sbr.rel (0) target = $region17
    $region16: #{tpu_custom_call.1} parent=1 // pred_region
      _
    $region17: #{tpu_custom_call.1} parent=1 // pred_fallthru
      _
    // Predicated region
    $region18: #{tpu_custom_call.1} parent=1 // pred_check
      _
    $region19: #{tpu_custom_call.1} parent=1 // pred_check_branch
      %55 = sbr.rel (0) target = $region21
    $region20: #{tpu_custom_call.1} parent=1 // pred_region
      _
    $region21: #{tpu_custom_call.1} parent=1 // pred_fallthru
      _
    // Predicated region
    $region22: #{tpu_custom_call.1} parent=1 // pred_check
      _
    $region23: #{tpu_custom_call.1} parent=1 // pred_check_branch
      %57 = sbr.rel (0) target = $region25
    $region24: #{tpu_custom_call.1} parent=1 // pred_region
      _
    $region25: #{tpu_custom_call.1} parent=1 // pred_fallthru
      _
    // Predicated region
    $region26: #{tpu_custom_call.1} parent=1 // pred_check
      _
    $region27: #{tpu_custom_call.1} parent=1 // pred_check_branch
      %59 = sbr.rel (0) target = $region29
    $region28: #{tpu_custom_call.1} parent=1 // pred_region
      _
    $region29: #{tpu_custom_call.1} parent=1 // pred_fallthru
      _
    // Predicated region
    $region30: #{tpu_custom_call.1} parent=1 // pred_check
      _
    $region31: #{tpu_custom_call.1} parent=1 // pred_check_branch
      %61 = sbr.rel (0) target = $region33
    $region32: #{tpu_custom_call.1} parent=1 // pred_region
      _
    $region33: #{tpu_custom_call.1} parent=1 // pred_fallthru
      _
    // Predicated region
    $region34: #{tpu_custom_call.1} parent=1 // pred_check
      _
    $region35: #{tpu_custom_call.1} parent=1 // pred_check_branch
      %63 = sbr.rel (0) target = $region37
    $region36: #{tpu_custom_call.1} parent=1 // pred_region
      _
    $region37: #{tpu_custom_call.1} parent=1 // pred_fallthru
      _
    // Predicated region
    $region38: #{tpu_custom_call.1} parent=1 // pred_check
      _
    $region39: #{tpu_custom_call.1} parent=1 // pred_check_branch
      %65 = sbr.rel (0) target = $region41
    $region40: #{tpu_custom_call.1} parent=1 // pred_region
      _
    $region41: #{tpu_custom_call.1} parent=1 // pred_fallthru
      _
    // Predicated region
    $region42: #{tpu_custom_call.1} parent=1 // pred_check
      _
    $region43: #{tpu_custom_call.1} parent=1 // pred_check_branch
      %67 = sbr.rel (0) target = $region45
    $region44: #{tpu_custom_call.1} parent=1 // pred_region
      _
    $region45: #{tpu_custom_call.1} parent=1 // pred_fallthru
      _
    // Predicated region
    $region46: #{tpu_custom_call.1} parent=1 // pred_check
      _
    $region47: #{tpu_custom_call.1} parent=1 // pred_check_branch
      %69 = sbr.rel (0) target = $region49
    $region48: #{tpu_custom_call.1} parent=1 // pred_region
      _
    $region49: #{tpu_custom_call.1} parent=1 // pred_fallthru
      _
    // Predicated region
    $region50: #{tpu_custom_call.1} parent=1 // pred_check
      _
    $region51: #{tpu_custom_call.1} parent=1 // pred_check_branch
      %71 = sbr.rel (0) target = $region53
    $region52: #{tpu_custom_call.1} parent=1 // pred_region
      _
    $region53: #{tpu_custom_call.1} parent=1 // pred_fallthru
      _
    // Predicated region
    $region54: #{tpu_custom_call.1} parent=1 // pred_check
      _
    $region55: #{tpu_custom_call.1} parent=1 // pred_check_branch
      %73 = sbr.rel (0) target = $region57
    $region56: #{tpu_custom_call.1} parent=1 // pred_region
      _
    $region57: #{tpu_custom_call.1} parent=1 // pred_fallthru
      _
    // Predicated region
    $region58: #{tpu_custom_call.1} parent=1 // pred_check
      _
    $region59: #{tpu_custom_call.1} parent=1 // pred_check_branch
      %75 = sbr.rel (0) target = $region61
    $region60: #{tpu_custom_call.1} parent=1 // pred_region
      _
    $region61: #{tpu_custom_call.1} parent=1 // pred_fallthru
      _
    // Predicated region
    $region62: #{tpu_custom_call.1} parent=1 // pred_check
      _
    $region63: #{tpu_custom_call.1} parent=1 // pred_check_branch
      %77 = sbr.rel (0) target = $region65
    $region64: #{tpu_custom_call.1} parent=1 // pred_region
      _
    $region65: #{tpu_custom_call.1} parent=1 // pred_fallthru
      _
    // Predicated region
    $region66: #{tpu_custom_call.1} parent=1 // pred_check
      _
    $region67: #{tpu_custom_call.1} parent=1 // pred_check_branch
      %79 = sbr.rel (0) target = $region69
    $region68: #{tpu_custom_call.1} parent=1 // pred_region
      _
    $region69: #{tpu_custom_call.1} parent=1 // pred_fallthru
      _
    // Predicated region
    $region70: #{tpu_custom_call.1} parent=1 // pred_check
      _
    $region71: #{tpu_custom_call.1} parent=1 // pred_check_branch
      %81 = sbr.rel (0) target = $region73
    $region72: #{tpu_custom_call.1} parent=1 // pred_region
      _
    $region73: #{tpu_custom_call.1} parent=1 // pred_fallthru
      _
    // Predicated region
    $region74: #{tpu_custom_call.1} parent=1 // pred_check
      _
    $region75: #{tpu_custom_call.1} parent=1 // pred_check_branch
      %83 = sbr.rel (0) target = $region77
    $region76: #{tpu_custom_call.1} parent=1 // pred_region
      %84 = dma.done [#allocation3], 256
    $region77: #{tpu_custom_call.1} parent=1 // pred_fallthru
      _
    // Predicated region
    $region78: #{tpu_custom_call.1} parent=1 // pred_check
      _
    $region79: #{tpu_custom_call.1} parent=1 // pred_check_branch
      %86 = sbr.rel (0) target = $region81
    $region80: #{tpu_custom_call.1} parent=1 // pred_region
      %87 = dma.done [#allocation6], 256
    $region81: #{tpu_custom_call.1} parent=1 // pred_fallthru
      _
    %v88 = vld [vmem:[#allocation2] sm:$0xff]
    %v89 = vld [vmem:[#allocation2 + $0x8] sm:$0xff]
    %v90 = vld [vmem:[#allocation5] sm:$0xff]
    %v91 = vld [vmem:[#allocation5 + $0x8] sm:$0xff]
    %v92 = vadd.f32 %v88, %v90
    %v93 = vadd.f32 %v89, %v91
    %v94 = vld [vmem:[%s2] sm:$0xff]
    %v95 = vld [vmem:[%s2 + $0x8] sm:$0xff]
    %v96 = vld [vmem:[%s2 + $0x10] sm:$0xff]
    %v97 = vld [vmem:[%s2 + $0x18] sm:$0xff]
    %v98 = vld [vmem:[%s5] sm:$0x1]
    %v100 = vlaneseq
    %v101 = vshrl.u32 %v100, 7
    %v102 = vsub.s32 0, %v101
    %v103 = vrot.slane %v98, %v102
    %vm105 = vcmask 261120
    %v107 = vsel %vm105, %v92, 0
    %v110 = vsel %vm105, %v93, 0
    %112 = vmatprep.subr.mxu0 0.0
    %113 = vmatpush1.msra.mxu0 0.0
    %114 = vmatprep.subr.mxu0 0.0
    %115 = vmatpush1.msra.mxu0 0.0
    %116 = vmatprep.subr.mxu0 0.0
    %117 = vmatpush1.msra.mxu0 0.0
    %118 = vmatprep.subr.mxu0 0.0
    %119 = vmatpush1.msra.mxu0 0.0
    %120 = vmatprep.subr.mxu0 0.0
    %121 = vmatpush1.msra.mxu0 0.0
    %122 = vmatprep.subr.mxu0 0.0
    %123 = vmatpush1.msra.mxu0 0.0
    %124 = vmatprep.subr.mxu0 0.0
    %125 = vmatpush1.msra.mxu0 0.0
    %126 = vmatprep.subr.mxu0 0.0
    %127 = vmatpush1.msra.mxu0 0.0
    %128 = vmatprep.subr.mxu0 0.0
    %129 = vmatpush1.msra.mxu0 0.0
    %130 = vmatprep.subr.mxu0 0.0
    %131 = vmatpush1.msra.mxu0 0.0
    %132 = vmatprep.subr.mxu0 0.0
    %133 = vmatpush1.msra.mxu0 0.0
    %134 = vmatprep.subr.mxu0 0.0
    %135 = vmatpush1.msra.mxu0 0.0
    %136 = vmatprep.subr.mxu0 0.0
    %137 = vmatpush1.msra.mxu0 %v97
    %138 = vmatprep.subr.mxu0 0.0
    %139 = vmatpush1.msra.mxu0 %v96
    %140 = vmatprep.subr.mxu0 0.0
    %141 = vmatpush1.msra.mxu0 %v95
    %142 = vmatprep.subr.mxu0 0.0
    %143 = vmatpush1.msra.mxu0 %v94
    %144 = vmatprep.subr.mxu0 0.0
    %145 = vmatpush2.msra.mxu0 0.0
    %146 = vmatprep.subr.mxu0 0.0
    %147 = vmatpush2.msra.mxu0 0.0
    %148 = vmatprep.subr.mxu0 0.0
    %149 = vmatpush2.msra.mxu0 0.0
    %150 = vmatprep.subr.mxu0 0.0
    %151 = vmatpush2.msra.mxu0 0.0
    %152 = vmatprep.subr.mxu0 0.0
    %153 = vmatpush2.msra.mxu0 0.0
    %154 = vmatprep.subr.mxu0 0.0
    %155 = vmatpush2.msra.mxu0 0.0
    %156 = vmatprep.subr.mxu0 0.0
    %157 = vmatpush2.msra.mxu0 0.0
    %158 = vmatprep.subr.mxu0 0.0
    %159 = vmatpush2.msra.mxu0 0.0
    %160 = vmatprep.subr.mxu0 0.0
    %161 = vmatpush2.msra.mxu0 0.0
    %162 = vmatprep.subr.mxu0 0.0
    %163 = vmatpush2.msra.mxu0 0.0
    %164 = vmatprep.subr.mxu0 0.0
    %165 = vmatpush2.msra.mxu0 0.0
    %166 = vmatprep.subr.mxu0 0.0
    %167 = vmatpush2.msra.mxu0 0.0
    %168 = vmatprep.subr.mxu0 0.0
    %169 = vmatpush2.msra.mxu0 0.0
    %170 = vmatprep.subr.mxu0 0.0
    %171 = vmatpush2.msra.mxu0 0.0
    %172 = vmatprep.subr.mxu0 0.0
    %173 = vmatpush2.msra.mxu0 0.0
    %174 = vmatprep.subr.mxu0 0.0
    %175 = vmatpush2.msra.mxu0 0.0
    %176 = vmatprep.mubr.f32.mxu0 0.0
    %177 = vmatmul.mubr.f32.gmra.mxu0 %v107
    %v178 = vpop.f32.mrf.mxu0
    %v179 = vadd.f32 %v103, %v178
    %v180 = vpop.f32.mrf.mxu0
    %181 = vmatprep.mubr.f32.mxu0 0.0
    %182 = vmatmul.mubr.f32.gmra.mxu0 %v110
    %v183 = vpop.f32.mrf.mxu0
    %v184 = vadd.f32 %v103, %v183
    %v185 = vpop.f32.mrf.mxu0
    %186 = vdwg.mxu0
    %v187 = vld [vmem:[%s3] sm:$0xff]
    %v188 = vld [vmem:[%s3 + $0x8] sm:$0xff]
    %v189 = vld [vmem:[%s3 + $0x10] sm:$0xff]
    %v190 = vld [vmem:[%s3 + $0x18] sm:$0xff]
    %v191 = vld [vmem:[%s6] sm:$0x1]
    %v193 = vlaneseq
    %v194 = vshrl.u32 %v193, 7
    %v195 = vsub.s32 0, %v194
    %v196 = vrot.slane %v191, %v195
    %198 = vmatprep.subr.mxu0 0.0
    %199 = vmatpush1.msra.mxu0 0.0
    %200 = vmatprep.subr.mxu0 0.0
    %201 = vmatpush1.msra.mxu0 0.0
    %202 = vmatprep.subr.mxu0 0.0
    %203 = vmatpush1.msra.mxu0 0.0
    %204 = vmatprep.subr.mxu0 0.0
    %205 = vmatpush1.msra.mxu0 0.0
    %206 = vmatprep.subr.mxu0 0.0
    %207 = vmatpush1.msra.mxu0 0.0
    %208 = vmatprep.subr.mxu0 0.0
    %209 = vmatpush1.msra.mxu0 0.0
    %210 = vmatprep.subr.mxu0 0.0
    %211 = vmatpush1.msra.mxu0 0.0
    %212 = vmatprep.subr.mxu0 0.0
    %213 = vmatpush1.msra.mxu0 0.0
    %214 = vmatprep.subr.mxu0 0.0
    %215 = vmatpush1.msra.mxu0 0.0
    %216 = vmatprep.subr.mxu0 0.0
    %217 = vmatpush1.msra.mxu0 0.0
    %218 = vmatprep.subr.mxu0 0.0
    %219 = vmatpush1.msra.mxu0 0.0
    %220 = vmatprep.subr.mxu0 0.0
    %221 = vmatpush1.msra.mxu0 0.0
    %222 = vmatprep.subr.mxu0 0.0
    %223 = vmatpush1.msra.mxu0 %v190
    %224 = vmatprep.subr.mxu0 0.0
    %225 = vmatpush1.msra.mxu0 %v189
    %226 = vmatprep.subr.mxu0 0.0
    %227 = vmatpush1.msra.mxu0 %v188
    %228 = vmatprep.subr.mxu0 0.0
    %229 = vmatpush1.msra.mxu0 %v187
    %230 = vmatprep.subr.mxu0 0.0
    %231 = vmatpush2.msra.mxu0 0.0
    %232 = vmatprep.subr.mxu0 0.0
    %233 = vmatpush2.msra.mxu0 0.0
    %234 = vmatprep.subr.mxu0 0.0
    %235 = vmatpush2.msra.mxu0 0.0
    %236 = vmatprep.subr.mxu0 0.0
    %237 = vmatpush2.msra.mxu0 0.0
    %238 = vmatprep.subr.mxu0 0.0
    %239 = vmatpush2.msra.mxu0 0.0
    %240 = vmatprep.subr.mxu0 0.0
    %241 = vmatpush2.msra.mxu0 0.0
    %242 = vmatprep.subr.mxu0 0.0
    %243 = vmatpush2.msra.mxu0 0.0
    %244 = vmatprep.subr.mxu0 0.0
    %245 = vmatpush2.msra.mxu0 0.0
    %246 = vmatprep.subr.mxu0 0.0
    %247 = vmatpush2.msra.mxu0 0.0
    %248 = vmatprep.subr.mxu0 0.0
    %249 = vmatpush2.msra.mxu0 0.0
    %250 = vmatprep.subr.mxu0 0.0
    %251 = vmatpush2.msra.mxu0 0.0
    %252 = vmatprep.subr.mxu0 0.0
    %253 = vmatpush2.msra.mxu0 0.0
    %254 = vmatprep.subr.mxu0 0.0
    %255 = vmatpush2.msra.mxu0 0.0
    %256 = vmatprep.subr.mxu0 0.0
    %257 = vmatpush2.msra.mxu0 0.0
    %258 = vmatprep.subr.mxu0 0.0
    %259 = vmatpush2.msra.mxu0 0.0
    %260 = vmatprep.subr.mxu0 0.0
    %261 = vmatpush2.msra.mxu0 0.0
    %262 = vmatprep.mubr.f32.mxu0 0.0
    %263 = vmatmul.mubr.f32.gmra.mxu0 %v107
    %v264 = vpop.f32.mrf.mxu0
    %v265 = vadd.f32 %v196, %v264
    %v266 = vpop.f32.mrf.mxu0
    %267 = vmatprep.mubr.f32.mxu0 0.0
    %268 = vmatmul.mubr.f32.gmra.mxu0 %v110
    %v269 = vpop.f32.mrf.mxu0
    %v270 = vadd.f32 %v196, %v269
    %v271 = vpop.f32.mrf.mxu0
    %272 = vdwg.mxu0
    %v273 = vld [vmem:[%s4] sm:$0xff]
    %v274 = vld [vmem:[%s4 + $0x8] sm:$0xff]
    %v275 = vld [vmem:[%s4 + $0x10] sm:$0xff]
    %v276 = vld [vmem:[%s4 + $0x18] sm:$0xff]
    %v277 = vld [vmem:[%s7] sm:$0x1]
    %v279 = vlaneseq
    %v280 = vshrl.u32 %v279, 7
    %v281 = vsub.s32 0, %v280
    %v282 = vrot.slane %v277, %v281
    %v285 = vsel %vm105, %v88, 0
    %v288 = vsel %vm105, %v89, 0
    %290 = vmatprep.subr.mxu0 0.0
    %291 = vmatpush1.msra.mxu0 0.0
    %292 = vmatprep.subr.mxu0 0.0
    %293 = vmatpush1.msra.mxu0 0.0
    %294 = vmatprep.subr.mxu0 0.0
    %295 = vmatpush1.msra.mxu0 0.0
    %296 = vmatprep.subr.mxu0 0.0
    %297 = vmatpush1.msra.mxu0 0.0
    %298 = vmatprep.subr.mxu0 0.0
    %299 = vmatpush1.msra.mxu0 0.0
    %300 = vmatprep.subr.mxu0 0.0
    %301 = vmatpush1.msra.mxu0 0.0
    %302 = vmatprep.subr.mxu0 0.0
    %303 = vmatpush1.msra.mxu0 0.0
    %304 = vmatprep.subr.mxu0 0.0
    %305 = vmatpush1.msra.mxu0 0.0
    %306 = vmatprep.subr.mxu0 0.0
    %307 = vmatpush1.msra.mxu0 0.0
    %308 = vmatprep.subr.mxu0 0.0
    %309 = vmatpush1.msra.mxu0 0.0
    %310 = vmatprep.subr.mxu0 0.0
    %311 = vmatpush1.msra.mxu0 0.0
    %312 = vmatprep.subr.mxu0 0.0
    %313 = vmatpush1.msra.mxu0 0.0
    %314 = vmatprep.subr.mxu0 0.0
    %315 = vmatpush1.msra.mxu0 %v276
    %316 = vmatprep.subr.mxu0 0.0
    %317 = vmatpush1.msra.mxu0 %v275
    %318 = vmatprep.subr.mxu0 0.0
    %319 = vmatpush1.msra.mxu0 %v274
    %320 = vmatprep.subr.mxu0 0.0
    %321 = vmatpush1.msra.mxu0 %v273
    %322 = vmatprep.subr.mxu0 0.0
    %323 = vmatpush2.msra.mxu0 0.0
    %324 = vmatprep.subr.mxu0 0.0
    %325 = vmatpush2.msra.mxu0 0.0
    %326 = vmatprep.subr.mxu0 0.0
    %327 = vmatpush2.msra.mxu0 0.0
    %328 = vmatprep.subr.mxu0 0.0
    %329 = vmatpush2.msra.mxu0 0.0
    %330 = vmatprep.subr.mxu0 0.0
    %331 = vmatpush2.msra.mxu0 0.0
    %332 = vmatprep.subr.mxu0 0.0
    %333 = vmatpush2.msra.mxu0 0.0
    %334 = vmatprep.subr.mxu0 0.0
    %335 = vmatpush2.msra.mxu0 0.0
    %336 = vmatprep.subr.mxu0 0.0
    %337 = vmatpush2.msra.mxu0 0.0
    %338 = vmatprep.subr.mxu0 0.0
    %339 = vmatpush2.msra.mxu0 0.0
    %340 = vmatprep.subr.mxu0 0.0
    %341 = vmatpush2.msra.mxu0 0.0
    %342 = vmatprep.subr.mxu0 0.0
    %343 = vmatpush2.msra.mxu0 0.0
    %344 = vmatprep.subr.mxu0 0.0
    %345 = vmatpush2.msra.mxu0 0.0
    %346 = vmatprep.subr.mxu0 0.0
    %347 = vmatpush2.msra.mxu0 0.0
    %348 = vmatprep.subr.mxu0 0.0
    %349 = vmatpush2.msra.mxu0 0.0
    %350 = vmatprep.subr.mxu0 0.0
    %351 = vmatpush2.msra.mxu0 0.0
    %352 = vmatprep.subr.mxu0 0.0
    %353 = vmatpush2.msra.mxu0 0.0
    %354 = vmatprep.mubr.f32.mxu0 0.0
    %355 = vmatmul.mubr.f32.gmra.mxu0 %v285
    %v356 = vpop.f32.mrf.mxu0
    %v357 = vadd.f32 %v282, %v356
    %v358 = vpop.f32.mrf.mxu0
    %359 = vmatprep.mubr.f32.mxu0 0.0
    %360 = vmatmul.mubr.f32.gmra.mxu0 %v288
    %v361 = vpop.f32.mrf.mxu0
    %v362 = vadd.f32 %v282, %v361
    %v363 = vpop.f32.mrf.mxu0
    %364 = vdwg.mxu0
    %v365 = vmul.f32 %v179, 0.35355338
    %v366 = vmul.f32 %v184, 0.35355338
    %vm367 = vcmask 64512
    %v369 = vsel %vm367, %v365, 0
    %v372 = vsel %vm367, %v265, 0
    %374 = vmatprep.subr.mxu0 0.0
    %375 = vmatpush1.xpose.msra.mxu0 0.0
    %376 = vmatprep.subr.mxu0 0.0
    %377 = vmatpush1.xpose.msra.mxu0 0.0
    %378 = vmatprep.subr.mxu0 0.0
    %379 = vmatpush1.xpose.msra.mxu0 0.0
    %380 = vmatprep.subr.mxu0 0.0
    %381 = vmatpush1.xpose.msra.mxu0 0.0
    %382 = vmatprep.subr.mxu0 0.0
    %383 = vmatpush1.xpose.msra.mxu0 0.0
    %384 = vmatprep.subr.mxu0 0.0
    %385 = vmatpush1.xpose.msra.mxu0 0.0
    %386 = vmatprep.subr.mxu0 0.0
    %387 = vmatpush1.xpose.msra.mxu0 0.0
    %388 = vmatprep.subr.mxu0 0.0
    %389 = vmatpush1.xpose.msra.mxu0 0.0
    %390 = vmatprep.subr.mxu0 0.0
    %391 = vmatpush1.xpose.msra.mxu0 0.0
    %392 = vmatprep.subr.mxu0 0.0
    %393 = vmatpush1.xpose.msra.mxu0 0.0
    %394 = vmatprep.subr.mxu0 0.0
    %395 = vmatpush1.xpose.msra.mxu0 0.0
    %396 = vmatprep.subr.mxu0 0.0
    %397 = vmatpush1.xpose.msra.mxu0 0.0
    %398 = vmatprep.subr.mxu0 0.0
    %399 = vmatpush1.xpose.msra.mxu0 0.0
    %400 = vmatprep.subr.mxu0 0.0
    %401 = vmatpush1.xpose.msra.mxu0 0.0
    %402 = vmatprep.subr.mxu0 0.0
    %403 = vmatpush1.xpose.msra.mxu0 0.0
    %404 = vmatprep.subr.mxu0 0.0
    %405 = vmatpush1.xpose.msra.mxu0 %v372
    %406 = vmatprep.subr.mxu0 0.0
    %407 = vmatpush2.xpose.msra.mxu0 0.0
    %408 = vmatprep.subr.mxu0 0.0
    %409 = vmatpush2.xpose.msra.mxu0 0.0
    %410 = vmatprep.subr.mxu0 0.0
    %411 = vmatpush2.xpose.msra.mxu0 0.0
    %412 = vmatprep.subr.mxu0 0.0
    %413 = vmatpush2.xpose.msra.mxu0 0.0
    %414 = vmatprep.subr.mxu0 0.0
    %415 = vmatpush2.xpose.msra.mxu0 0.0
    %416 = vmatprep.subr.mxu0 0.0
    %417 = vmatpush2.xpose.msra.mxu0 0.0
    %418 = vmatprep.subr.mxu0 0.0
    %419 = vmatpush2.xpose.msra.mxu0 0.0
    %420 = vmatprep.subr.mxu0 0.0
    %421 = vmatpush2.xpose.msra.mxu0 0.0
    %422 = vmatprep.subr.mxu0 0.0
    %423 = vmatpush2.xpose.msra.mxu0 0.0
    %424 = vmatprep.subr.mxu0 0.0
    %425 = vmatpush2.xpose.msra.mxu0 0.0
    %426 = vmatprep.subr.mxu0 0.0
    %427 = vmatpush2.xpose.msra.mxu0 0.0
    %428 = vmatprep.subr.mxu0 0.0
    %429 = vmatpush2.xpose.msra.mxu0 0.0
    %430 = vmatprep.subr.mxu0 0.0
    %431 = vmatpush2.xpose.msra.mxu0 0.0
    %432 = vmatprep.subr.mxu0 0.0
    %433 = vmatpush2.xpose.msra.mxu0 0.0
    %434 = vmatprep.subr.mxu0 0.0
    %435 = vmatpush2.xpose.msra.mxu0 0.0
    %436 = vmatprep.subr.mxu0 0.0
    %437 = vmatpush2.xpose.msra.mxu0 0.0
    %438 = vmatprep.mubr.f32.mxu0 0.0
    %439 = vmatmul.mubr.f32.gmra.mxu0 %v369
    %v440 = vpop.f32.mrf.mxu0
    %v441 = vadd.f32 0.0, %v440
    %v442 = vpop.f32.mrf.mxu0
    %443 = vdwg.mxu0
    %v444 = vsel %vm367, %v441, -inf
    %445 = vmax.xlane.f32.xlu0 %v444
    %v446 = vpop.xlane.xlu0 %445
    %v447 = vsub.f32 %v441, %v446
    %v448 = vmul.f32 %v447, 1.442695
    %v449 = vpow.pop %v448
    %v450 = vsel %vm367, %v449, 0.0
    %451 = vadd.xlane.f32.xlu0 %v450
    %v452 = vpop.xlane.xlu0 %451
    %v453 = vrcp.pop %v452
    %v454 = vmul.f32 %v449, %v453
    %v455 = vld [vmem:[%s8] sm:$0xff]
    %v457 = vsel %vm367, %v357, 0
    %459 = vmatprep.subr.mxu0 0.0
    %460 = vmatpush1.msra.mxu0 0.0
    %461 = vmatprep.subr.mxu0 0.0
    %462 = vmatpush1.msra.mxu0 0.0
    %463 = vmatprep.subr.mxu0 0.0
    %464 = vmatpush1.msra.mxu0 0.0
    %465 = vmatprep.subr.mxu0 0.0
    %466 = vmatpush1.msra.mxu0 0.0
    %467 = vmatprep.subr.mxu0 0.0
    %468 = vmatpush1.msra.mxu0 0.0
    %469 = vmatprep.subr.mxu0 0.0
    %470 = vmatpush1.msra.mxu0 0.0
    %471 = vmatprep.subr.mxu0 0.0
    %472 = vmatpush1.msra.mxu0 0.0
    %473 = vmatprep.subr.mxu0 0.0
    %474 = vmatpush1.msra.mxu0 0.0
    %475 = vmatprep.subr.mxu0 0.0
    %476 = vmatpush1.msra.mxu0 0.0
    %477 = vmatprep.subr.mxu0 0.0
    %478 = vmatpush1.msra.mxu0 0.0
    %479 = vmatprep.subr.mxu0 0.0
    %480 = vmatpush1.msra.mxu0 0.0
    %481 = vmatprep.subr.mxu0 0.0
    %482 = vmatpush1.msra.mxu0 0.0
    %483 = vmatprep.subr.mxu0 0.0
    %484 = vmatpush1.msra.mxu0 0.0
    %485 = vmatprep.subr.mxu0 0.0
    %486 = vmatpush1.msra.mxu0 0.0
    %487 = vmatprep.subr.mxu0 0.0
    %488 = vmatpush1.msra.mxu0 0.0
    %489 = vmatprep.subr.mxu0 0.0
    %490 = vmatpush1.msra.mxu0 %v455
    %491 = vmatprep.subr.mxu0 0.0
    %492 = vmatpush2.msra.mxu0 0.0
    %493 = vmatprep.subr.mxu0 0.0
    %494 = vmatpush2.msra.mxu0 0.0
    %495 = vmatprep.subr.mxu0 0.0
    %496 = vmatpush2.msra.mxu0 0.0
    %497 = vmatprep.subr.mxu0 0.0
    %498 = vmatpush2.msra.mxu0 0.0
    %499 = vmatprep.subr.mxu0 0.0
    %500 = vmatpush2.msra.mxu0 0.0
    %501 = vmatprep.subr.mxu0 0.0
    %502 = vmatpush2.msra.mxu0 0.0
    %503 = vmatprep.subr.mxu0 0.0
    %504 = vmatpush2.msra.mxu0 0.0
    %505 = vmatprep.subr.mxu0 0.0
    %506 = vmatpush2.msra.mxu0 0.0
    %507 = vmatprep.subr.mxu0 0.0
    %508 = vmatpush2.msra.mxu0 0.0
    %509 = vmatprep.subr.mxu0 0.0
    %510 = vmatpush2.msra.mxu0 0.0
    %511 = vmatprep.subr.mxu0 0.0
    %512 = vmatpush2.msra.mxu0 0.0
    %513 = vmatprep.subr.mxu0 0.0
    %514 = vmatpush2.msra.mxu0 0.0
    %515 = vmatprep.subr.mxu0 0.0
    %516 = vmatpush2.msra.mxu0 0.0
    %517 = vmatprep.subr.mxu0 0.0
    %518 = vmatpush2.msra.mxu0 0.0
    %519 = vmatprep.subr.mxu0 0.0
    %520 = vmatpush2.msra.mxu0 0.0
    %521 = vmatprep.subr.mxu0 0.0
    %522 = vmatpush2.msra.mxu0 0.0
    %523 = vmatprep.mubr.f32.mxu0 0.0
    %524 = vmatmul.mubr.f32.gmra.mxu0 %v457
    %v525 = vpop.f32.mrf.mxu0
    %v526 = vadd.f32 0.0, %v525
    %v527 = vpop.f32.mrf.mxu0
    %528 = vdwg.mxu0
    %529 = vrot.lane.b32.xlu0 %v365, 120
    %v530 = vpop.permute.xlu0 %529
    %531 = vrot.lane.b32.xlu0 %v265, 120
    %v532 = vpop.permute.xlu0 %531
    %v533 = vsel %vm367, %v530, 0
    %v535 = vsel %vm367, %v532, 0
    %537 = vmatprep.subr.mxu0 0.0
    %538 = vmatpush1.xpose.msra.mxu0 0.0
    %539 = vmatprep.subr.mxu0 0.0
    %540 = vmatpush1.xpose.msra.mxu0 0.0
    %541 = vmatprep.subr.mxu0 0.0
    %542 = vmatpush1.xpose.msra.mxu0 0.0
    %543 = vmatprep.subr.mxu0 0.0
    %544 = vmatpush1.xpose.msra.mxu0 0.0
    %545 = vmatprep.subr.mxu0 0.0
    %546 = vmatpush1.xpose.msra.mxu0 0.0
    %547 = vmatprep.subr.mxu0 0.0
    %548 = vmatpush1.xpose.msra.mxu0 0.0
    %549 = vmatprep.subr.mxu0 0.0
    %550 = vmatpush1.xpose.msra.mxu0 0.0
    %551 = vmatprep.subr.mxu0 0.0
    %552 = vmatpush1.xpose.msra.mxu0 0.0
    %553 = vmatprep.subr.mxu0 0.0
    %554 = vmatpush1.xpose.msra.mxu0 0.0
    %555 = vmatprep.subr.mxu0 0.0
    %556 = vmatpush1.xpose.msra.mxu0 0.0
    %557 = vmatprep.subr.mxu0 0.0
    %558 = vmatpush1.xpose.msra.mxu0 0.0
    %559 = vmatprep.subr.mxu0 0.0
    %560 = vmatpush1.xpose.msra.mxu0 0.0
    %561 = vmatprep.subr.mxu0 0.0
    %562 = vmatpush1.xpose.msra.mxu0 0.0
    %563 = vmatprep.subr.mxu0 0.0
    %564 = vmatpush1.xpose.msra.mxu0 0.0
    %565 = vmatprep.subr.mxu0 0.0
    %566 = vmatpush1.xpose.msra.mxu0 0.0
    %567 = vmatprep.subr.mxu0 0.0
    %568 = vmatpush1.xpose.msra.mxu0 %v535
    %569 = vmatprep.subr.mxu0 0.0
    %570 = vmatpush2.xpose.msra.mxu0 0.0
    %571 = vmatprep.subr.mxu0 0.0
    %572 = vmatpush2.xpose.msra.mxu0 0.0
    %573 = vmatprep.subr.mxu0 0.0
    %574 = vmatpush2.xpose.msra.mxu0 0.0
    %575 = vmatprep.subr.mxu0 0.0
    %576 = vmatpush2.xpose.msra.mxu0 0.0
    %577 = vmatprep.subr.mxu0 0.0
    %578 = vmatpush2.xpose.msra.mxu0 0.0
    %579 = vmatprep.subr.mxu0 0.0
    %580 = vmatpush2.xpose.msra.mxu0 0.0
    %581 = vmatprep.subr.mxu0 0.0
    %582 = vmatpush2.xpose.msra.mxu0 0.0
    %583 = vmatprep.subr.mxu0 0.0
    %584 = vmatpush2.xpose.msra.mxu0 0.0
    %585 = vmatprep.subr.mxu0 0.0
    %586 = vmatpush2.xpose.msra.mxu0 0.0
    %587 = vmatprep.subr.mxu0 0.0
    %588 = vmatpush2.xpose.msra.mxu0 0.0
    %589 = vmatprep.subr.mxu0 0.0
    %590 = vmatpush2.xpose.msra.mxu0 0.0
    %591 = vmatprep.subr.mxu0 0.0
    %592 = vmatpush2.xpose.msra.mxu0 0.0
    %593 = vmatprep.subr.mxu0 0.0
    %594 = vmatpush2.xpose.msra.mxu0 0.0
    %595 = vmatprep.subr.mxu0 0.0
    %596 = vmatpush2.xpose.msra.mxu0 0.0
    %597 = vmatprep.subr.mxu0 0.0
    %598 = vmatpush2.xpose.msra.mxu0 0.0
    %599 = vmatprep.subr.mxu0 0.0
    %600 = vmatpush2.xpose.msra.mxu0 0.0
    %601 = vmatprep.mubr.f32.mxu0 0.0
    %602 = vmatmul.mubr.f32.gmra.mxu0 %v533
    %v603 = vpop.f32.mrf.mxu0
    %v604 = vadd.f32 0.0, %v603
    %v605 = vpop.f32.mrf.mxu0
    %606 = vdwg.mxu0
    %v607 = vsel %vm367, %v604, -inf
    %608 = vmax.xlane.f32.xlu0 %v607
    %v609 = vpop.xlane.xlu0 %608
    %v610 = vsub.f32 %v604, %v609
    %v611 = vmul.f32 %v610, 1.442695
    %v612 = vpow.pop %v611
    %v613 = vsel %vm367, %v612, 0.0
    %614 = vadd.xlane.f32.xlu0 %v613
    %v615 = vpop.xlane.xlu0 %614
    %v616 = vrcp.pop %v615
    %v617 = vmul.f32 %v612, %v616
    %v618 = vld [vmem:[%s8 + $0x8] sm:$0xff]
    %619 = vrot.lane.b32.xlu0 %v357, 120
    %v620 = vpop.permute.xlu0 %619
    %v621 = vsel %vm367, %v620, 0
    %623 = vmatprep.subr.mxu0 0.0
    %624 = vmatpush1.msra.mxu0 0.0
    %625 = vmatprep.subr.mxu0 0.0
    %626 = vmatpush1.msra.mxu0 0.0
    %627 = vmatprep.subr.mxu0 0.0
    %628 = vmatpush1.msra.mxu0 0.0
    %629 = vmatprep.subr.mxu0 0.0
    %630 = vmatpush1.msra.mxu0 0.0
    %631 = vmatprep.subr.mxu0 0.0
    %632 = vmatpush1.msra.mxu0 0.0
    %633 = vmatprep.subr.mxu0 0.0
    %634 = vmatpush1.msra.mxu0 0.0
    %635 = vmatprep.subr.mxu0 0.0
    %636 = vmatpush1.msra.mxu0 0.0
    %637 = vmatprep.subr.mxu0 0.0
    %638 = vmatpush1.msra.mxu0 0.0
    %639 = vmatprep.subr.mxu0 0.0
    %640 = vmatpush1.msra.mxu0 0.0
    %641 = vmatprep.subr.mxu0 0.0
    %642 = vmatpush1.msra.mxu0 0.0
    %643 = vmatprep.subr.mxu0 0.0
    %644 = vmatpush1.msra.mxu0 0.0
    %645 = vmatprep.subr.mxu0 0.0
    %646 = vmatpush1.msra.mxu0 0.0
    %647 = vmatprep.subr.mxu0 0.0
    %648 = vmatpush1.msra.mxu0 0.0
    %649 = vmatprep.subr.mxu0 0.0
    %650 = vmatpush1.msra.mxu0 0.0
    %651 = vmatprep.subr.mxu0 0.0
    %652 = vmatpush1.msra.mxu0 0.0
    %653 = vmatprep.subr.mxu0 0.0
    %654 = vmatpush1.msra.mxu0 %v618
    %655 = vmatprep.subr.mxu0 0.0
    %656 = vmatpush2.msra.mxu0 0.0
    %657 = vmatprep.subr.mxu0 0.0
    %658 = vmatpush2.msra.mxu0 0.0
    %659 = vmatprep.subr.mxu0 0.0
    %660 = vmatpush2.msra.mxu0 0.0
    %661 = vmatprep.subr.mxu0 0.0
    %662 = vmatpush2.msra.mxu0 0.0
    %663 = vmatprep.subr.mxu0 0.0
    %664 = vmatpush2.msra.mxu0 0.0
    %665 = vmatprep.subr.mxu0 0.0
    %666 = vmatpush2.msra.mxu0 0.0
    %667 = vmatprep.subr.mxu0 0.0
    %668 = vmatpush2.msra.mxu0 0.0
    %669 = vmatprep.subr.mxu0 0.0
    %670 = vmatpush2.msra.mxu0 0.0
    %671 = vmatprep.subr.mxu0 0.0
    %672 = vmatpush2.msra.mxu0 0.0
    %673 = vmatprep.subr.mxu0 0.0
    %674 = vmatpush2.msra.mxu0 0.0
    %675 = vmatprep.subr.mxu0 0.0
    %676 = vmatpush2.msra.mxu0 0.0
    %677 = vmatprep.subr.mxu0 0.0
    %678 = vmatpush2.msra.mxu0 0.0
    %679 = vmatprep.subr.mxu0 0.0
    %680 = vmatpush2.msra.mxu0 0.0
    %681 = vmatprep.subr.mxu0 0.0
    %682 = vmatpush2.msra.mxu0 0.0
    %683 = vmatprep.subr.mxu0 0.0
    %684 = vmatpush2.msra.mxu0 0.0
    %685 = vmatprep.subr.mxu0 0.0
    %686 = vmatpush2.msra.mxu0 0.0
    %687 = vmatprep.mubr.f32.mxu0 0.0
    %688 = vmatmul.mubr.f32.gmra.mxu0 %v621
    %v689 = vpop.f32.mrf.mxu0
    %v690 = vadd.f32 0.0, %v689
    %v691 = vpop.f32.mrf.mxu0
    %692 = vdwg.mxu0
    %v694 = vsel %vm367, %v617, 0
    %696 = vmatprep.subr.mxu0 0.0
    %697 = vmatpush1.msra.mxu0 0.0
    %698 = vmatprep.subr.mxu0 0.0
    %699 = vmatpush1.msra.mxu0 0.0
    %700 = vmatprep.subr.mxu0 0.0
    %701 = vmatpush1.msra.mxu0 0.0
    %702 = vmatprep.subr.mxu0 0.0
    %703 = vmatpush1.msra.mxu0 0.0
    %704 = vmatprep.subr.mxu0 0.0
    %705 = vmatpush1.msra.mxu0 0.0
    %706 = vmatprep.subr.mxu0 0.0
    %707 = vmatpush1.msra.mxu0 0.0
    %708 = vmatprep.subr.mxu0 0.0
    %709 = vmatpush1.msra.mxu0 0.0
    %710 = vmatprep.subr.mxu0 0.0
    %711 = vmatpush1.msra.mxu0 0.0
    %712 = vmatprep.subr.mxu0 0.0
    %713 = vmatpush1.msra.mxu0 0.0
    %714 = vmatprep.subr.mxu0 0.0
    %715 = vmatpush1.msra.mxu0 0.0
    %716 = vmatprep.subr.mxu0 0.0
    %717 = vmatpush1.msra.mxu0 0.0
    %718 = vmatprep.subr.mxu0 0.0
    %719 = vmatpush1.msra.mxu0 0.0
    %720 = vmatprep.subr.mxu0 0.0
    %721 = vmatpush1.msra.mxu0 0.0
    %722 = vmatprep.subr.mxu0 0.0
    %723 = vmatpush1.msra.mxu0 0.0
    %724 = vmatprep.subr.mxu0 0.0
    %725 = vmatpush1.msra.mxu0 0.0
    %726 = vmatprep.subr.mxu0 0.0
    %727 = vmatpush1.msra.mxu0 %v690
    %728 = vmatprep.subr.mxu0 0.0
    %729 = vmatpush2.msra.mxu0 0.0
    %730 = vmatprep.subr.mxu0 0.0
    %731 = vmatpush2.msra.mxu0 0.0
    %732 = vmatprep.subr.mxu0 0.0
    %733 = vmatpush2.msra.mxu0 0.0
    %734 = vmatprep.subr.mxu0 0.0
    %735 = vmatpush2.msra.mxu0 0.0
    %736 = vmatprep.subr.mxu0 0.0
    %737 = vmatpush2.msra.mxu0 0.0
    %738 = vmatprep.subr.mxu0 0.0
    %739 = vmatpush2.msra.mxu0 0.0
    %740 = vmatprep.subr.mxu0 0.0
    %741 = vmatpush2.msra.mxu0 0.0
    %742 = vmatprep.subr.mxu0 0.0
    %743 = vmatpush2.msra.mxu0 0.0
    %744 = vmatprep.subr.mxu0 0.0
    %745 = vmatpush2.msra.mxu0 0.0
    %746 = vmatprep.subr.mxu0 0.0
    %747 = vmatpush2.msra.mxu0 0.0
    %748 = vmatprep.subr.mxu0 0.0
    %749 = vmatpush2.msra.mxu0 0.0
    %750 = vmatprep.subr.mxu0 0.0
    %751 = vmatpush2.msra.mxu0 0.0
    %752 = vmatprep.subr.mxu0 0.0
    %753 = vmatpush2.msra.mxu0 0.0
    %754 = vmatprep.subr.mxu0 0.0
    %755 = vmatpush2.msra.mxu0 0.0
    %756 = vmatprep.subr.mxu0 0.0
    %757 = vmatpush2.msra.mxu0 0.0
    %758 = vmatprep.subr.mxu0 0.0
    %759 = vmatpush2.msra.mxu0 0.0
    %760 = vmatprep.mubr.f32.mxu0 0.0
    %761 = vmatmul.mubr.f32.gmra.mxu0 %v694
    %v762 = vpop.f32.mrf.mxu0
    %v763 = vadd.f32 0.0, %v762
    %v764 = vpop.f32.mrf.mxu0
    %765 = vdwg.mxu0
    %v767 = vsel %vm367, %v454, 0
    %769 = vmatprep.subr.mxu0 0.0
    %770 = vmatpush1.msra.mxu0 0.0
    %771 = vmatprep.subr.mxu0 0.0
    %772 = vmatpush1.msra.mxu0 0.0
    %773 = vmatprep.subr.mxu0 0.0
    %774 = vmatpush1.msra.mxu0 0.0
    %775 = vmatprep.subr.mxu0 0.0
    %776 = vmatpush1.msra.mxu0 0.0
    %777 = vmatprep.subr.mxu0 0.0
    %778 = vmatpush1.msra.mxu0 0.0
    %779 = vmatprep.subr.mxu0 0.0
    %780 = vmatpush1.msra.mxu0 0.0
    %781 = vmatprep.subr.mxu0 0.0
    %782 = vmatpush1.msra.mxu0 0.0
    %783 = vmatprep.subr.mxu0 0.0
    %784 = vmatpush1.msra.mxu0 0.0
    %785 = vmatprep.subr.mxu0 0.0
    %786 = vmatpush1.msra.mxu0 0.0
    %787 = vmatprep.subr.mxu0 0.0
    %788 = vmatpush1.msra.mxu0 0.0
    %789 = vmatprep.subr.mxu0 0.0
    %790 = vmatpush1.msra.mxu0 0.0
    %791 = vmatprep.subr.mxu0 0.0
    %792 = vmatpush1.msra.mxu0 0.0
    %793 = vmatprep.subr.mxu0 0.0
    %794 = vmatpush1.msra.mxu0 0.0
    %795 = vmatprep.subr.mxu0 0.0
    %796 = vmatpush1.msra.mxu0 0.0
    %797 = vmatprep.subr.mxu0 0.0
    %798 = vmatpush1.msra.mxu0 0.0
    %799 = vmatprep.subr.mxu0 0.0
    %800 = vmatpush1.msra.mxu0 %v526
    %801 = vmatprep.subr.mxu0 0.0
    %802 = vmatpush2.msra.mxu0 0.0
    %803 = vmatprep.subr.mxu0 0.0
    %804 = vmatpush2.msra.mxu0 0.0
    %805 = vmatprep.subr.mxu0 0.0
    %806 = vmatpush2.msra.mxu0 0.0
    %807 = vmatprep.subr.mxu0 0.0
    %808 = vmatpush2.msra.mxu0 0.0
    %809 = vmatprep.subr.mxu0 0.0
    %810 = vmatpush2.msra.mxu0 0.0
    %811 = vmatprep.subr.mxu0 0.0
    %812 = vmatpush2.msra.mxu0 0.0
    %813 = vmatprep.subr.mxu0 0.0
    %814 = vmatpush2.msra.mxu0 0.0
    %815 = vmatprep.subr.mxu0 0.0
    %816 = vmatpush2.msra.mxu0 0.0
    %817 = vmatprep.subr.mxu0 0.0
    %818 = vmatpush2.msra.mxu0 0.0
    %819 = vmatprep.subr.mxu0 0.0
    %820 = vmatpush2.msra.mxu0 0.0
    %821 = vmatprep.subr.mxu0 0.0
    %822 = vmatpush2.msra.mxu0 0.0
    %823 = vmatprep.subr.mxu0 0.0
    %824 = vmatpush2.msra.mxu0 0.0
    %825 = vmatprep.subr.mxu0 0.0
    %826 = vmatpush2.msra.mxu0 0.0
    %827 = vmatprep.subr.mxu0 0.0
    %828 = vmatpush2.msra.mxu0 0.0
    %829 = vmatprep.subr.mxu0 0.0
    %830 = vmatpush2.msra.mxu0 0.0
    %831 = vmatprep.subr.mxu0 0.0
    %832 = vmatpush2.msra.mxu0 0.0
    %833 = vmatprep.mubr.f32.mxu0 0.0
    %834 = vmatmul.mubr.f32.gmra.mxu0 %v767
    %v835 = vpop.f32.mrf.mxu0
    %v836 = vadd.f32 %v763, %v835
    %v837 = vpop.f32.mrf.mxu0
    %838 = vdwg.mxu0
    %839 = vrot.lane.b32.xlu0 %v365, 112
    %v840 = vpop.permute.xlu0 %839
    %841 = vrot.lane.b32.xlu0 %v265, 112
    %v842 = vpop.permute.xlu0 %841
    %v843 = vsel %vm367, %v840, 0
    %v845 = vsel %vm367, %v842, 0
    %847 = vmatprep.subr.mxu0 0.0
    %848 = vmatpush1.xpose.msra.mxu0 0.0
    %849 = vmatprep.subr.mxu0 0.0
    %850 = vmatpush1.xpose.msra.mxu0 0.0
    %851 = vmatprep.subr.mxu0 0.0
    %852 = vmatpush1.xpose.msra.mxu0 0.0
    %853 = vmatprep.subr.mxu0 0.0
    %854 = vmatpush1.xpose.msra.mxu0 0.0
    %855 = vmatprep.subr.mxu0 0.0
    %856 = vmatpush1.xpose.msra.mxu0 0.0
    %857 = vmatprep.subr.mxu0 0.0
    %858 = vmatpush1.xpose.msra.mxu0 0.0
    %859 = vmatprep.subr.mxu0 0.0
    %860 = vmatpush1.xpose.msra.mxu0 0.0
    %861 = vmatprep.subr.mxu0 0.0
    %862 = vmatpush1.xpose.msra.mxu0 0.0
    %863 = vmatprep.subr.mxu0 0.0
    %864 = vmatpush1.xpose.msra.mxu0 0.0
    %865 = vmatprep.subr.mxu0 0.0
    %866 = vmatpush1.xpose.msra.mxu0 0.0
    %867 = vmatprep.subr.mxu0 0.0
    %868 = vmatpush1.xpose.msra.mxu0 0.0
    %869 = vmatprep.subr.mxu0 0.0
    %870 = vmatpush1.xpose.msra.mxu0 0.0
    %871 = vmatprep.subr.mxu0 0.0
    %872 = vmatpush1.xpose.msra.mxu0 0.0
    %873 = vmatprep.subr.mxu0 0.0
    %874 = vmatpush1.xpose.msra.mxu0 0.0
    %875 = vmatprep.subr.mxu0 0.0
    %876 = vmatpush1.xpose.msra.mxu0 0.0
    %877 = vmatprep.subr.mxu0 0.0
    %878 = vmatpush1.xpose.msra.mxu0 %v845
    %879 = vmatprep.subr.mxu0 0.0
    %880 = vmatpush2.xpose.msra.mxu0 0.0
    %881 = vmatprep.subr.mxu0 0.0
    %882 = vmatpush2.xpose.msra.mxu0 0.0
    %883 = vmatprep.subr.mxu0 0.0
    %884 = vmatpush2.xpose.msra.mxu0 0.0
    %885 = vmatprep.subr.mxu0 0.0
    %886 = vmatpush2.xpose.msra.mxu0 0.0
    %887 = vmatprep.subr.mxu0 0.0
    %888 = vmatpush2.xpose.msra.mxu0 0.0
    %889 = vmatprep.subr.mxu0 0.0
    %890 = vmatpush2.xpose.msra.mxu0 0.0
    %891 = vmatprep.subr.mxu0 0.0
    %892 = vmatpush2.xpose.msra.mxu0 0.0
    %893 = vmatprep.subr.mxu0 0.0
    %894 = vmatpush2.xpose.msra.mxu0 0.0
    %895 = vmatprep.subr.mxu0 0.0
    %896 = vmatpush2.xpose.msra.mxu0 0.0
    %897 = vmatprep.subr.mxu0 0.0
    %898 = vmatpush2.xpose.msra.mxu0 0.0
    %899 = vmatprep.subr.mxu0 0.0
    %900 = vmatpush2.xpose.msra.mxu0 0.0
    %901 = vmatprep.subr.mxu0 0.0
    %902 = vmatpush2.xpose.msra.mxu0 0.0
    %903 = vmatprep.subr.mxu0 0.0
    %904 = vmatpush2.xpose.msra.mxu0 0.0
    %905 = vmatprep.subr.mxu0 0.0
    %906 = vmatpush2.xpose.msra.mxu0 0.0
    %907 = vmatprep.subr.mxu0 0.0
    %908 = vmatpush2.xpose.msra.mxu0 0.0
    %909 = vmatprep.subr.mxu0 0.0
    %910 = vmatpush2.xpose.msra.mxu0 0.0
    %911 = vmatprep.mubr.f32.mxu0 0.0
    %912 = vmatmul.mubr.f32.gmra.mxu0 %v843
    %v913 = vpop.f32.mrf.mxu0
    %v914 = vadd.f32 0.0, %v913
    %v915 = vpop.f32.mrf.mxu0
    %916 = vdwg.mxu0
    %v917 = vsel %vm367, %v914, -inf
    %918 = vmax.xlane.f32.xlu0 %v917
    %v919 = vpop.xlane.xlu0 %918
    %v920 = vsub.f32 %v914, %v919
    %v921 = vmul.f32 %v920, 1.442695
    %v922 = vpow.pop %v921
    %v923 = vsel %vm367, %v922, 0.0
    %924 = vadd.xlane.f32.xlu0 %v923
    %v925 = vpop.xlane.xlu0 %924
    %v926 = vrcp.pop %v925
    %v927 = vmul.f32 %v922, %v926
    %v928 = vld [vmem:[%s8 + $0x10] sm:$0xff]
    %929 = vrot.lane.b32.xlu0 %v357, 112
    %v930 = vpop.permute.xlu0 %929
    %v931 = vsel %vm367, %v930, 0
    %933 = vmatprep.subr.mxu0 0.0
    %934 = vmatpush1.msra.mxu0 0.0
    %935 = vmatprep.subr.mxu0 0.0
    %936 = vmatpush1.msra.mxu0 0.0
    %937 = vmatprep.subr.mxu0 0.0
    %938 = vmatpush1.msra.mxu0 0.0
    %939 = vmatprep.subr.mxu0 0.0
    %940 = vmatpush1.msra.mxu0 0.0
    %941 = vmatprep.subr.mxu0 0.0
    %942 = vmatpush1.msra.mxu0 0.0
    %943 = vmatprep.subr.mxu0 0.0
    %944 = vmatpush1.msra.mxu0 0.0
    %945 = vmatprep.subr.mxu0 0.0
    %946 = vmatpush1.msra.mxu0 0.0
    %947 = vmatprep.subr.mxu0 0.0
    %948 = vmatpush1.msra.mxu0 0.0
    %949 = vmatprep.subr.mxu0 0.0
    %950 = vmatpush1.msra.mxu0 0.0
    %951 = vmatprep.subr.mxu0 0.0
    %952 = vmatpush1.msra.mxu0 0.0
    %953 = vmatprep.subr.mxu0 0.0
    %954 = vmatpush1.msra.mxu0 0.0
    %955 = vmatprep.subr.mxu0 0.0
    %956 = vmatpush1.msra.mxu0 0.0
    %957 = vmatprep.subr.mxu0 0.0
    %958 = vmatpush1.msra.mxu0 0.0
    %959 = vmatprep.subr.mxu0 0.0
    %960 = vmatpush1.msra.mxu0 0.0
    %961 = vmatprep.subr.mxu0 0.0
    %962 = vmatpush1.msra.mxu0 0.0
    %963 = vmatprep.subr.mxu0 0.0
    %964 = vmatpush1.msra.mxu0 %v928
    %965 = vmatprep.subr.mxu0 0.0
    %966 = vmatpush2.msra.mxu0 0.0
    %967 = vmatprep.subr.mxu0 0.0
    %968 = vmatpush2.msra.mxu0 0.0
    %969 = vmatprep.subr.mxu0 0.0
    %970 = vmatpush2.msra.mxu0 0.0
    %971 = vmatprep.subr.mxu0 0.0
    %972 = vmatpush2.msra.mxu0 0.0
    %973 = vmatprep.subr.mxu0 0.0
    %974 = vmatpush2.msra.mxu0 0.0
    %975 = vmatprep.subr.mxu0 0.0
    %976 = vmatpush2.msra.mxu0 0.0
    %977 = vmatprep.subr.mxu0 0.0
    %978 = vmatpush2.msra.mxu0 0.0
    %979 = vmatprep.subr.mxu0 0.0
    %980 = vmatpush2.msra.mxu0 0.0
    %981 = vmatprep.subr.mxu0 0.0
    %982 = vmatpush2.msra.mxu0 0.0
    %983 = vmatprep.subr.mxu0 0.0
    %984 = vmatpush2.msra.mxu0 0.0
    %985 = vmatprep.subr.mxu0 0.0
    %986 = vmatpush2.msra.mxu0 0.0
    %987 = vmatprep.subr.mxu0 0.0
    %988 = vmatpush2.msra.mxu0 0.0
    %989 = vmatprep.subr.mxu0 0.0
    %990 = vmatpush2.msra.mxu0 0.0
    %991 = vmatprep.subr.mxu0 0.0
    %992 = vmatpush2.msra.mxu0 0.0
    %993 = vmatprep.subr.mxu0 0.0
    %994 = vmatpush2.msra.mxu0 0.0
    %995 = vmatprep.subr.mxu0 0.0
    %996 = vmatpush2.msra.mxu0 0.0
    %997 = vmatprep.mubr.f32.mxu0 0.0
    %998 = vmatmul.mubr.f32.gmra.mxu0 %v931
    %v999 = vpop.f32.mrf.mxu0
    %v1000 = vadd.f32 0.0, %v999
    %v1001 = vpop.f32.mrf.mxu0
    %1002 = vdwg.mxu0
    %v1004 = vsel %vm367, %v927, 0
    %1006 = vmatprep.subr.mxu0 0.0
    %1007 = vmatpush1.msra.mxu0 0.0
    %1008 = vmatprep.subr.mxu0 0.0
    %1009 = vmatpush1.msra.mxu0 0.0
    %1010 = vmatprep.subr.mxu0 0.0
    %1011 = vmatpush1.msra.mxu0 0.0
    %1012 = vmatprep.subr.mxu0 0.0
    %1013 = vmatpush1.msra.mxu0 0.0
    %1014 = vmatprep.subr.mxu0 0.0
    %1015 = vmatpush1.msra.mxu0 0.0
    %1016 = vmatprep.subr.mxu0 0.0
    %1017 = vmatpush1.msra.mxu0 0.0
    %1018 = vmatprep.subr.mxu0 0.0
    %1019 = vmatpush1.msra.mxu0 0.0
    %1020 = vmatprep.subr.mxu0 0.0
    %1021 = vmatpush1.msra.mxu0 0.0
    %1022 = vmatprep.subr.mxu0 0.0
    %1023 = vmatpush1.msra.mxu0 0.0
    %1024 = vmatprep.subr.mxu0 0.0
    %1025 = vmatpush1.msra.mxu0 0.0
    %1026 = vmatprep.subr.mxu0 0.0
    %1027 = vmatpush1.msra.mxu0 0.0
    %1028 = vmatprep.subr.mxu0 0.0
    %1029 = vmatpush1.msra.mxu0 0.0
    %1030 = vmatprep.subr.mxu0 0.0
    %1031 = vmatpush1.msra.mxu0 0.0
    %1032 = vmatprep.subr.mxu0 0.0
    %1033 = vmatpush1.msra.mxu0 0.0
    %1034 = vmatprep.subr.mxu0 0.0
    %1035 = vmatpush1.msra.mxu0 0.0
    %1036 = vmatprep.subr.mxu0 0.0
    %1037 = vmatpush1.msra.mxu0 %v1000
    %1038 = vmatprep.subr.mxu0 0.0
    %1039 = vmatpush2.msra.mxu0 0.0
    %1040 = vmatprep.subr.mxu0 0.0
    %1041 = vmatpush2.msra.mxu0 0.0
    %1042 = vmatprep.subr.mxu0 0.0
    %1043 = vmatpush2.msra.mxu0 0.0
    %1044 = vmatprep.subr.mxu0 0.0
    %1045 = vmatpush2.msra.mxu0 0.0
    %1046 = vmatprep.subr.mxu0 0.0
    %1047 = vmatpush2.msra.mxu0 0.0
    %1048 = vmatprep.subr.mxu0 0.0
    %1049 = vmatpush2.msra.mxu0 0.0
    %1050 = vmatprep.subr.mxu0 0.0
    %1051 = vmatpush2.msra.mxu0 0.0
    %1052 = vmatprep.subr.mxu0 0.0
    %1053 = vmatpush2.msra.mxu0 0.0
    %1054 = vmatprep.subr.mxu0 0.0
    %1055 = vmatpush2.msra.mxu0 0.0
    %1056 = vmatprep.subr.mxu0 0.0
    %1057 = vmatpush2.msra.mxu0 0.0
    %1058 = vmatprep.subr.mxu0 0.0
    %1059 = vmatpush2.msra.mxu0 0.0
    %1060 = vmatprep.subr.mxu0 0.0
    %1061 = vmatpush2.msra.mxu0 0.0
    %1062 = vmatprep.subr.mxu0 0.0
    %1063 = vmatpush2.msra.mxu0 0.0
    %1064 = vmatprep.subr.mxu0 0.0
    %1065 = vmatpush2.msra.mxu0 0.0
    %1066 = vmatprep.subr.mxu0 0.0
    %1067 = vmatpush2.msra.mxu0 0.0
    %1068 = vmatprep.subr.mxu0 0.0
    %1069 = vmatpush2.msra.mxu0 0.0
    %1070 = vmatprep.mubr.f32.mxu0 0.0
    %1071 = vmatmul.mubr.f32.gmra.mxu0 %v1004
    %v1072 = vpop.f32.mrf.mxu0
    %v1073 = vadd.f32 0.0, %v1072
    %v1074 = vpop.f32.mrf.mxu0
    %1075 = vdwg.mxu0
    %v1076 = vadd.f32 %v836, %v1073
    %1077 = vrot.lane.b32.xlu0 %v365, 104
    %v1078 = vpop.permute.xlu0 %1077
    %1079 = vrot.lane.b32.xlu0 %v265, 104
    %v1080 = vpop.permute.xlu0 %1079
    %v1081 = vsel %vm367, %v1078, 0
    %v1083 = vsel %vm367, %v1080, 0
    %1085 = vmatprep.subr.mxu0 0.0
    %1086 = vmatpush1.xpose.msra.mxu0 0.0
    %1087 = vmatprep.subr.mxu0 0.0
    %1088 = vmatpush1.xpose.msra.mxu0 0.0
    %1089 = vmatprep.subr.mxu0 0.0
    %1090 = vmatpush1.xpose.msra.mxu0 0.0
    %1091 = vmatprep.subr.mxu0 0.0
    %1092 = vmatpush1.xpose.msra.mxu0 0.0
    %1093 = vmatprep.subr.mxu0 0.0
    %1094 = vmatpush1.xpose.msra.mxu0 0.0
    %1095 = vmatprep.subr.mxu0 0.0
    %1096 = vmatpush1.xpose.msra.mxu0 0.0
    %1097 = vmatprep.subr.mxu0 0.0
    %1098 = vmatpush1.xpose.msra.mxu0 0.0
    %1099 = vmatprep.subr.mxu0 0.0
    %1100 = vmatpush1.xpose.msra.mxu0 0.0
    %1101 = vmatprep.subr.mxu0 0.0
    %1102 = vmatpush1.xpose.msra.mxu0 0.0
    %1103 = vmatprep.subr.mxu0 0.0
    %1104 = vmatpush1.xpose.msra.mxu0 0.0
    %1105 = vmatprep.subr.mxu0 0.0
    %1106 = vmatpush1.xpose.msra.mxu0 0.0
    %1107 = vmatprep.subr.mxu0 0.0
    %1108 = vmatpush1.xpose.msra.mxu0 0.0
    %1109 = vmatprep.subr.mxu0 0.0
    %1110 = vmatpush1.xpose.msra.mxu0 0.0
    %1111 = vmatprep.subr.mxu0 0.0
    %1112 = vmatpush1.xpose.msra.mxu0 0.0
    %1113 = vmatprep.subr.mxu0 0.0
    %1114 = vmatpush1.xpose.msra.mxu0 0.0
    %1115 = vmatprep.subr.mxu0 0.0
    %1116 = vmatpush1.xpose.msra.mxu0 %v1083
    %1117 = vmatprep.subr.mxu0 0.0
    %1118 = vmatpush2.xpose.msra.mxu0 0.0
    %1119 = vmatprep.subr.mxu0 0.0
    %1120 = vmatpush2.xpose.msra.mxu0 0.0
    %1121 = vmatprep.subr.mxu0 0.0
    %1122 = vmatpush2.xpose.msra.mxu0 0.0
    %1123 = vmatprep.subr.mxu0 0.0
    %1124 = vmatpush2.xpose.msra.mxu0 0.0
    %1125 = vmatprep.subr.mxu0 0.0
    %1126 = vmatpush2.xpose.msra.mxu0 0.0
    %1127 = vmatprep.subr.mxu0 0.0
    %1128 = vmatpush2.xpose.msra.mxu0 0.0
    %1129 = vmatprep.subr.mxu0 0.0
    %1130 = vmatpush2.xpose.msra.mxu0 0.0
    %1131 = vmatprep.subr.mxu0 0.0
    %1132 = vmatpush2.xpose.msra.mxu0 0.0
    %1133 = vmatprep.subr.mxu0 0.0
    %1134 = vmatpush2.xpose.msra.mxu0 0.0
    %1135 = vmatprep.subr.mxu0 0.0
    %1136 = vmatpush2.xpose.msra.mxu0 0.0
    %1137 = vmatprep.subr.mxu0 0.0
    %1138 = vmatpush2.xpose.msra.mxu0 0.0
    %1139 = vmatprep.subr.mxu0 0.0
    %1140 = vmatpush2.xpose.msra.mxu0 0.0
    %1141 = vmatprep.subr.mxu0 0.0
    %1142 = vmatpush2.xpose.msra.mxu0 0.0
    %1143 = vmatprep.subr.mxu0 0.0
    %1144 = vmatpush2.xpose.msra.mxu0 0.0
    %1145 = vmatprep.subr.mxu0 0.0
    %1146 = vmatpush2.xpose.msra.mxu0 0.0
    %1147 = vmatprep.subr.mxu0 0.0
    %1148 = vmatpush2.xpose.msra.mxu0 0.0
    %1149 = vmatprep.mubr.f32.mxu0 0.0
    %1150 = vmatmul.mubr.f32.gmra.mxu0 %v1081
    %v1151 = vpop.f32.mrf.mxu0
    %v1152 = vadd.f32 0.0, %v1151
    %v1153 = vpop.f32.mrf.mxu0
    %1154 = vdwg.mxu0
    %v1155 = vsel %vm367, %v1152, -inf
    %1156 = vmax.xlane.f32.xlu0 %v1155
    %v1157 = vpop.xlane.xlu0 %1156
    %v1158 = vsub.f32 %v1152, %v1157
    %v1159 = vmul.f32 %v1158, 1.442695
    %v1160 = vpow.pop %v1159
    %v1161 = vsel %vm367, %v1160, 0.0
    %1162 = vadd.xlane.f32.xlu0 %v1161
    %v1163 = vpop.xlane.xlu0 %1162
    %v1164 = vrcp.pop %v1163
    %v1165 = vmul.f32 %v1160, %v1164
    %v1166 = vld [vmem:[%s8 + $0x18] sm:$0xff]
    %1167 = vrot.lane.b32.xlu0 %v357, 104
    %v1168 = vpop.permute.xlu0 %1167
    %v1169 = vsel %vm367, %v1168, 0
    %1171 = vmatprep.subr.mxu0 0.0
    %1172 = vmatpush1.msra.mxu0 0.0
    %1173 = vmatprep.subr.mxu0 0.0
    %1174 = vmatpush1.msra.mxu0 0.0
    %1175 = vmatprep.subr.mxu0 0.0
    %1176 = vmatpush1.msra.mxu0 0.0
    %1177 = vmatprep.subr.mxu0 0.0
    %1178 = vmatpush1.msra.mxu0 0.0
    %1179 = vmatprep.subr.mxu0 0.0
    %1180 = vmatpush1.msra.mxu0 0.0
    %1181 = vmatprep.subr.mxu0 0.0
    %1182 = vmatpush1.msra.mxu0 0.0
    %1183 = vmatprep.subr.mxu0 0.0
    %1184 = vmatpush1.msra.mxu0 0.0
    %1185 = vmatprep.subr.mxu0 0.0
    %1186 = vmatpush1.msra.mxu0 0.0
    %1187 = vmatprep.subr.mxu0 0.0
    %1188 = vmatpush1.msra.mxu0 0.0
    %1189 = vmatprep.subr.mxu0 0.0
    %1190 = vmatpush1.msra.mxu0 0.0
    %1191 = vmatprep.subr.mxu0 0.0
    %1192 = vmatpush1.msra.mxu0 0.0
    %1193 = vmatprep.subr.mxu0 0.0
    %1194 = vmatpush1.msra.mxu0 0.0
    %1195 = vmatprep.subr.mxu0 0.0
    %1196 = vmatpush1.msra.mxu0 0.0
    %1197 = vmatprep.subr.mxu0 0.0
    %1198 = vmatpush1.msra.mxu0 0.0
    %1199 = vmatprep.subr.mxu0 0.0
    %1200 = vmatpush1.msra.mxu0 0.0
    %1201 = vmatprep.subr.mxu0 0.0
    %1202 = vmatpush1.msra.mxu0 %v1166
    %1203 = vmatprep.subr.mxu0 0.0
    %1204 = vmatpush2.msra.mxu0 0.0
    %1205 = vmatprep.subr.mxu0 0.0
    %1206 = vmatpush2.msra.mxu0 0.0
    %1207 = vmatprep.subr.mxu0 0.0
    %1208 = vmatpush2.msra.mxu0 0.0
    %1209 = vmatprep.subr.mxu0 0.0
    %1210 = vmatpush2.msra.mxu0 0.0
    %1211 = vmatprep.subr.mxu0 0.0
    %1212 = vmatpush2.msra.mxu0 0.0
    %1213 = vmatprep.subr.mxu0 0.0
    %1214 = vmatpush2.msra.mxu0 0.0
    %1215 = vmatprep.subr.mxu0 0.0
    %1216 = vmatpush2.msra.mxu0 0.0
    %1217 = vmatprep.subr.mxu0 0.0
    %1218 = vmatpush2.msra.mxu0 0.0
    %1219 = vmatprep.subr.mxu0 0.0
    %1220 = vmatpush2.msra.mxu0 0.0
    %1221 = vmatprep.subr.mxu0 0.0
    %1222 = vmatpush2.msra.mxu0 0.0
    %1223 = vmatprep.subr.mxu0 0.0
    %1224 = vmatpush2.msra.mxu0 0.0
    %1225 = vmatprep.subr.mxu0 0.0
    %1226 = vmatpush2.msra.mxu0 0.0
    %1227 = vmatprep.subr.mxu0 0.0
    %1228 = vmatpush2.msra.mxu0 0.0
    %1229 = vmatprep.subr.mxu0 0.0
    %1230 = vmatpush2.msra.mxu0 0.0
    %1231 = vmatprep.subr.mxu0 0.0
    %1232 = vmatpush2.msra.mxu0 0.0
    %1233 = vmatprep.subr.mxu0 0.0
    %1234 = vmatpush2.msra.mxu0 0.0
    %1235 = vmatprep.mubr.f32.mxu0 0.0
    %1236 = vmatmul.mubr.f32.gmra.mxu0 %v1169
    %v1237 = vpop.f32.mrf.mxu0
    %v1238 = vadd.f32 0.0, %v1237
    %v1239 = vpop.f32.mrf.mxu0
    %1240 = vdwg.mxu0
    %v1242 = vsel %vm367, %v1165, 0
    %1244 = vmatprep.subr.mxu0 0.0
    %1245 = vmatpush1.msra.mxu0 0.0
    %1246 = vmatprep.subr.mxu0 0.0
    %1247 = vmatpush1.msra.mxu0 0.0
    %1248 = vmatprep.subr.mxu0 0.0
    %1249 = vmatpush1.msra.mxu0 0.0
    %1250 = vmatprep.subr.mxu0 0.0
    %1251 = vmatpush1.msra.mxu0 0.0
    %1252 = vmatprep.subr.mxu0 0.0
    %1253 = vmatpush1.msra.mxu0 0.0
    %1254 = vmatprep.subr.mxu0 0.0
    %1255 = vmatpush1.msra.mxu0 0.0
    %1256 = vmatprep.subr.mxu0 0.0
    %1257 = vmatpush1.msra.mxu0 0.0
    %1258 = vmatprep.subr.mxu0 0.0
    %1259 = vmatpush1.msra.mxu0 0.0
    %1260 = vmatprep.subr.mxu0 0.0
    %1261 = vmatpush1.msra.mxu0 0.0
    %1262 = vmatprep.subr.mxu0 0.0
    %1263 = vmatpush1.msra.mxu0 0.0
    %1264 = vmatprep.subr.mxu0 0.0
    %1265 = vmatpush1.msra.mxu0 0.0
    %1266 = vmatprep.subr.mxu0 0.0
    %1267 = vmatpush1.msra.mxu0 0.0
    %1268 = vmatprep.subr.mxu0 0.0
    %1269 = vmatpush1.msra.mxu0 0.0
    %1270 = vmatprep.subr.mxu0 0.0
    %1271 = vmatpush1.msra.mxu0 0.0
    %1272 = vmatprep.subr.mxu0 0.0
    %1273 = vmatpush1.msra.mxu0 0.0
    %1274 = vmatprep.subr.mxu0 0.0
    %1275 = vmatpush1.msra.mxu0 %v1238
    %1276 = vmatprep.subr.mxu0 0.0
    %1277 = vmatpush2.msra.mxu0 0.0
    %1278 = vmatprep.subr.mxu0 0.0
    %1279 = vmatpush2.msra.mxu0 0.0
    %1280 = vmatprep.subr.mxu0 0.0
    %1281 = vmatpush2.msra.mxu0 0.0
    %1282 = vmatprep.subr.mxu0 0.0
    %1283 = vmatpush2.msra.mxu0 0.0
    %1284 = vmatprep.subr.mxu0 0.0
    %1285 = vmatpush2.msra.mxu0 0.0
    %1286 = vmatprep.subr.mxu0 0.0
    %1287 = vmatpush2.msra.mxu0 0.0
    %1288 = vmatprep.subr.mxu0 0.0
    %1289 = vmatpush2.msra.mxu0 0.0
    %1290 = vmatprep.subr.mxu0 0.0
    %1291 = vmatpush2.msra.mxu0 0.0
    %1292 = vmatprep.subr.mxu0 0.0
    %1293 = vmatpush2.msra.mxu0 0.0
    %1294 = vmatprep.subr.mxu0 0.0
    %1295 = vmatpush2.msra.mxu0 0.0
    %1296 = vmatprep.subr.mxu0 0.0
    %1297 = vmatpush2.msra.mxu0 0.0
    %1298 = vmatprep.subr.mxu0 0.0
    %1299 = vmatpush2.msra.mxu0 0.0
    %1300 = vmatprep.subr.mxu0 0.0
    %1301 = vmatpush2.msra.mxu0 0.0
    %1302 = vmatprep.subr.mxu0 0.0
    %1303 = vmatpush2.msra.mxu0 0.0
    %1304 = vmatprep.subr.mxu0 0.0
    %1305 = vmatpush2.msra.mxu0 0.0
    %1306 = vmatprep.subr.mxu0 0.0
    %1307 = vmatpush2.msra.mxu0 0.0
    %1308 = vmatprep.mubr.f32.mxu0 0.0
    %1309 = vmatmul.mubr.f32.gmra.mxu0 %v1242
    %v1310 = vpop.f32.mrf.mxu0
    %v1311 = vadd.f32 0.0, %v1310
    %v1312 = vpop.f32.mrf.mxu0
    %1313 = vdwg.mxu0
    %v1314 = vadd.f32 %v1076, %v1311
    %v1316 = vsel %vm367, %v366, 0
    %v1319 = vsel %vm367, %v270, 0
    %1321 = vmatprep.subr.mxu0 0.0
    %1322 = vmatpush1.xpose.msra.mxu0 0.0
    %1323 = vmatprep.subr.mxu0 0.0
    %1324 = vmatpush1.xpose.msra.mxu0 0.0
    %1325 = vmatprep.subr.mxu0 0.0
    %1326 = vmatpush1.xpose.msra.mxu0 0.0
    %1327 = vmatprep.subr.mxu0 0.0
    %1328 = vmatpush1.xpose.msra.mxu0 0.0
    %1329 = vmatprep.subr.mxu0 0.0
    %1330 = vmatpush1.xpose.msra.mxu0 0.0
    %1331 = vmatprep.subr.mxu0 0.0
    %1332 = vmatpush1.xpose.msra.mxu0 0.0
    %1333 = vmatprep.subr.mxu0 0.0
    %1334 = vmatpush1.xpose.msra.mxu0 0.0
    %1335 = vmatprep.subr.mxu0 0.0
    %1336 = vmatpush1.xpose.msra.mxu0 0.0
    %1337 = vmatprep.subr.mxu0 0.0
    %1338 = vmatpush1.xpose.msra.mxu0 0.0
    %1339 = vmatprep.subr.mxu0 0.0
    %1340 = vmatpush1.xpose.msra.mxu0 0.0
    %1341 = vmatprep.subr.mxu0 0.0
    %1342 = vmatpush1.xpose.msra.mxu0 0.0
    %1343 = vmatprep.subr.mxu0 0.0
    %1344 = vmatpush1.xpose.msra.mxu0 0.0
    %1345 = vmatprep.subr.mxu0 0.0
    %1346 = vmatpush1.xpose.msra.mxu0 0.0
    %1347 = vmatprep.subr.mxu0 0.0
    %1348 = vmatpush1.xpose.msra.mxu0 0.0
    %1349 = vmatprep.subr.mxu0 0.0
    %1350 = vmatpush1.xpose.msra.mxu0 0.0
    %1351 = vmatprep.subr.mxu0 0.0
    %1352 = vmatpush1.xpose.msra.mxu0 %v1319
    %1353 = vmatprep.subr.mxu0 0.0
    %1354 = vmatpush2.xpose.msra.mxu0 0.0
    %1355 = vmatprep.subr.mxu0 0.0
    %1356 = vmatpush2.xpose.msra.mxu0 0.0
    %1357 = vmatprep.subr.mxu0 0.0
    %1358 = vmatpush2.xpose.msra.mxu0 0.0
    %1359 = vmatprep.subr.mxu0 0.0
    %1360 = vmatpush2.xpose.msra.mxu0 0.0
    %1361 = vmatprep.subr.mxu0 0.0
    %1362 = vmatpush2.xpose.msra.mxu0 0.0
    %1363 = vmatprep.subr.mxu0 0.0
    %1364 = vmatpush2.xpose.msra.mxu0 0.0
    %1365 = vmatprep.subr.mxu0 0.0
    %1366 = vmatpush2.xpose.msra.mxu0 0.0
    %1367 = vmatprep.subr.mxu0 0.0
    %1368 = vmatpush2.xpose.msra.mxu0 0.0
    %1369 = vmatprep.subr.mxu0 0.0
    %1370 = vmatpush2.xpose.msra.mxu0 0.0
    %1371 = vmatprep.subr.mxu0 0.0
    %1372 = vmatpush2.xpose.msra.mxu0 0.0
    %1373 = vmatprep.subr.mxu0 0.0
    %1374 = vmatpush2.xpose.msra.mxu0 0.0
    %1375 = vmatprep.subr.mxu0 0.0
    %1376 = vmatpush2.xpose.msra.mxu0 0.0
    %1377 = vmatprep.subr.mxu0 0.0
    %1378 = vmatpush2.xpose.msra.mxu0 0.0
    %1379 = vmatprep.subr.mxu0 0.0
    %1380 = vmatpush2.xpose.msra.mxu0 0.0
    %1381 = vmatprep.subr.mxu0 0.0
    %1382 = vmatpush2.xpose.msra.mxu0 0.0
    %1383 = vmatprep.subr.mxu0 0.0
    %1384 = vmatpush2.xpose.msra.mxu0 0.0
    %1385 = vmatprep.mubr.f32.mxu0 0.0
    %1386 = vmatmul.mubr.f32.gmra.mxu0 %v1316
    %v1387 = vpop.f32.mrf.mxu0
    %v1388 = vadd.f32 0.0, %v1387
    %v1389 = vpop.f32.mrf.mxu0
    %1390 = vdwg.mxu0
    %v1391 = vsel %vm367, %v1388, -inf
    %1392 = vmax.xlane.f32.xlu0 %v1391
    %v1393 = vpop.xlane.xlu0 %1392
    %v1394 = vsub.f32 %v1388, %v1393
    %v1395 = vmul.f32 %v1394, 1.442695
    %v1396 = vpow.pop %v1395
    %v1397 = vsel %vm367, %v1396, 0.0
    %1398 = vadd.xlane.f32.xlu0 %v1397
    %v1399 = vpop.xlane.xlu0 %1398
    %v1400 = vrcp.pop %v1399
    %v1401 = vmul.f32 %v1396, %v1400
    %v1403 = vsel %vm367, %v362, 0
    %1405 = vmatprep.subr.mxu0 0.0
    %1406 = vmatpush1.msra.mxu0 0.0
    %1407 = vmatprep.subr.mxu0 0.0
    %1408 = vmatpush1.msra.mxu0 0.0
    %1409 = vmatprep.subr.mxu0 0.0
    %1410 = vmatpush1.msra.mxu0 0.0
    %1411 = vmatprep.subr.mxu0 0.0
    %1412 = vmatpush1.msra.mxu0 0.0
    %1413 = vmatprep.subr.mxu0 0.0
    %1414 = vmatpush1.msra.mxu0 0.0
    %1415 = vmatprep.subr.mxu0 0.0
    %1416 = vmatpush1.msra.mxu0 0.0
    %1417 = vmatprep.subr.mxu0 0.0
    %1418 = vmatpush1.msra.mxu0 0.0
    %1419 = vmatprep.subr.mxu0 0.0
    %1420 = vmatpush1.msra.mxu0 0.0
    %1421 = vmatprep.subr.mxu0 0.0
    %1422 = vmatpush1.msra.mxu0 0.0
    %1423 = vmatprep.subr.mxu0 0.0
    %1424 = vmatpush1.msra.mxu0 0.0
    %1425 = vmatprep.subr.mxu0 0.0
    %1426 = vmatpush1.msra.mxu0 0.0
    %1427 = vmatprep.subr.mxu0 0.0
    %1428 = vmatpush1.msra.mxu0 0.0
    %1429 = vmatprep.subr.mxu0 0.0
    %1430 = vmatpush1.msra.mxu0 0.0
    %1431 = vmatprep.subr.mxu0 0.0
    %1432 = vmatpush1.msra.mxu0 0.0
    %1433 = vmatprep.subr.mxu0 0.0
    %1434 = vmatpush1.msra.mxu0 0.0
    %1435 = vmatprep.subr.mxu0 0.0
    %1436 = vmatpush1.msra.mxu0 %v455
    %1437 = vmatprep.subr.mxu0 0.0
    %1438 = vmatpush2.msra.mxu0 0.0
    %1439 = vmatprep.subr.mxu0 0.0
    %1440 = vmatpush2.msra.mxu0 0.0
    %1441 = vmatprep.subr.mxu0 0.0
    %1442 = vmatpush2.msra.mxu0 0.0
    %1443 = vmatprep.subr.mxu0 0.0
    %1444 = vmatpush2.msra.mxu0 0.0
    %1445 = vmatprep.subr.mxu0 0.0
    %1446 = vmatpush2.msra.mxu0 0.0
    %1447 = vmatprep.subr.mxu0 0.0
    %1448 = vmatpush2.msra.mxu0 0.0
    %1449 = vmatprep.subr.mxu0 0.0
    %1450 = vmatpush2.msra.mxu0 0.0
    %1451 = vmatprep.subr.mxu0 0.0
    %1452 = vmatpush2.msra.mxu0 0.0
    %1453 = vmatprep.subr.mxu0 0.0
    %1454 = vmatpush2.msra.mxu0 0.0
    %1455 = vmatprep.subr.mxu0 0.0
    %1456 = vmatpush2.msra.mxu0 0.0
    %1457 = vmatprep.subr.mxu0 0.0
    %1458 = vmatpush2.msra.mxu0 0.0
    %1459 = vmatprep.subr.mxu0 0.0
    %1460 = vmatpush2.msra.mxu0 0.0
    %1461 = vmatprep.subr.mxu0 0.0
    %1462 = vmatpush2.msra.mxu0 0.0
    %1463 = vmatprep.subr.mxu0 0.0
    %1464 = vmatpush2.msra.mxu0 0.0
    %1465 = vmatprep.subr.mxu0 0.0
    %1466 = vmatpush2.msra.mxu0 0.0
    %1467 = vmatprep.subr.mxu0 0.0
    %1468 = vmatpush2.msra.mxu0 0.0
    %1469 = vmatprep.mubr.f32.mxu0 0.0
    %1470 = vmatmul.mubr.f32.gmra.mxu0 %v1403
    %v1471 = vpop.f32.mrf.mxu0
    %v1472 = vadd.f32 0.0, %v1471
    %v1473 = vpop.f32.mrf.mxu0
    %1474 = vdwg.mxu0
    %1475 = vrot.lane.b32.xlu0 %v366, 120
    %v1476 = vpop.permute.xlu0 %1475
    %1477 = vrot.lane.b32.xlu0 %v270, 120
    %v1478 = vpop.permute.xlu0 %1477
    %v1479 = vsel %vm367, %v1476, 0
    %v1481 = vsel %vm367, %v1478, 0
    %1483 = vmatprep.subr.mxu0 0.0
    %1484 = vmatpush1.xpose.msra.mxu0 0.0
    %1485 = vmatprep.subr.mxu0 0.0
    %1486 = vmatpush1.xpose.msra.mxu0 0.0
    %1487 = vmatprep.subr.mxu0 0.0
    %1488 = vmatpush1.xpose.msra.mxu0 0.0
    %1489 = vmatprep.subr.mxu0 0.0
    %1490 = vmatpush1.xpose.msra.mxu0 0.0
    %1491 = vmatprep.subr.mxu0 0.0
    %1492 = vmatpush1.xpose.msra.mxu0 0.0
    %1493 = vmatprep.subr.mxu0 0.0
    %1494 = vmatpush1.xpose.msra.mxu0 0.0
    %1495 = vmatprep.subr.mxu0 0.0
    %1496 = vmatpush1.xpose.msra.mxu0 0.0
    %1497 = vmatprep.subr.mxu0 0.0
    %1498 = vmatpush1.xpose.msra.mxu0 0.0
    %1499 = vmatprep.subr.mxu0 0.0
    %1500 = vmatpush1.xpose.msra.mxu0 0.0
    %1501 = vmatprep.subr.mxu0 0.0
    %1502 = vmatpush1.xpose.msra.mxu0 0.0
    %1503 = vmatprep.subr.mxu0 0.0
    %1504 = vmatpush1.xpose.msra.mxu0 0.0
    %1505 = vmatprep.subr.mxu0 0.0
    %1506 = vmatpush1.xpose.msra.mxu0 0.0
    %1507 = vmatprep.subr.mxu0 0.0
    %1508 = vmatpush1.xpose.msra.mxu0 0.0
    %1509 = vmatprep.subr.mxu0 0.0
    %1510 = vmatpush1.xpose.msra.mxu0 0.0
    %1511 = vmatprep.subr.mxu0 0.0
    %1512 = vmatpush1.xpose.msra.mxu0 0.0
    %1513 = vmatprep.subr.mxu0 0.0
    %1514 = vmatpush1.xpose.msra.mxu0 %v1481
    %1515 = vmatprep.subr.mxu0 0.0
    %1516 = vmatpush2.xpose.msra.mxu0 0.0
    %1517 = vmatprep.subr.mxu0 0.0
    %1518 = vmatpush2.xpose.msra.mxu0 0.0
    %1519 = vmatprep.subr.mxu0 0.0
    %1520 = vmatpush2.xpose.msra.mxu0 0.0
    %1521 = vmatprep.subr.mxu0 0.0
    %1522 = vmatpush2.xpose.msra.mxu0 0.0
    %1523 = vmatprep.subr.mxu0 0.0
    %1524 = vmatpush2.xpose.msra.mxu0 0.0
    %1525 = vmatprep.subr.mxu0 0.0
    %1526 = vmatpush2.xpose.msra.mxu0 0.0
    %1527 = vmatprep.subr.mxu0 0.0
    %1528 = vmatpush2.xpose.msra.mxu0 0.0
    %1529 = vmatprep.subr.mxu0 0.0
    %1530 = vmatpush2.xpose.msra.mxu0 0.0
    %1531 = vmatprep.subr.mxu0 0.0
    %1532 = vmatpush2.xpose.msra.mxu0 0.0
    %1533 = vmatprep.subr.mxu0 0.0
    %1534 = vmatpush2.xpose.msra.mxu0 0.0
    %1535 = vmatprep.subr.mxu0 0.0
    %1536 = vmatpush2.xpose.msra.mxu0 0.0
    %1537 = vmatprep.subr.mxu0 0.0
    %1538 = vmatpush2.xpose.msra.mxu0 0.0
    %1539 = vmatprep.subr.mxu0 0.0
    %1540 = vmatpush2.xpose.msra.mxu0 0.0
    %1541 = vmatprep.subr.mxu0 0.0
    %1542 = vmatpush2.xpose.msra.mxu0 0.0
    %1543 = vmatprep.subr.mxu0 0.0
    %1544 = vmatpush2.xpose.msra.mxu0 0.0
    %1545 = vmatprep.subr.mxu0 0.0
    %1546 = vmatpush2.xpose.msra.mxu0 0.0
    %1547 = vmatprep.mubr.f32.mxu0 0.0
    %1548 = vmatmul.mubr.f32.gmra.mxu0 %v1479
    %v1549 = vpop.f32.mrf.mxu0
    %v1550 = vadd.f32 0.0, %v1549
    %v1551 = vpop.f32.mrf.mxu0
    %1552 = vdwg.mxu0
    %v1553 = vsel %vm367, %v1550, -inf
    %1554 = vmax.xlane.f32.xlu0 %v1553
    %v1555 = vpop.xlane.xlu0 %1554
    %v1556 = vsub.f32 %v1550, %v1555
    %v1557 = vmul.f32 %v1556, 1.442695
    %v1558 = vpow.pop %v1557
    %v1559 = vsel %vm367, %v1558, 0.0
    %1560 = vadd.xlane.f32.xlu0 %v1559
    %v1561 = vpop.xlane.xlu0 %1560
    %v1562 = vrcp.pop %v1561
    %v1563 = vmul.f32 %v1558, %v1562
    %1564 = vrot.lane.b32.xlu0 %v362, 120
    %v1565 = vpop.permute.xlu0 %1564
    %v1566 = vsel %vm367, %v1565, 0
    %1568 = vmatprep.subr.mxu0 0.0
    %1569 = vmatpush1.msra.mxu0 0.0
    %1570 = vmatprep.subr.mxu0 0.0
    %1571 = vmatpush1.msra.mxu0 0.0
    %1572 = vmatprep.subr.mxu0 0.0
    %1573 = vmatpush1.msra.mxu0 0.0
    %1574 = vmatprep.subr.mxu0 0.0
    %1575 = vmatpush1.msra.mxu0 0.0
    %1576 = vmatprep.subr.mxu0 0.0
    %1577 = vmatpush1.msra.mxu0 0.0
    %1578 = vmatprep.subr.mxu0 0.0
    %1579 = vmatpush1.msra.mxu0 0.0
    %1580 = vmatprep.subr.mxu0 0.0
    %1581 = vmatpush1.msra.mxu0 0.0
    %1582 = vmatprep.subr.mxu0 0.0
    %1583 = vmatpush1.msra.mxu0 0.0
    %1584 = vmatprep.subr.mxu0 0.0
    %1585 = vmatpush1.msra.mxu0 0.0
    %1586 = vmatprep.subr.mxu0 0.0
    %1587 = vmatpush1.msra.mxu0 0.0
    %1588 = vmatprep.subr.mxu0 0.0
    %1589 = vmatpush1.msra.mxu0 0.0
    %1590 = vmatprep.subr.mxu0 0.0
    %1591 = vmatpush1.msra.mxu0 0.0
    %1592 = vmatprep.subr.mxu0 0.0
    %1593 = vmatpush1.msra.mxu0 0.0
    %1594 = vmatprep.subr.mxu0 0.0
    %1595 = vmatpush1.msra.mxu0 0.0
    %1596 = vmatprep.subr.mxu0 0.0
    %1597 = vmatpush1.msra.mxu0 0.0
    %1598 = vmatprep.subr.mxu0 0.0
    %1599 = vmatpush1.msra.mxu0 %v618
    %1600 = vmatprep.subr.mxu0 0.0
    %1601 = vmatpush2.msra.mxu0 0.0
    %1602 = vmatprep.subr.mxu0 0.0
    %1603 = vmatpush2.msra.mxu0 0.0
    %1604 = vmatprep.subr.mxu0 0.0
    %1605 = vmatpush2.msra.mxu0 0.0
    %1606 = vmatprep.subr.mxu0 0.0
    %1607 = vmatpush2.msra.mxu0 0.0
    %1608 = vmatprep.subr.mxu0 0.0
    %1609 = vmatpush2.msra.mxu0 0.0
    %1610 = vmatprep.subr.mxu0 0.0
    %1611 = vmatpush2.msra.mxu0 0.0
    %1612 = vmatprep.subr.mxu0 0.0
    %1613 = vmatpush2.msra.mxu0 0.0
    %1614 = vmatprep.subr.mxu0 0.0
    %1615 = vmatpush2.msra.mxu0 0.0
    %1616 = vmatprep.subr.mxu0 0.0
    %1617 = vmatpush2.msra.mxu0 0.0
    %1618 = vmatprep.subr.mxu0 0.0
    %1619 = vmatpush2.msra.mxu0 0.0
    %1620 = vmatprep.subr.mxu0 0.0
    %1621 = vmatpush2.msra.mxu0 0.0
    %1622 = vmatprep.subr.mxu0 0.0
    %1623 = vmatpush2.msra.mxu0 0.0
    %1624 = vmatprep.subr.mxu0 0.0
    %1625 = vmatpush2.msra.mxu0 0.0
    %1626 = vmatprep.subr.mxu0 0.0
    %1627 = vmatpush2.msra.mxu0 0.0
    %1628 = vmatprep.subr.mxu0 0.0
    %1629 = vmatpush2.msra.mxu0 0.0
    %1630 = vmatprep.subr.mxu0 0.0
    %1631 = vmatpush2.msra.mxu0 0.0
    %1632 = vmatprep.mubr.f32.mxu0 0.0
    %1633 = vmatmul.mubr.f32.gmra.mxu0 %v1566
    %v1634 = vpop.f32.mrf.mxu0
    %v1635 = vadd.f32 0.0, %v1634
    %v1636 = vpop.f32.mrf.mxu0
    %1637 = vdwg.mxu0
    %v1639 = vsel %vm367, %v1563, 0
    %1641 = vmatprep.subr.mxu0 0.0
    %1642 = vmatpush1.msra.mxu0 0.0
    %1643 = vmatprep.subr.mxu0 0.0
    %1644 = vmatpush1.msra.mxu0 0.0
    %1645 = vmatprep.subr.mxu0 0.0
    %1646 = vmatpush1.msra.mxu0 0.0
    %1647 = vmatprep.subr.mxu0 0.0
    %1648 = vmatpush1.msra.mxu0 0.0
    %1649 = vmatprep.subr.mxu0 0.0
    %1650 = vmatpush1.msra.mxu0 0.0
    %1651 = vmatprep.subr.mxu0 0.0
    %1652 = vmatpush1.msra.mxu0 0.0
    %1653 = vmatprep.subr.mxu0 0.0
    %1654 = vmatpush1.msra.mxu0 0.0
    %1655 = vmatprep.subr.mxu0 0.0
    %1656 = vmatpush1.msra.mxu0 0.0
    %1657 = vmatprep.subr.mxu0 0.0
    %1658 = vmatpush1.msra.mxu0 0.0
    %1659 = vmatprep.subr.mxu0 0.0
    %1660 = vmatpush1.msra.mxu0 0.0
    %1661 = vmatprep.subr.mxu0 0.0
    %1662 = vmatpush1.msra.mxu0 0.0
    %1663 = vmatprep.subr.mxu0 0.0
    %1664 = vmatpush1.msra.mxu0 0.0
    %1665 = vmatprep.subr.mxu0 0.0
    %1666 = vmatpush1.msra.mxu0 0.0
    %1667 = vmatprep.subr.mxu0 0.0
    %1668 = vmatpush1.msra.mxu0 0.0
    %1669 = vmatprep.subr.mxu0 0.0
    %1670 = vmatpush1.msra.mxu0 0.0
    %1671 = vmatprep.subr.mxu0 0.0
    %1672 = vmatpush1.msra.mxu0 %v1635
    %1673 = vmatprep.subr.mxu0 0.0
    %1674 = vmatpush2.msra.mxu0 0.0
    %1675 = vmatprep.subr.mxu0 0.0
    %1676 = vmatpush2.msra.mxu0 0.0
    %1677 = vmatprep.subr.mxu0 0.0
    %1678 = vmatpush2.msra.mxu0 0.0
    %1679 = vmatprep.subr.mxu0 0.0
    %1680 = vmatpush2.msra.mxu0 0.0
    %1681 = vmatprep.subr.mxu0 0.0
    %1682 = vmatpush2.msra.mxu0 0.0
    %1683 = vmatprep.subr.mxu0 0.0
    %1684 = vmatpush2.msra.mxu0 0.0
    %1685 = vmatprep.subr.mxu0 0.0
    %1686 = vmatpush2.msra.mxu0 0.0
    %1687 = vmatprep.subr.mxu0 0.0
    %1688 = vmatpush2.msra.mxu0 0.0
    %1689 = vmatprep.subr.mxu0 0.0
    %1690 = vmatpush2.msra.mxu0 0.0
    %1691 = vmatprep.subr.mxu0 0.0
    %1692 = vmatpush2.msra.mxu0 0.0
    %1693 = vmatprep.subr.mxu0 0.0
    %1694 = vmatpush2.msra.mxu0 0.0
    %1695 = vmatprep.subr.mxu0 0.0
    %1696 = vmatpush2.msra.mxu0 0.0
    %1697 = vmatprep.subr.mxu0 0.0
    %1698 = vmatpush2.msra.mxu0 0.0
    %1699 = vmatprep.subr.mxu0 0.0
    %1700 = vmatpush2.msra.mxu0 0.0
    %1701 = vmatprep.subr.mxu0 0.0
    %1702 = vmatpush2.msra.mxu0 0.0
    %1703 = vmatprep.subr.mxu0 0.0
    %1704 = vmatpush2.msra.mxu0 0.0
    %1705 = vmatprep.mubr.f32.mxu0 0.0
    %1706 = vmatmul.mubr.f32.gmra.mxu0 %v1639
    %v1707 = vpop.f32.mrf.mxu0
    %v1708 = vadd.f32 0.0, %v1707
    %v1709 = vpop.f32.mrf.mxu0
    %1710 = vdwg.mxu0
    %v1712 = vsel %vm367, %v1401, 0
    %1714 = vmatprep.subr.mxu0 0.0
    %1715 = vmatpush1.msra.mxu0 0.0
    %1716 = vmatprep.subr.mxu0 0.0
    %1717 = vmatpush1.msra.mxu0 0.0
    %1718 = vmatprep.subr.mxu0 0.0
    %1719 = vmatpush1.msra.mxu0 0.0
    %1720 = vmatprep.subr.mxu0 0.0
    %1721 = vmatpush1.msra.mxu0 0.0
    %1722 = vmatprep.subr.mxu0 0.0
    %1723 = vmatpush1.msra.mxu0 0.0
    %1724 = vmatprep.subr.mxu0 0.0
    %1725 = vmatpush1.msra.mxu0 0.0
    %1726 = vmatprep.subr.mxu0 0.0
    %1727 = vmatpush1.msra.mxu0 0.0
    %1728 = vmatprep.subr.mxu0 0.0
    %1729 = vmatpush1.msra.mxu0 0.0
    %1730 = vmatprep.subr.mxu0 0.0
    %1731 = vmatpush1.msra.mxu0 0.0
    %1732 = vmatprep.subr.mxu0 0.0
    %1733 = vmatpush1.msra.mxu0 0.0
    %1734 = vmatprep.subr.mxu0 0.0
    %1735 = vmatpush1.msra.mxu0 0.0
    %1736 = vmatprep.subr.mxu0 0.0
    %1737 = vmatpush1.msra.mxu0 0.0
    %1738 = vmatprep.subr.mxu0 0.0
    %1739 = vmatpush1.msra.mxu0 0.0
    %1740 = vmatprep.subr.mxu0 0.0
    %1741 = vmatpush1.msra.mxu0 0.0
    %1742 = vmatprep.subr.mxu0 0.0
    %1743 = vmatpush1.msra.mxu0 0.0
    %1744 = vmatprep.subr.mxu0 0.0
    %1745 = vmatpush1.msra.mxu0 %v1472
    %1746 = vmatprep.subr.mxu0 0.0
    %1747 = vmatpush2.msra.mxu0 0.0
    %1748 = vmatprep.subr.mxu0 0.0
    %1749 = vmatpush2.msra.mxu0 0.0
    %1750 = vmatprep.subr.mxu0 0.0
    %1751 = vmatpush2.msra.mxu0 0.0
    %1752 = vmatprep.subr.mxu0 0.0
    %1753 = vmatpush2.msra.mxu0 0.0
    %1754 = vmatprep.subr.mxu0 0.0
    %1755 = vmatpush2.msra.mxu0 0.0
    %1756 = vmatprep.subr.mxu0 0.0
    %1757 = vmatpush2.msra.mxu0 0.0
    %1758 = vmatprep.subr.mxu0 0.0
    %1759 = vmatpush2.msra.mxu0 0.0
    %1760 = vmatprep.subr.mxu0 0.0
    %1761 = vmatpush2.msra.mxu0 0.0
    %1762 = vmatprep.subr.mxu0 0.0
    %1763 = vmatpush2.msra.mxu0 0.0
    %1764 = vmatprep.subr.mxu0 0.0
    %1765 = vmatpush2.msra.mxu0 0.0
    %1766 = vmatprep.subr.mxu0 0.0
    %1767 = vmatpush2.msra.mxu0 0.0
    %1768 = vmatprep.subr.mxu0 0.0
    %1769 = vmatpush2.msra.mxu0 0.0
    %1770 = vmatprep.subr.mxu0 0.0
    %1771 = vmatpush2.msra.mxu0 0.0
    %1772 = vmatprep.subr.mxu0 0.0
    %1773 = vmatpush2.msra.mxu0 0.0
    %1774 = vmatprep.subr.mxu0 0.0
    %1775 = vmatpush2.msra.mxu0 0.0
    %1776 = vmatprep.subr.mxu0 0.0
    %1777 = vmatpush2.msra.mxu0 0.0
    %1778 = vmatprep.mubr.f32.mxu0 0.0
    %1779 = vmatmul.mubr.f32.gmra.mxu0 %v1712
    %v1780 = vpop.f32.mrf.mxu0
    %v1781 = vadd.f32 %v1708, %v1780
    %v1782 = vpop.f32.mrf.mxu0
    %1783 = vdwg.mxu0
    %1784 = vrot.lane.b32.xlu0 %v366, 112
    %v1785 = vpop.permute.xlu0 %1784
    %1786 = vrot.lane.b32.xlu0 %v270, 112
    %v1787 = vpop.permute.xlu0 %1786
    %v1788 = vsel %vm367, %v1785, 0
    %v1790 = vsel %vm367, %v1787, 0
    %1792 = vmatprep.subr.mxu0 0.0
    %1793 = vmatpush1.xpose.msra.mxu0 0.0
    %1794 = vmatprep.subr.mxu0 0.0
    %1795 = vmatpush1.xpose.msra.mxu0 0.0
    %1796 = vmatprep.subr.mxu0 0.0
    %1797 = vmatpush1.xpose.msra.mxu0 0.0
    %1798 = vmatprep.subr.mxu0 0.0
    %1799 = vmatpush1.xpose.msra.mxu0 0.0
    %1800 = vmatprep.subr.mxu0 0.0
    %1801 = vmatpush1.xpose.msra.mxu0 0.0
    %1802 = vmatprep.subr.mxu0 0.0
    %1803 = vmatpush1.xpose.msra.mxu0 0.0
    %1804 = vmatprep.subr.mxu0 0.0
    %1805 = vmatpush1.xpose.msra.mxu0 0.0
    %1806 = vmatprep.subr.mxu0 0.0
    %1807 = vmatpush1.xpose.msra.mxu0 0.0
    %1808 = vmatprep.subr.mxu0 0.0
    %1809 = vmatpush1.xpose.msra.mxu0 0.0
    %1810 = vmatprep.subr.mxu0 0.0
    %1811 = vmatpush1.xpose.msra.mxu0 0.0
    %1812 = vmatprep.subr.mxu0 0.0
    %1813 = vmatpush1.xpose.msra.mxu0 0.0
    %1814 = vmatprep.subr.mxu0 0.0
    %1815 = vmatpush1.xpose.msra.mxu0 0.0
    %1816 = vmatprep.subr.mxu0 0.0
    %1817 = vmatpush1.xpose.msra.mxu0 0.0
    %1818 = vmatprep.subr.mxu0 0.0
    %1819 = vmatpush1.xpose.msra.mxu0 0.0
    %1820 = vmatprep.subr.mxu0 0.0
    %1821 = vmatpush1.xpose.msra.mxu0 0.0
    %1822 = vmatprep.subr.mxu0 0.0
    %1823 = vmatpush1.xpose.msra.mxu0 %v1790
    %1824 = vmatprep.subr.mxu0 0.0
    %1825 = vmatpush2.xpose.msra.mxu0 0.0
    %1826 = vmatprep.subr.mxu0 0.0
    %1827 = vmatpush2.xpose.msra.mxu0 0.0
    %1828 = vmatprep.subr.mxu0 0.0
    %1829 = vmatpush2.xpose.msra.mxu0 0.0
    %1830 = vmatprep.subr.mxu0 0.0
    %1831 = vmatpush2.xpose.msra.mxu0 0.0
    %1832 = vmatprep.subr.mxu0 0.0
    %1833 = vmatpush2.xpose.msra.mxu0 0.0
    %1834 = vmatprep.subr.mxu0 0.0
    %1835 = vmatpush2.xpose.msra.mxu0 0.0
    %1836 = vmatprep.subr.mxu0 0.0
    %1837 = vmatpush2.xpose.msra.mxu0 0.0
    %1838 = vmatprep.subr.mxu0 0.0
    %1839 = vmatpush2.xpose.msra.mxu0 0.0
    %1840 = vmatprep.subr.mxu0 0.0
    %1841 = vmatpush2.xpose.msra.mxu0 0.0
    %1842 = vmatprep.subr.mxu0 0.0
    %1843 = vmatpush2.xpose.msra.mxu0 0.0
    %1844 = vmatprep.subr.mxu0 0.0
    %1845 = vmatpush2.xpose.msra.mxu0 0.0
    %1846 = vmatprep.subr.mxu0 0.0
    %1847 = vmatpush2.xpose.msra.mxu0 0.0
    %1848 = vmatprep.subr.mxu0 0.0
    %1849 = vmatpush2.xpose.msra.mxu0 0.0
    %1850 = vmatprep.subr.mxu0 0.0
    %1851 = vmatpush2.xpose.msra.mxu0 0.0
    %1852 = vmatprep.subr.mxu0 0.0
    %1853 = vmatpush2.xpose.msra.mxu0 0.0
    %1854 = vmatprep.subr.mxu0 0.0
    %1855 = vmatpush2.xpose.msra.mxu0 0.0
    %1856 = vmatprep.mubr.f32.mxu0 0.0
    %1857 = vmatmul.mubr.f32.gmra.mxu0 %v1788
    %v1858 = vpop.f32.mrf.mxu0
    %v1859 = vadd.f32 0.0, %v1858
    %v1860 = vpop.f32.mrf.mxu0
    %1861 = vdwg.mxu0
    %v1862 = vsel %vm367, %v1859, -inf
    %1863 = vmax.xlane.f32.xlu0 %v1862
    %v1864 = vpop.xlane.xlu0 %1863
    %v1865 = vsub.f32 %v1859, %v1864
    %v1866 = vmul.f32 %v1865, 1.442695
    %v1867 = vpow.pop %v1866
    %v1868 = vsel %vm367, %v1867, 0.0
    %1869 = vadd.xlane.f32.xlu0 %v1868
    %v1870 = vpop.xlane.xlu0 %1869
    %v1871 = vrcp.pop %v1870
    %v1872 = vmul.f32 %v1867, %v1871
    %1873 = vrot.lane.b32.xlu0 %v362, 112
    %v1874 = vpop.permute.xlu0 %1873
    %v1875 = vsel %vm367, %v1874, 0
    %1877 = vmatprep.subr.mxu0 0.0
    %1878 = vmatpush1.msra.mxu0 0.0
    %1879 = vmatprep.subr.mxu0 0.0
    %1880 = vmatpush1.msra.mxu0 0.0
    %1881 = vmatprep.subr.mxu0 0.0
    %1882 = vmatpush1.msra.mxu0 0.0
    %1883 = vmatprep.subr.mxu0 0.0
    %1884 = vmatpush1.msra.mxu0 0.0
    %1885 = vmatprep.subr.mxu0 0.0
    %1886 = vmatpush1.msra.mxu0 0.0
    %1887 = vmatprep.subr.mxu0 0.0
    %1888 = vmatpush1.msra.mxu0 0.0
    %1889 = vmatprep.subr.mxu0 0.0
    %1890 = vmatpush1.msra.mxu0 0.0
    %1891 = vmatprep.subr.mxu0 0.0
    %1892 = vmatpush1.msra.mxu0 0.0
    %1893 = vmatprep.subr.mxu0 0.0
    %1894 = vmatpush1.msra.mxu0 0.0
    %1895 = vmatprep.subr.mxu0 0.0
    %1896 = vmatpush1.msra.mxu0 0.0
    %1897 = vmatprep.subr.mxu0 0.0
    %1898 = vmatpush1.msra.mxu0 0.0
    %1899 = vmatprep.subr.mxu0 0.0
    %1900 = vmatpush1.msra.mxu0 0.0
    %1901 = vmatprep.subr.mxu0 0.0
    %1902 = vmatpush1.msra.mxu0 0.0
    %1903 = vmatprep.subr.mxu0 0.0
    %1904 = vmatpush1.msra.mxu0 0.0
    %1905 = vmatprep.subr.mxu0 0.0
    %1906 = vmatpush1.msra.mxu0 0.0
    %1907 = vmatprep.subr.mxu0 0.0
    %1908 = vmatpush1.msra.mxu0 %v928
    %1909 = vmatprep.subr.mxu0 0.0
    %1910 = vmatpush2.msra.mxu0 0.0
    %1911 = vmatprep.subr.mxu0 0.0
    %1912 = vmatpush2.msra.mxu0 0.0
    %1913 = vmatprep.subr.mxu0 0.0
    %1914 = vmatpush2.msra.mxu0 0.0
    %1915 = vmatprep.subr.mxu0 0.0
    %1916 = vmatpush2.msra.mxu0 0.0
    %1917 = vmatprep.subr.mxu0 0.0
    %1918 = vmatpush2.msra.mxu0 0.0
    %1919 = vmatprep.subr.mxu0 0.0
    %1920 = vmatpush2.msra.mxu0 0.0
    %1921 = vmatprep.subr.mxu0 0.0
    %1922 = vmatpush2.msra.mxu0 0.0
    %1923 = vmatprep.subr.mxu0 0.0
    %1924 = vmatpush2.msra.mxu0 0.0
    %1925 = vmatprep.subr.mxu0 0.0
    %1926 = vmatpush2.msra.mxu0 0.0
    %1927 = vmatprep.subr.mxu0 0.0
    %1928 = vmatpush2.msra.mxu0 0.0
    %1929 = vmatprep.subr.mxu0 0.0
    %1930 = vmatpush2.msra.mxu0 0.0
    %1931 = vmatprep.subr.mxu0 0.0
    %1932 = vmatpush2.msra.mxu0 0.0
    %1933 = vmatprep.subr.mxu0 0.0
    %1934 = vmatpush2.msra.mxu0 0.0
    %1935 = vmatprep.subr.mxu0 0.0
    %1936 = vmatpush2.msra.mxu0 0.0
    %1937 = vmatprep.subr.mxu0 0.0
    %1938 = vmatpush2.msra.mxu0 0.0
    %1939 = vmatprep.subr.mxu0 0.0
    %1940 = vmatpush2.msra.mxu0 0.0
    %1941 = vmatprep.mubr.f32.mxu0 0.0
    %1942 = vmatmul.mubr.f32.gmra.mxu0 %v1875
    %v1943 = vpop.f32.mrf.mxu0
    %v1944 = vadd.f32 0.0, %v1943
    %v1945 = vpop.f32.mrf.mxu0
    %1946 = vdwg.mxu0
    %v1948 = vsel %vm367, %v1872, 0
    %1950 = vmatprep.subr.mxu0 0.0
    %1951 = vmatpush1.msra.mxu0 0.0
    %1952 = vmatprep.subr.mxu0 0.0
    %1953 = vmatpush1.msra.mxu0 0.0
    %1954 = vmatprep.subr.mxu0 0.0
    %1955 = vmatpush1.msra.mxu0 0.0
    %1956 = vmatprep.subr.mxu0 0.0
    %1957 = vmatpush1.msra.mxu0 0.0
    %1958 = vmatprep.subr.mxu0 0.0
    %1959 = vmatpush1.msra.mxu0 0.0
    %1960 = vmatprep.subr.mxu0 0.0
    %1961 = vmatpush1.msra.mxu0 0.0
    %1962 = vmatprep.subr.mxu0 0.0
    %1963 = vmatpush1.msra.mxu0 0.0
    %1964 = vmatprep.subr.mxu0 0.0
    %1965 = vmatpush1.msra.mxu0 0.0
    %1966 = vmatprep.subr.mxu0 0.0
    %1967 = vmatpush1.msra.mxu0 0.0
    %1968 = vmatprep.subr.mxu0 0.0
    %1969 = vmatpush1.msra.mxu0 0.0
    %1970 = vmatprep.subr.mxu0 0.0
    %1971 = vmatpush1.msra.mxu0 0.0
    %1972 = vmatprep.subr.mxu0 0.0
    %1973 = vmatpush1.msra.mxu0 0.0
    %1974 = vmatprep.subr.mxu0 0.0
    %1975 = vmatpush1.msra.mxu0 0.0
    %1976 = vmatprep.subr.mxu0 0.0
    %1977 = vmatpush1.msra.mxu0 0.0
    %1978 = vmatprep.subr.mxu0 0.0
    %1979 = vmatpush1.msra.mxu0 0.0
    %1980 = vmatprep.subr.mxu0 0.0
    %1981 = vmatpush1.msra.mxu0 %v1944
    %1982 = vmatprep.subr.mxu0 0.0
    %1983 = vmatpush2.msra.mxu0 0.0
    %1984 = vmatprep.subr.mxu0 0.0
    %1985 = vmatpush2.msra.mxu0 0.0
    %1986 = vmatprep.subr.mxu0 0.0
    %1987 = vmatpush2.msra.mxu0 0.0
    %1988 = vmatprep.subr.mxu0 0.0
    %1989 = vmatpush2.msra.mxu0 0.0
    %1990 = vmatprep.subr.mxu0 0.0
    %1991 = vmatpush2.msra.mxu0 0.0
    %1992 = vmatprep.subr.mxu0 0.0
    %1993 = vmatpush2.msra.mxu0 0.0
    %1994 = vmatprep.subr.mxu0 0.0
    %1995 = vmatpush2.msra.mxu0 0.0
    %1996 = vmatprep.subr.mxu0 0.0
    %1997 = vmatpush2.msra.mxu0 0.0
    %1998 = vmatprep.subr.mxu0 0.0
    %1999 = vmatpush2.msra.mxu0 0.0
    %2000 = vmatprep.subr.mxu0 0.0
    %2001 = vmatpush2.msra.mxu0 0.0
    %2002 = vmatprep.subr.mxu0 0.0
    %2003 = vmatpush2.msra.mxu0 0.0
    %2004 = vmatprep.subr.mxu0 0.0
    %2005 = vmatpush2.msra.mxu0 0.0
    %2006 = vmatprep.subr.mxu0 0.0
    %2007 = vmatpush2.msra.mxu0 0.0
    %2008 = vmatprep.subr.mxu0 0.0
    %2009 = vmatpush2.msra.mxu0 0.0
    %2010 = vmatprep.subr.mxu0 0.0
    %2011 = vmatpush2.msra.mxu0 0.0
    %2012 = vmatprep.subr.mxu0 0.0
    %2013 = vmatpush2.msra.mxu0 0.0
    %2014 = vmatprep.mubr.f32.mxu0 0.0
    %2015 = vmatmul.mubr.f32.gmra.mxu0 %v1948
    %v2016 = vpop.f32.mrf.mxu0
    %v2017 = vadd.f32 0.0, %v2016
    %v2018 = vpop.f32.mrf.mxu0
    %2019 = vdwg.mxu0
    %v2020 = vadd.f32 %v1781, %v2017
    %2021 = vrot.lane.b32.xlu0 %v366, 104
    %v2022 = vpop.permute.xlu0 %2021
    %2023 = vrot.lane.b32.xlu0 %v270, 104
    %v2024 = vpop.permute.xlu0 %2023
    %v2025 = vsel %vm367, %v2022, 0
    %v2027 = vsel %vm367, %v2024, 0
    %2029 = vmatprep.subr.mxu0 0.0
    %2030 = vmatpush1.xpose.msra.mxu0 0.0
    %2031 = vmatprep.subr.mxu0 0.0
    %2032 = vmatpush1.xpose.msra.mxu0 0.0
    %2033 = vmatprep.subr.mxu0 0.0
    %2034 = vmatpush1.xpose.msra.mxu0 0.0
    %2035 = vmatprep.subr.mxu0 0.0
    %2036 = vmatpush1.xpose.msra.mxu0 0.0
    %2037 = vmatprep.subr.mxu0 0.0
    %2038 = vmatpush1.xpose.msra.mxu0 0.0
    %2039 = vmatprep.subr.mxu0 0.0
    %2040 = vmatpush1.xpose.msra.mxu0 0.0
    %2041 = vmatprep.subr.mxu0 0.0
    %2042 = vmatpush1.xpose.msra.mxu0 0.0
    %2043 = vmatprep.subr.mxu0 0.0
    %2044 = vmatpush1.xpose.msra.mxu0 0.0
    %2045 = vmatprep.subr.mxu0 0.0
    %2046 = vmatpush1.xpose.msra.mxu0 0.0
    %2047 = vmatprep.subr.mxu0 0.0
    %2048 = vmatpush1.xpose.msra.mxu0 0.0
    %2049 = vmatprep.subr.mxu0 0.0
    %2050 = vmatpush1.xpose.msra.mxu0 0.0
    %2051 = vmatprep.subr.mxu0 0.0
    %2052 = vmatpush1.xpose.msra.mxu0 0.0
    %2053 = vmatprep.subr.mxu0 0.0
    %2054 = vmatpush1.xpose.msra.mxu0 0.0
    %2055 = vmatprep.subr.mxu0 0.0
    %2056 = vmatpush1.xpose.msra.mxu0 0.0
    %2057 = vmatprep.subr.mxu0 0.0
    %2058 = vmatpush1.xpose.msra.mxu0 0.0
    %2059 = vmatprep.subr.mxu0 0.0
    %2060 = vmatpush1.xpose.msra.mxu0 %v2027
    %2061 = vmatprep.subr.mxu0 0.0
    %2062 = vmatpush2.xpose.msra.mxu0 0.0
    %2063 = vmatprep.subr.mxu0 0.0
    %2064 = vmatpush2.xpose.msra.mxu0 0.0
    %2065 = vmatprep.subr.mxu0 0.0
    %2066 = vmatpush2.xpose.msra.mxu0 0.0
    %2067 = vmatprep.subr.mxu0 0.0
    %2068 = vmatpush2.xpose.msra.mxu0 0.0
    %2069 = vmatprep.subr.mxu0 0.0
    %2070 = vmatpush2.xpose.msra.mxu0 0.0
    %2071 = vmatprep.subr.mxu0 0.0
    %2072 = vmatpush2.xpose.msra.mxu0 0.0
    %2073 = vmatprep.subr.mxu0 0.0
    %2074 = vmatpush2.xpose.msra.mxu0 0.0
    %2075 = vmatprep.subr.mxu0 0.0
    %2076 = vmatpush2.xpose.msra.mxu0 0.0
    %2077 = vmatprep.subr.mxu0 0.0
    %2078 = vmatpush2.xpose.msra.mxu0 0.0
    %2079 = vmatprep.subr.mxu0 0.0
    %2080 = vmatpush2.xpose.msra.mxu0 0.0
    %2081 = vmatprep.subr.mxu0 0.0
    %2082 = vmatpush2.xpose.msra.mxu0 0.0
    %2083 = vmatprep.subr.mxu0 0.0
    %2084 = vmatpush2.xpose.msra.mxu0 0.0
    %2085 = vmatprep.subr.mxu0 0.0
    %2086 = vmatpush2.xpose.msra.mxu0 0.0
    %2087 = vmatprep.subr.mxu0 0.0
    %2088 = vmatpush2.xpose.msra.mxu0 0.0
    %2089 = vmatprep.subr.mxu0 0.0
    %2090 = vmatpush2.xpose.msra.mxu0 0.0
    %2091 = vmatprep.subr.mxu0 0.0
    %2092 = vmatpush2.xpose.msra.mxu0 0.0
    %2093 = vmatprep.mubr.f32.mxu0 0.0
    %2094 = vmatmul.mubr.f32.gmra.mxu0 %v2025
    %v2095 = vpop.f32.mrf.mxu0
    %v2096 = vadd.f32 0.0, %v2095
    %v2097 = vpop.f32.mrf.mxu0
    %2098 = vdwg.mxu0
    %v2099 = vsel %vm367, %v2096, -inf
    %2100 = vmax.xlane.f32.xlu0 %v2099
    %v2101 = vpop.xlane.xlu0 %2100
    %v2102 = vsub.f32 %v2096, %v2101
    %v2103 = vmul.f32 %v2102, 1.442695
    %v2104 = vpow.pop %v2103
    %v2105 = vsel %vm367, %v2104, 0.0
    %2106 = vadd.xlane.f32.xlu0 %v2105
    %v2107 = vpop.xlane.xlu0 %2106
    %v2108 = vrcp.pop %v2107
    %v2109 = vmul.f32 %v2104, %v2108
    %2110 = vrot.lane.b32.xlu0 %v362, 104
    %v2111 = vpop.permute.xlu0 %2110
    %v2112 = vsel %vm367, %v2111, 0
    %2114 = vmatprep.subr.mxu0 0.0
    %2115 = vmatpush1.msra.mxu0 0.0
    %2116 = vmatprep.subr.mxu0 0.0
    %2117 = vmatpush1.msra.mxu0 0.0
    %2118 = vmatprep.subr.mxu0 0.0
    %2119 = vmatpush1.msra.mxu0 0.0
    %2120 = vmatprep.subr.mxu0 0.0
    %2121 = vmatpush1.msra.mxu0 0.0
    %2122 = vmatprep.subr.mxu0 0.0
    %2123 = vmatpush1.msra.mxu0 0.0
    %2124 = vmatprep.subr.mxu0 0.0
    %2125 = vmatpush1.msra.mxu0 0.0
    %2126 = vmatprep.subr.mxu0 0.0
    %2127 = vmatpush1.msra.mxu0 0.0
    %2128 = vmatprep.subr.mxu0 0.0
    %2129 = vmatpush1.msra.mxu0 0.0
    %2130 = vmatprep.subr.mxu0 0.0
    %2131 = vmatpush1.msra.mxu0 0.0
    %2132 = vmatprep.subr.mxu0 0.0
    %2133 = vmatpush1.msra.mxu0 0.0
    %2134 = vmatprep.subr.mxu0 0.0
    %2135 = vmatpush1.msra.mxu0 0.0
    %2136 = vmatprep.subr.mxu0 0.0
    %2137 = vmatpush1.msra.mxu0 0.0
    %2138 = vmatprep.subr.mxu0 0.0
    %2139 = vmatpush1.msra.mxu0 0.0
    %2140 = vmatprep.subr.mxu0 0.0
    %2141 = vmatpush1.msra.mxu0 0.0
    %2142 = vmatprep.subr.mxu0 0.0
    %2143 = vmatpush1.msra.mxu0 0.0
    %2144 = vmatprep.subr.mxu0 0.0
    %2145 = vmatpush1.msra.mxu0 %v1166
    %2146 = vmatprep.subr.mxu0 0.0
    %2147 = vmatpush2.msra.mxu0 0.0
    %2148 = vmatprep.subr.mxu0 0.0
    %2149 = vmatpush2.msra.mxu0 0.0
    %2150 = vmatprep.subr.mxu0 0.0
    %2151 = vmatpush2.msra.mxu0 0.0
    %2152 = vmatprep.subr.mxu0 0.0
    %2153 = vmatpush2.msra.mxu0 0.0
    %2154 = vmatprep.subr.mxu0 0.0
    %2155 = vmatpush2.msra.mxu0 0.0
    %2156 = vmatprep.subr.mxu0 0.0
    %2157 = vmatpush2.msra.mxu0 0.0
    %2158 = vmatprep.subr.mxu0 0.0
    %2159 = vmatpush2.msra.mxu0 0.0
    %2160 = vmatprep.subr.mxu0 0.0
    %2161 = vmatpush2.msra.mxu0 0.0
    %2162 = vmatprep.subr.mxu0 0.0
    %2163 = vmatpush2.msra.mxu0 0.0
    %2164 = vmatprep.subr.mxu0 0.0
    %2165 = vmatpush2.msra.mxu0 0.0
    %2166 = vmatprep.subr.mxu0 0.0
    %2167 = vmatpush2.msra.mxu0 0.0
    %2168 = vmatprep.subr.mxu0 0.0
    %2169 = vmatpush2.msra.mxu0 0.0
    %2170 = vmatprep.subr.mxu0 0.0
    %2171 = vmatpush2.msra.mxu0 0.0
    %2172 = vmatprep.subr.mxu0 0.0
    %2173 = vmatpush2.msra.mxu0 0.0
    %2174 = vmatprep.subr.mxu0 0.0
    %2175 = vmatpush2.msra.mxu0 0.0
    %2176 = vmatprep.subr.mxu0 0.0
    %2177 = vmatpush2.msra.mxu0 0.0
    %2178 = vmatprep.mubr.f32.mxu0 0.0
    %2179 = vmatmul.mubr.f32.gmra.mxu0 %v2112
    %v2180 = vpop.f32.mrf.mxu0
    %v2181 = vadd.f32 0.0, %v2180
    %v2182 = vpop.f32.mrf.mxu0
    %2183 = vdwg.mxu0
    %v2185 = vsel %vm367, %v2109, 0
    %2187 = vmatprep.subr.mxu0 0.0
    %2188 = vmatpush1.msra.mxu0 0.0
    %2189 = vmatprep.subr.mxu0 0.0
    %2190 = vmatpush1.msra.mxu0 0.0
    %2191 = vmatprep.subr.mxu0 0.0
    %2192 = vmatpush1.msra.mxu0 0.0
    %2193 = vmatprep.subr.mxu0 0.0
    %2194 = vmatpush1.msra.mxu0 0.0
    %2195 = vmatprep.subr.mxu0 0.0
    %2196 = vmatpush1.msra.mxu0 0.0
    %2197 = vmatprep.subr.mxu0 0.0
    %2198 = vmatpush1.msra.mxu0 0.0
    %2199 = vmatprep.subr.mxu0 0.0
    %2200 = vmatpush1.msra.mxu0 0.0
    %2201 = vmatprep.subr.mxu0 0.0
    %2202 = vmatpush1.msra.mxu0 0.0
    %2203 = vmatprep.subr.mxu0 0.0
    %2204 = vmatpush1.msra.mxu0 0.0
    %2205 = vmatprep.subr.mxu0 0.0
    %2206 = vmatpush1.msra.mxu0 0.0
    %2207 = vmatprep.subr.mxu0 0.0
    %2208 = vmatpush1.msra.mxu0 0.0
    %2209 = vmatprep.subr.mxu0 0.0
    %2210 = vmatpush1.msra.mxu0 0.0
    %2211 = vmatprep.subr.mxu0 0.0
    %2212 = vmatpush1.msra.mxu0 0.0
    %2213 = vmatprep.subr.mxu0 0.0
    %2214 = vmatpush1.msra.mxu0 0.0
    %2215 = vmatprep.subr.mxu0 0.0
    %2216 = vmatpush1.msra.mxu0 0.0
    %2217 = vmatprep.subr.mxu0 0.0
    %2218 = vmatpush1.msra.mxu0 %v2181
    %2219 = vmatprep.subr.mxu0 0.0
    %2220 = vmatpush2.msra.mxu0 0.0
    %2221 = vmatprep.subr.mxu0 0.0
    %2222 = vmatpush2.msra.mxu0 0.0
    %2223 = vmatprep.subr.mxu0 0.0
    %2224 = vmatpush2.msra.mxu0 0.0
    %2225 = vmatprep.subr.mxu0 0.0
    %2226 = vmatpush2.msra.mxu0 0.0
    %2227 = vmatprep.subr.mxu0 0.0
    %2228 = vmatpush2.msra.mxu0 0.0
    %2229 = vmatprep.subr.mxu0 0.0
    %2230 = vmatpush2.msra.mxu0 0.0
    %2231 = vmatprep.subr.mxu0 0.0
    %2232 = vmatpush2.msra.mxu0 0.0
    %2233 = vmatprep.subr.mxu0 0.0
    %2234 = vmatpush2.msra.mxu0 0.0
    %2235 = vmatprep.subr.mxu0 0.0
    %2236 = vmatpush2.msra.mxu0 0.0
    %2237 = vmatprep.subr.mxu0 0.0
    %2238 = vmatpush2.msra.mxu0 0.0
    %2239 = vmatprep.subr.mxu0 0.0
    %2240 = vmatpush2.msra.mxu0 0.0
    %2241 = vmatprep.subr.mxu0 0.0
    %2242 = vmatpush2.msra.mxu0 0.0
    %2243 = vmatprep.subr.mxu0 0.0
    %2244 = vmatpush2.msra.mxu0 0.0
    %2245 = vmatprep.subr.mxu0 0.0
    %2246 = vmatpush2.msra.mxu0 0.0
    %2247 = vmatprep.subr.mxu0 0.0
    %2248 = vmatpush2.msra.mxu0 0.0
    %2249 = vmatprep.subr.mxu0 0.0
    %2250 = vmatpush2.msra.mxu0 0.0
    %2251 = vmatprep.mubr.f32.mxu0 0.0
    %2252 = vmatmul.mubr.f32.gmra.mxu0 %v2185
    %v2253 = vpop.f32.mrf.mxu0
    %v2254 = vadd.f32 0.0, %v2253
    %v2255 = vpop.f32.mrf.mxu0
    %2256 = vdwg.mxu0
    %v2257 = vadd.f32 %v2020, %v2254
    %v2258 = vld [vmem:[%s9] sm:$0x1]
    %v2260 = vlaneseq
    %v2261 = vshrl.u32 %v2260, 7
    %v2262 = vsub.s32 0, %v2261
    %v2263 = vrot.slane %v2258, %v2262
    %v2265 = vadd.f32 %v1314, %v2263
    %v2266 = vadd.f32 %v2257, %v2263
    %v2267 = vadd.f32 %v88, %v2265
    %v2268 = vadd.f32 %v89, %v2266
    %v2269 = vld [vmem:[%s10] sm:$0x1]
    %v2270 = vld [vmem:[%s11] sm:$0x1]
    %v2271 = vsel %vm105, %v2267, 0.0
    %2272 = vadd.xlane.f32.xlu0 %v2271
    %v2273 = vpop.xlane.xlu0 %2272
    %v2274 = vsel %vm105, %v2268, 0.0
    %2275 = vadd.xlane.f32.xlu0 %v2274
    %v2276 = vpop.xlane.xlu0 %2275
    %v2277 = vrcp.pop 32.0
    %v2278 = vmul.f32 %v2273, %v2277
    %v2279 = vmul.f32 %v2276, %v2277
    %v2280 = vmul.f32 %v2267, %v2267
    %v2281 = vmul.f32 %v2268, %v2268
    %v2282 = vsel %vm105, %v2280, 0.0
    %2283 = vadd.xlane.f32.xlu0 %v2282
    %v2284 = vpop.xlane.xlu0 %2283
    %v2285 = vsel %vm105, %v2281, 0.0
    %2286 = vadd.xlane.f32.xlu0 %v2285
    %v2287 = vpop.xlane.xlu0 %2286
    %v2288 = vmul.f32 %v2284, %v2277
    %v2289 = vmul.f32 %v2287, %v2277
    %v2290 = vmul.f32 %v2278, %v2278
    %v2291 = vmul.f32 %v2279, %v2279
    %v2292 = vsub.f32 %v2288, %v2290
    %v2293 = vsub.f32 %v2289, %v2291
    %v2294 = vsub.f32 %v2267, %v2278
    %v2295 = vsub.f32 %v2268, %v2279
    %v2296 = vadd.f32 %v2292, 1e-05
    %v2297 = vadd.f32 %v2293, 1e-05
    %v2298 = vrsqrt.pop %v2296
    %v2299 = vrsqrt.pop %v2297
    %v2300 = vmul.f32 %v2294, %v2298
    %v2301 = vmul.f32 %v2295, %v2299
    %v2303 = vlaneseq
    %v2304 = vshrl.u32 %v2303, 7
    %v2305 = vsub.s32 0, %v2304
    %v2306 = vrot.slane %v2269, %v2305
    %v2308 = vmul.f32 %v2300, %v2306
    %v2309 = vmul.f32 %v2301, %v2306
    %v2311 = vlaneseq
    %v2312 = vshrl.u32 %v2311, 7
    %v2313 = vsub.s32 0, %v2312
    %v2314 = vrot.slane %v2270, %v2313
    %v2316 = vadd.f32 %v2308, %v2314
    %v2317 = vadd.f32 %v2309, %v2314
    %v2318 = vld [vmem:[%s12] sm:$0xff]
    %v2319 = vld [vmem:[%s12 + $0x8] sm:$0xff]
    %v2320 = vld [vmem:[%s12 + $0x10] sm:$0xff]
    %v2321 = vld [vmem:[%s12 + $0x18] sm:$0xff]
    %v2322 = vld [vmem:[%s13] sm:$0x1]
    %v2324 = vlaneseq
    %v2325 = vshrl.u32 %v2324, 7
    %v2326 = vsub.s32 0, %v2325
    %v2327 = vrot.slane %v2322, %v2326
    %v2330 = vsel %vm105, %v2316, 0
    %v2333 = vsel %vm105, %v2317, 0
    %2335 = vmatprep.subr.mxu0 0.0
    %2336 = vmatpush1.msra.mxu0 0.0
    %2337 = vmatprep.subr.mxu0 0.0
    %2338 = vmatpush1.msra.mxu0 0.0
    %2339 = vmatprep.subr.mxu0 0.0
    %2340 = vmatpush1.msra.mxu0 0.0
    %2341 = vmatprep.subr.mxu0 0.0
    %2342 = vmatpush1.msra.mxu0 0.0
    %2343 = vmatprep.subr.mxu0 0.0
    %2344 = vmatpush1.msra.mxu0 0.0
    %2345 = vmatprep.subr.mxu0 0.0
    %2346 = vmatpush1.msra.mxu0 0.0
    %2347 = vmatprep.subr.mxu0 0.0
    %2348 = vmatpush1.msra.mxu0 0.0
    %2349 = vmatprep.subr.mxu0 0.0
    %2350 = vmatpush1.msra.mxu0 0.0
    %2351 = vmatprep.subr.mxu0 0.0
    %2352 = vmatpush1.msra.mxu0 0.0
    %2353 = vmatprep.subr.mxu0 0.0
    %2354 = vmatpush1.msra.mxu0 0.0
    %2355 = vmatprep.subr.mxu0 0.0
    %2356 = vmatpush1.msra.mxu0 0.0
    %2357 = vmatprep.subr.mxu0 0.0
    %2358 = vmatpush1.msra.mxu0 0.0
    %2359 = vmatprep.subr.mxu0 0.0
    %2360 = vmatpush1.msra.mxu0 %v2321
    %2361 = vmatprep.subr.mxu0 0.0
    %2362 = vmatpush1.msra.mxu0 %v2320
    %2363 = vmatprep.subr.mxu0 0.0
    %2364 = vmatpush1.msra.mxu0 %v2319
    %2365 = vmatprep.subr.mxu0 0.0
    %2366 = vmatpush1.msra.mxu0 %v2318
    %2367 = vmatprep.subr.mxu0 0.0
    %2368 = vmatpush2.msra.mxu0 0.0
    %2369 = vmatprep.subr.mxu0 0.0
    %2370 = vmatpush2.msra.mxu0 0.0
    %2371 = vmatprep.subr.mxu0 0.0
    %2372 = vmatpush2.msra.mxu0 0.0
    %2373 = vmatprep.subr.mxu0 0.0
    %2374 = vmatpush2.msra.mxu0 0.0
    %2375 = vmatprep.subr.mxu0 0.0
    %2376 = vmatpush2.msra.mxu0 0.0
    %2377 = vmatprep.subr.mxu0 0.0
    %2378 = vmatpush2.msra.mxu0 0.0
    %2379 = vmatprep.subr.mxu0 0.0
    %2380 = vmatpush2.msra.mxu0 0.0
    %2381 = vmatprep.subr.mxu0 0.0
    %2382 = vmatpush2.msra.mxu0 0.0
    %2383 = vmatprep.subr.mxu0 0.0
    %2384 = vmatpush2.msra.mxu0 0.0
    %2385 = vmatprep.subr.mxu0 0.0
    %2386 = vmatpush2.msra.mxu0 0.0
    %2387 = vmatprep.subr.mxu0 0.0
    %2388 = vmatpush2.msra.mxu0 0.0
    %2389 = vmatprep.subr.mxu0 0.0
    %2390 = vmatpush2.msra.mxu0 0.0
    %2391 = vmatprep.subr.mxu0 0.0
    %2392 = vmatpush2.msra.mxu0 0.0
    %2393 = vmatprep.subr.mxu0 0.0
    %2394 = vmatpush2.msra.mxu0 0.0
    %2395 = vmatprep.subr.mxu0 0.0
    %2396 = vmatpush2.msra.mxu0 0.0
    %2397 = vmatprep.subr.mxu0 0.0
    %2398 = vmatpush2.msra.mxu0 0.0
    %2399 = vmatprep.mubr.f32.mxu0 0.0
    %2400 = vmatmul.mubr.f32.gmra.mxu0 %v2330
    %v2401 = vpop.f32.mrf.mxu0
    %v2402 = vadd.f32 %v2327, %v2401
    %v2403 = vpop.f32.mrf.mxu0
    %2404 = vmatprep.mubr.f32.mxu0 0.0
    %2405 = vmatmul.mubr.f32.gmra.mxu0 %v2333
    %v2406 = vpop.f32.mrf.mxu0
    %v2407 = vadd.f32 %v2327, %v2406
    %v2408 = vpop.f32.mrf.mxu0
    %2409 = vdwg.mxu0
    %v2410 = vmax.f32 %v2402, 0.0
    %v2411 = vmax.f32 %v2407, 0.0
    %v2412 = vld [vmem:[%s14] sm:$0xff]
    %v2413 = vld [vmem:[%s14 + $0x8] sm:$0xff]
    %v2414 = vld [vmem:[%s14 + $0x10] sm:$0xff]
    %v2415 = vld [vmem:[%s14 + $0x18] sm:$0xff]
    %v2416 = vld [vmem:[%s14 + $0x20] sm:$0xff]
    %v2417 = vld [vmem:[%s14 + $0x28] sm:$0xff]
    %v2418 = vld [vmem:[%s14 + $0x30] sm:$0xff]
    %v2419 = vld [vmem:[%s14 + $0x38] sm:$0xff]
    %v2420 = vld [vmem:[%s14 + $0x40] sm:$0xff]
    %v2421 = vld [vmem:[%s14 + $0x48] sm:$0xff]
    %v2422 = vld [vmem:[%s14 + $0x50] sm:$0xff]
    %v2423 = vld [vmem:[%s14 + $0x58] sm:$0xff]
    %v2424 = vld [vmem:[%s14 + $0x60] sm:$0xff]
    %v2425 = vld [vmem:[%s14 + $0x68] sm:$0xff]
    %v2426 = vld [vmem:[%s14 + $0x70] sm:$0xff]
    %v2427 = vld [vmem:[%s14 + $0x78] sm:$0xff]
    %v2428 = vld [vmem:[%s15] sm:$0x1]
    %v2430 = vlaneseq
    %v2431 = vshrl.u32 %v2430, 7
    %v2432 = vsub.s32 0, %v2431
    %v2433 = vrot.slane %v2428, %v2432
    %2435 = vmatprep.subr.mxu0 0.0
    %2436 = vmatpush1.msra.mxu0 %v2427
    %2437 = vmatprep.subr.mxu0 0.0
    %2438 = vmatpush1.msra.mxu0 %v2426
    %2439 = vmatprep.subr.mxu0 0.0
    %2440 = vmatpush1.msra.mxu0 %v2425
    %2441 = vmatprep.subr.mxu0 0.0
    %2442 = vmatpush1.msra.mxu0 %v2424
    %2443 = vmatprep.subr.mxu0 0.0
    %2444 = vmatpush1.msra.mxu0 %v2423
    %2445 = vmatprep.subr.mxu0 0.0
    %2446 = vmatpush1.msra.mxu0 %v2422
    %2447 = vmatprep.subr.mxu0 0.0
    %2448 = vmatpush1.msra.mxu0 %v2421
    %2449 = vmatprep.subr.mxu0 0.0
    %2450 = vmatpush1.msra.mxu0 %v2420
    %2451 = vmatprep.subr.mxu0 0.0
    %2452 = vmatpush1.msra.mxu0 %v2419
    %2453 = vmatprep.subr.mxu0 0.0
    %2454 = vmatpush1.msra.mxu0 %v2418
    %2455 = vmatprep.subr.mxu0 0.0
    %2456 = vmatpush1.msra.mxu0 %v2417
    %2457 = vmatprep.subr.mxu0 0.0
    %2458 = vmatpush1.msra.mxu0 %v2416
    %2459 = vmatprep.subr.mxu0 0.0
    %2460 = vmatpush1.msra.mxu0 %v2415
    %2461 = vmatprep.subr.mxu0 0.0
    %2462 = vmatpush1.msra.mxu0 %v2414
    %2463 = vmatprep.subr.mxu0 0.0
    %2464 = vmatpush1.msra.mxu0 %v2413
    %2465 = vmatprep.subr.mxu0 0.0
    %2466 = vmatpush1.msra.mxu0 %v2412
    %2467 = vmatprep.subr.mxu0 0.0
    %2468 = vmatpush2.msra.mxu0 0.0
    %2469 = vmatprep.subr.mxu0 0.0
    %2470 = vmatpush2.msra.mxu0 0.0
    %2471 = vmatprep.subr.mxu0 0.0
    %2472 = vmatpush2.msra.mxu0 0.0
    %2473 = vmatprep.subr.mxu0 0.0
    %2474 = vmatpush2.msra.mxu0 0.0
    %2475 = vmatprep.subr.mxu0 0.0
    %2476 = vmatpush2.msra.mxu0 0.0
    %2477 = vmatprep.subr.mxu0 0.0
    %2478 = vmatpush2.msra.mxu0 0.0
    %2479 = vmatprep.subr.mxu0 0.0
    %2480 = vmatpush2.msra.mxu0 0.0
    %2481 = vmatprep.subr.mxu0 0.0
    %2482 = vmatpush2.msra.mxu0 0.0
    %2483 = vmatprep.subr.mxu0 0.0
    %2484 = vmatpush2.msra.mxu0 0.0
    %2485 = vmatprep.subr.mxu0 0.0
    %2486 = vmatpush2.msra.mxu0 0.0
    %2487 = vmatprep.subr.mxu0 0.0
    %2488 = vmatpush2.msra.mxu0 0.0
    %2489 = vmatprep.subr.mxu0 0.0
    %2490 = vmatpush2.msra.mxu0 0.0
    %2491 = vmatprep.subr.mxu0 0.0
    %2492 = vmatpush2.msra.mxu0 0.0
    %2493 = vmatprep.subr.mxu0 0.0
    %2494 = vmatpush2.msra.mxu0 0.0
    %2495 = vmatprep.subr.mxu0 0.0
    %2496 = vmatpush2.msra.mxu0 0.0
    %2497 = vmatprep.subr.mxu0 0.0
    %2498 = vmatpush2.msra.mxu0 0.0
    %2499 = vmatprep.mubr.f32.mxu0 0.0
    %2500 = vmatmul.mubr.f32.gmra.mxu0 %v2410
    %v2501 = vpop.f32.mrf.mxu0
    %v2502 = vadd.f32 %v2433, %v2501
    %v2503 = vpop.f32.mrf.mxu0
    %2504 = vmatprep.mubr.f32.mxu0 0.0
    %2505 = vmatmul.mubr.f32.gmra.mxu0 %v2411
    %v2506 = vpop.f32.mrf.mxu0
    %v2507 = vadd.f32 %v2433, %v2506
    %v2508 = vpop.f32.mrf.mxu0
    %2509 = vdwg.mxu0
    %v2510 = vadd.f32 %v2316, %v2502
    %v2511 = vadd.f32 %v2317, %v2507
    %v2512 = vld [vmem:[%s16] sm:$0x1]
    %v2513 = vld [vmem:[%s17] sm:$0x1]
    %v2514 = vsel %vm105, %v2510, 0.0
    %2515 = vadd.xlane.f32.xlu0 %v2514
    %v2516 = vpop.xlane.xlu0 %2515
    %v2517 = vsel %vm105, %v2511, 0.0
    %2518 = vadd.xlane.f32.xlu0 %v2517
    %v2519 = vpop.xlane.xlu0 %2518
    %v2520 = vmul.f32 %v2516, %v2277
    %v2521 = vmul.f32 %v2519, %v2277
    %v2522 = vmul.f32 %v2510, %v2510
    %v2523 = vmul.f32 %v2511, %v2511
    %v2524 = vsel %vm105, %v2522, 0.0
    %2525 = vadd.xlane.f32.xlu0 %v2524
    %v2526 = vpop.xlane.xlu0 %2525
    %v2527 = vsel %vm105, %v2523, 0.0
    %2528 = vadd.xlane.f32.xlu0 %v2527
    %v2529 = vpop.xlane.xlu0 %2528
    %v2530 = vmul.f32 %v2526, %v2277
    %v2531 = vmul.f32 %v2529, %v2277
    %v2532 = vmul.f32 %v2520, %v2520
    %v2533 = vmul.f32 %v2521, %v2521
    %v2534 = vsub.f32 %v2530, %v2532
    %v2535 = vsub.f32 %v2531, %v2533
    %v2536 = vsub.f32 %v2510, %v2520
    %v2537 = vsub.f32 %v2511, %v2521
    %v2538 = vadd.f32 %v2534, 1e-05
    %v2539 = vadd.f32 %v2535, 1e-05
    %v2540 = vrsqrt.pop %v2538
    %v2541 = vrsqrt.pop %v2539
    %v2542 = vmul.f32 %v2536, %v2540
    %v2543 = vmul.f32 %v2537, %v2541
    %v2545 = vlaneseq
    %v2546 = vshrl.u32 %v2545, 7
    %v2547 = vsub.s32 0, %v2546
    %v2548 = vrot.slane %v2512, %v2547
    %v2550 = vmul.f32 %v2542, %v2548
    %v2551 = vmul.f32 %v2543, %v2548
    %v2553 = vlaneseq
    %v2554 = vshrl.u32 %v2553, 7
    %v2555 = vsub.s32 0, %v2554
    %v2556 = vrot.slane %v2513, %v2555
    %v2558 = vadd.f32 %v2550, %v2556
    %v2559 = vadd.f32 %v2551, %v2556
    %2560 = vst.msk [vmem:[#allocation7] sm:$0xff] %vm105, %v2558
    %2561 = vst.msk [vmem:[#allocation7 + $0x8] sm:$0xff] %vm105, %v2559
    // Predicated region
    $region82: #{tpu_custom_call.1} parent=1 // pred_check
      _
    $region83: #{tpu_custom_call.1} parent=1 // pred_check_branch
      %2563 = sbr.rel (0) target = $region85
    $region84: #{tpu_custom_call.1} parent=1 // pred_region
      %s2565 = ssub.s32 256, 256
      %2566 = vsyncadd [#allocation4], %s2565
      %s2567 = sshll.u32 [#allocation7], 4
      %s2568 = int_to_ptr.vmem [resolvable:$true] %s2567
      %2573 = dma.vmem_to_hbm [thread:$0]  %s2568, 256, %s18, [#allocation4], 128, 128, 8
    $region85: #{tpu_custom_call.1} parent=1 // pred_fallthru
      _
    // Predicated region
    $region86: #{tpu_custom_call.1} parent=1 // pred_check
      _
    $region87: #{tpu_custom_call.1} parent=1 // pred_check_branch
      %2575 = sbr.rel (0) target = $region89
    $region88: #{tpu_custom_call.1} parent=1 // pred_region
      %2576 = dma.done [#allocation4], 256
    $region89: #{tpu_custom_call.1} parent=1 // pred_fallthru
      _
    %2577 = vsyncpa [#allocation3], 1
    %2578 = vsyncpa [#allocation6], 1
    %2579 = vsyncpa [#allocation4], 1

</llo_original>
